<compile_context>
chip_gen: v7x
topology: tpu7x:2x2x1
jax: 0.10.0
libtpu: 0.0.40
codegen_flags: <defaults>
</compile_context>

<pallas_src>
import functools

import jax
import jax.numpy as jnp
from jax.experimental import pallas as pl
from jax.experimental.pallas import tpu as pltpu


# =============================================================================
# Fused Pallas kernel
# =============================================================================
def twin_rnn_kernel(
    x_ref,                       # (seq*BP, 2f)  time-major, batch padded to BP rows/step
    w_in0, b0, w_rec0,           # layer-0 packed weights
    w_in1, b1, w_rec1,           # layer-1 packed weights
    cw1, cb1, cw2, cb2, cw3, cb3,
    y_ref,
    *, seq, bp, batch, h,
):
    """Fully fused TwinRnnClassifier forward (num_cell == 2).

    State layout (S = 4h lanes):        [A_f | A_b | B_f | B_b]
    Gate layout  (G = 16h lanes):       [i | f | g | o], each block in state layout
    w_in*  : (in_dim, G)  fused input projection (block-structured per stream)
    w_rec* : (S, G)       block-diagonal recurrent weights
    b*     : (1, G)       b_ih + b_hh, fused layout
    """
    S = 4 * h            # 128: fused state width / lanes per gate block
    G = 4 * S            # 512: total fused gate width

    # Lane masks selecting the forward-direction streams (A_f, B_f).
    lane_s = jax.lax.broadcasted_iota(jnp.int32, (bp, S), 1)
    fwd_state = (lane_s < h) | ((lane_s >= 2 * h) & (lane_s < 3 * h))     # (bp, S)
    fwd_gate = jnp.concatenate([fwd_state] * 4, axis=1)                   # (bp, G)

    def run_layer(proj, w_rec_ref):
        """proj: (seq*bp, G) pre-activations (input projection + bias), time-major.
        Runs all 4 streams fused; bwd streams consume time index seq-1-t at step t."""
        wr = w_rec_ref[...]
        hs = jnp.zeros((bp, S), jnp.float32)
        cs = jnp.zeros((bp, S), jnp.float32)
        steps = []
        for t in range(seq):                       # statically unrolled
            tb = seq - 1 - t
            # fwd-stream lanes take time t, bwd-stream lanes take time seq-1-t.
            pre = jnp.where(fwd_gate,
                            proj[t * bp:(t + 1) * bp, :],
                            proj[tb * bp:(tb + 1) * bp, :])
            g = pre + jnp.dot(hs, wr, preferred_element_type=jnp.float32)
            ig = jax.nn.sigmoid(g[:, 0:S])
            fg = jax.nn.sigmoid(g[:, S:2 * S])
            gg = jnp.tanh(g[:, 2 * S:3 * S])
            og = jax.nn.sigmoid(g[:, 3 * S:4 * S])
            cs = fg * cs + ig * gg
            hs = og * jnp.tanh(cs)
            steps.append(hs)
        return hs, steps

    # ---- Layer 0: one whole-sequence, both-stack, both-direction projection ----
    proj0 = (jnp.dot(x_ref[...], w_in0[...], preferred_element_type=jnp.float32)
             + b0[...])                                            # (seq*bp, G)
    _, steps0 = run_layer(proj0, w_rec0)

    # Time-aligned layer-0 hidden sequence, kept in vregs (no scratch round-trip):
    # at original time u, fwd lanes come from step u, bwd lanes from step seq-1-u.
    x1 = jnp.concatenate(
        [jnp.where(fwd_state, steps0[u], steps0[seq - 1 - u]) for u in range(seq)],
        axis=0)                                                    # (seq*bp, S)

    # ---- Layer 1 ----
    proj1 = (jnp.dot(x1, w_in1[...], preferred_element_type=jnp.float32)
             + b1[...])                                            # (seq*bp, G)
    h_final, _ = run_layer(proj1, w_rec1)                          # (bp, S)

    # ---- Classifier (Dropout = identity at eval). h_final is already laid out as
    # [A_fwd | A_bwd | B_fwd | B_bwd], exactly the PyTorch concat order. ----
    z1 = jnp.maximum(
        jnp.dot(h_final, cw1[...], preferred_element_type=jnp.float32) + cb1[...], 0.0)
    z2 = jnp.maximum(
        jnp.dot(z1, cw2[...], preferred_element_type=jnp.float32) + cb2[...], 0.0)
    z3 = jnp.dot(z2, cw3[...], preferred_element_type=jnp.float32) + cb3[...]
    y_ref[...] = z3[:batch, :]


# =============================================================================
# Wrapper
# =============================================================================
_VMEM = pl.BlockSpec(memory_space=pltpu.MemorySpace.VMEM)


def twin_rnn_classifier(x_a, x_b, packed):
    """x_a, x_b: (batch, seq, f_size) batch-first, like the PyTorch module."""
    B, seq, f = x_a.shape
    h = packed["w_rec0"].shape[0] // 4
    y_size = packed["cw3"].shape[1]
    BP = max(8, ((B + 7) // 8) * 8)           # sublane-aligned rows per timestep

    # Time-major, both stacks fused along features, batch padded to BP rows/step.
    x_tm = jnp.concatenate([jnp.transpose(x_a, (1, 0, 2)),
                            jnp.transpose(x_b, (1, 0, 2))], axis=-1)   # (seq, B, 2f)
    x_pad = jnp.zeros((seq, BP, 2 * f), jnp.float32).at[:, :B, :].set(x_tm)
    x_flat = x_pad.reshape(seq * BP, 2 * f)

    args = [x_flat,
            packed["w_in0"], packed["b0"], packed["w_rec0"],
            packed["w_in1"], packed["b1"], packed["w_rec1"],
            packed["cw1"], packed["cb1"], packed["cw2"], packed["cb2"],
            packed["cw3"], packed["cb3"]]

    kernel = functools.partial(twin_rnn_kernel, seq=seq, bp=BP, batch=B, h=h)
    return pl.pallas_call(
        kernel,
        out_shape=jax.ShapeDtypeStruct((B, y_size), jnp.float32),
        in_specs=[_VMEM] * len(args),
        out_specs=_VMEM,
    )(*args)


# =============================================================================
# Parameter construction (PyTorch-style init) + packing into the fused layout
# =============================================================================
def make_raw_lstm_stack(key, f_size, h, num_cell):
    """Per layer: (fwd, bwd) with each = (w_ih (in,4h), w_hh (h,4h), b_ih+b_hh (1,4h));
    gate order i, f, g, o (PyTorch convention)."""
    k = 1.0 / jnp.sqrt(h)
    layers = []
    for layer in range(num_cell):
        in_dim = f_size if layer == 0 else 2 * h
        dirs = []
        for _ in range(2):  # fwd, bwd
            key, k1, k2, k3, k4 = jax.random.split(key, 5)
            wih = jax.random.uniform(k1, (in_dim, 4 * h), jnp.float32, -k, k)
            whh = jax.random.uniform(k2, (h, 4 * h), jnp.float32, -k, k)
            b_ih = jax.random.uniform(k3, (1, 4 * h), jnp.float32, -k, k)
            b_hh = jax.random.uniform(k4, (1, 4 * h), jnp.float32, -k, k)
            dirs.append((wih, whh, b_ih + b_hh))
        layers.append(tuple(dirs))
    return layers, key


def make_linear(key, in_dim, out_dim):
    k = 1.0 / jnp.sqrt(in_dim)
    key, k1, k2 = jax.random.split(key, 3)
    w = jax.random.uniform(k1, (in_dim, out_dim), jnp.float32, -k, k)
    b = jax.random.uniform(k2, (1, out_dim), jnp.float32, -k, k)
    return (w, b), key


def _pack_layer(streams, row_slices, in_dim, h):
    """Pack 4 per-direction LSTMs (order [A_f, A_b, B_f, B_b]) into the fused,
    gate-major, block-diagonal layout used by the kernel."""
    S = 4 * h
    w_in = jnp.zeros((in_dim, 4 * S), jnp.float32)
    w_rec = jnp.zeros((S, 4 * S), jnp.float32)
    b = jnp.zeros((1, 4 * S), jnp.float32)
    for s, (wih, whh, bias) in enumerate(streams):
        r0, r1 = row_slices[s]
        for g in range(4):                       # gates i, f, g, o
            c0 = g * S + s * h
            w_in = w_in.at[r0:r1, c0:c0 + h].set(wih[:, g * h:(g + 1) * h])
            w_rec = w_rec.at[s * h:(s + 1) * h, c0:c0 + h].set(whh[:, g * h:(g + 1) * h])
            b = b.at[:, c0:c0 + h].set(bias[:, g * h:(g + 1) * h])
    return w_in, w_rec, b


def pack_params(raw, f_size, h):
    la, lb = raw["lstm_a"], raw["lstm_b"]
    # Layer 0: stack A streams read input lanes [0:f), stack B streams [f:2f).
    streams0 = [la[0][0], la[0][1], lb[0][0], lb[0][1]]
    rows0 = [(0, f_size), (0, f_size), (f_size, 2 * f_size), (f_size, 2 * f_size)]
    w_in0, w_rec0, b0 = _pack_layer(streams0, rows0, 2 * f_size, h)
    # Layer 1: stack A streams read lanes [0:2h) = [h_A_f|h_A_b], stack B [2h:4h).
    streams1 = [la[1][0], la[1][1], lb[1][0], lb[1][1]]
    rows1 = [(0, 2 * h), (0, 2 * h), (2 * h, 4 * h), (2 * h, 4 * h)]
    w_in1, w_rec1, b1 = _pack_layer(streams1, rows1, 4 * h, h)

    (cw1, cb1), (cw2, cb2), (cw3, cb3) = raw["classifier"]
    return dict(w_in0=w_in0, b0=b0, w_rec0=w_rec0,
                w_in1=w_in1, b1=b1, w_rec1=w_rec1,
                cw1=cw1, cb1=cb1, cw2=cw2, cb2=cb2, cw3=cw3, cb3=cb3)


# =============================================================================
# Pure-JAX reference (consumes the raw, unpacked parameters)
# =============================================================================
def ref_lstm_dir(x_tm, wih, whh, b, H):
    def step(carry, x_t):
        hc, cc = carry
        g = x_t @ wih + hc @ whh + b
        i = jax.nn.sigmoid(g[:, :H])
        f = jax.nn.sigmoid(g[:, H:2 * H])
        gg = jnp.tanh(g[:, 2 * H:3 * H])
        o = jax.nn.sigmoid(g[:, 3 * H:])
        cc = f * cc + i * gg
        hc = o * jnp.tanh(cc)
        return (hc, cc), hc

    B = x_tm.shape[1]
    z = jnp.zeros((B, H), jnp.float32)
    (h_last, _), hseq = jax.lax.scan(step, (z, z), x_tm)
    return hseq, h_last


def ref_bilstm_stack(x_bf, layers, H):
    out = jnp.transpose(x_bf, (1, 0, 2))
    h_f = h_b = None
    for (fwd, bwd) in layers:
        hs_f, h_f = ref_lstm_dir(out, fwd[0], fwd[1], fwd[2], H)
        hs_b_rev, h_b = ref_lstm_dir(out[::-1], bwd[0], bwd[1], bwd[2], H)
        out = jnp.concatenate([hs_f, hs_b_rev[::-1]], axis=-1)
    return jnp.concatenate([h_f, h_b], axis=-1)


def ref_forward(x_a, x_b, raw):
    H = raw["lstm_a"][0][0][1].shape[0]
    h = jnp.concatenate([ref_bilstm_stack(x_a, raw["lstm_a"], H),
                         ref_bilstm_stack(x_b, raw["lstm_b"], H)], axis=-1)
    (w1, b1), (w2, b2), (w3, b3) = raw["classifier"]
    h = jnp.maximum(h @ w1 + b1, 0.0)
    h = jnp.maximum(h @ w2 + b2, 0.0)
    return h @ w3 + b3


# =============================================================================
if __name__ == "__main__":
    batch, seq, f_size = 2, 8, 16
    h_size, y_size, num_cell = 32, 4, 2

    key = jax.random.PRNGKey(0)
    key, ka, kb = jax.random.split(key, 3)
    x_a = jax.random.normal(ka, (batch, seq, f_size), jnp.float32)
    x_b = jax.random.normal(kb, (batch, seq, f_size), jnp.float32)

    lstm_a, key = make_raw_lstm_stack(key, f_size, h_size, num_cell)
    lstm_b, key = make_raw_lstm_stack(key, f_size, h_size, num_cell)
    lin1, key = make_linear(key, 4 * h_size, 4 * h_size)
    lin2, key = make_linear(key, 4 * h_size, 4 * h_size)
    lin3, key = make_linear(key, 4 * h_size, y_size)
    raw = {"lstm_a": lstm_a, "lstm_b": lstm_b, "classifier": (lin1, lin2, lin3)}
    packed = pack_params(raw, f_size, h_size)

    fwd = jax.jit(twin_rnn_classifier)
    y = jax.block_until_ready(fwd(x_a, x_b, packed))
    assert y.shape == (batch, y_size)

    y_ref = ref_forward(x_a, x_b, raw)
    err = float(jnp.max(jnp.abs(y - y_ref)))
    assert jnp.allclose(y, y_ref, atol=2e-2, rtol=2e-2), err

    print("KERNEL_OK")
</pallas_src>

<mosaic_0001>
module attributes {stable_mosaic.version = 11 : i64} {
  func.func @twin_rnn_kernel(%arg0: memref<64x32xf32, #tpu.memory_space<vmem>>, %arg1: memref<32x512xf32, #tpu.memory_space<vmem>>, %arg2: memref<1x512xf32, #tpu.memory_space<vmem>>, %arg3: memref<128x512xf32, #tpu.memory_space<vmem>>, %arg4: memref<128x512xf32, #tpu.memory_space<vmem>>, %arg5: memref<1x512xf32, #tpu.memory_space<vmem>>, %arg6: memref<128x512xf32, #tpu.memory_space<vmem>>, %arg7: memref<128x128xf32, #tpu.memory_space<vmem>>, %arg8: memref<1x128xf32, #tpu.memory_space<vmem>>, %arg9: memref<128x128xf32, #tpu.memory_space<vmem>>, %arg10: memref<1x128xf32, #tpu.memory_space<vmem>>, %arg11: memref<128x4xf32, #tpu.memory_space<vmem>>, %arg12: memref<1x4xf32, #tpu.memory_space<vmem>>, %arg13: memref<2x4xf32, #tpu.memory_space<vmem>>) attributes {dimension_semantics = [], scalar_prefetch = 0 : i64, scratch_operands = 0 : i64, tpu.core_type = #tpu.core_type<tc>} {
    %0 = tpu.iota {dimensions = array<i32: 1>} : vector<8x128xi32>
    %c32_i32 = arith.constant 32 : i32
    %1 = vector.broadcast %c32_i32 : i32 to vector<8x128xi32>
    %2 = arith.cmpi slt, %0, %1 : vector<8x128xi32>
    %c64_i32 = arith.constant 64 : i32
    %3 = vector.broadcast %c64_i32 : i32 to vector<8x128xi32>
    %4 = arith.cmpi sge, %0, %3 : vector<8x128xi32>
    %c96_i32 = arith.constant 96 : i32
    %5 = vector.broadcast %c96_i32 : i32 to vector<8x128xi32>
    %6 = arith.cmpi slt, %0, %5 : vector<8x128xi32>
    %7 = arith.andi %4, %6 : vector<8x128xi1>
    %8 = arith.ori %2, %7 : vector<8x128xi1>
    %9 = tpu.concatenate %8, %8, %8, %8 in 1 : vector<8x128xi1>, vector<8x128xi1>, vector<8x128xi1>, vector<8x128xi1> -> vector<8x512xi1>
    %c0 = arith.constant 0 : index
    %c0_0 = arith.constant 0 : index
    %10 = vector.load %arg0[%c0, %c0_0] : memref<64x32xf32, #tpu.memory_space<vmem>>, vector<64x32xf32>
    %c0_1 = arith.constant 0 : index
    %c0_2 = arith.constant 0 : index
    %11 = vector.load %arg1[%c0_1, %c0_2] : memref<32x512xf32, #tpu.memory_space<vmem>>, vector<32x512xf32>
    %cst = arith.constant dense<0.000000e+00> : vector<64x512xf32>
    %12 = tpu.matmul %10, %11, %cst {dimension_numbers = #tpu.dot_dimension_numbers<[1], [0], [0], [1], [0, 0, 1, 1], [], []>} : vector<64x32xf32>, vector<32x512xf32>, vector<64x512xf32> -> vector<64x512xf32>
    %c0_3 = arith.constant 0 : index
    %c0_4 = arith.constant 0 : index
    %13 = vector.load %arg2[%c0_3, %c0_4] : memref<1x512xf32, #tpu.memory_space<vmem>>, vector<1x512xf32>
    %14 = vector.broadcast %13 : vector<1x512xf32> to vector<64x512xf32>
    %15 = arith.addf %12, %14 : vector<64x512xf32>
    %c0_5 = arith.constant 0 : index
    %c0_6 = arith.constant 0 : index
    %16 = vector.load %arg3[%c0_5, %c0_6] : memref<128x512xf32, #tpu.memory_space<vmem>>, vector<128x512xf32>
    %cst_7 = arith.constant 0.000000e+00 : f32
    %17 = vector.broadcast %cst_7 : f32 to vector<8x128xf32>
    %cst_8 = arith.constant 0.000000e+00 : f32
    %18 = vector.broadcast %cst_8 : f32 to vector<8x128xf32>
    %19 = vector.extract_strided_slice %15 {offsets = [0, 0], sizes = [8, 512], strides = [1, 1]} : vector<64x512xf32> to vector<8x512xf32>
    %20 = vector.extract_strided_slice %15 {offsets = [56, 0], sizes = [8, 512], strides = [1, 1]} : vector<64x512xf32> to vector<8x512xf32>
    %21 = arith.select %9, %19, %20 : vector<8x512xi1>, vector<8x512xf32>
    %cst_9 = arith.constant dense<0.000000e+00> : vector<8x512xf32>
    %22 = tpu.matmul %17, %16, %cst_9 {dimension_numbers = #tpu.dot_dimension_numbers<[1], [0], [0], [1], [0, 0, 1, 1], [], []>} : vector<8x128xf32>, vector<128x512xf32>, vector<8x512xf32> -> vector<8x512xf32>
    %23 = arith.addf %21, %22 : vector<8x512xf32>
    %24 = vector.extract_strided_slice %23 {offsets = [0, 0], sizes = [8, 128], strides = [1, 1]} : vector<8x512xf32> to vector<8x128xf32>
    %25 = arith.negf %24 : vector<8x128xf32>
    %26 = math.exp %25 : vector<8x128xf32>
    %cst_10 = arith.constant 1.000000e+00 : f32
    %27 = vector.broadcast %cst_10 : f32 to vector<8x128xf32>
    %28 = arith.addf %27, %26 : vector<8x128xf32>
    %29 = arith.divf %27, %28 : vector<8x128xf32>
    %30 = vector.extract_strided_slice %23 {offsets = [0, 128], sizes = [8, 128], strides = [1, 1]} : vector<8x512xf32> to vector<8x128xf32>
    %31 = arith.negf %30 : vector<8x128xf32>
    %32 = math.exp %31 : vector<8x128xf32>
    %cst_11 = arith.constant 1.000000e+00 : f32
    %33 = vector.broadcast %cst_11 : f32 to vector<8x128xf32>
    %34 = arith.addf %33, %32 : vector<8x128xf32>
    %35 = arith.divf %33, %34 : vector<8x128xf32>
    %36 = vector.extract_strided_slice %23 {offsets = [0, 256], sizes = [8, 128], strides = [1, 1]} : vector<8x512xf32> to vector<8x128xf32>
    %37 = math.tanh %36 : vector<8x128xf32>
    %38 = vector.extract_strided_slice %23 {offsets = [0, 384], sizes = [8, 128], strides = [1, 1]} : vector<8x512xf32> to vector<8x128xf32>
    %39 = arith.negf %38 : vector<8x128xf32>
    %40 = math.exp %39 : vector<8x128xf32>
    %cst_12 = arith.constant 1.000000e+00 : f32
    %41 = vector.broadcast %cst_12 : f32 to vector<8x128xf32>
    %42 = arith.addf %41, %40 : vector<8x128xf32>
    %43 = arith.divf %41, %42 : vector<8x128xf32>
    %44 = arith.mulf %35, %18 : vector<8x128xf32>
    %45 = arith.mulf %29, %37 : vector<8x128xf32>
    %46 = arith.addf %44, %45 : vector<8x128xf32>
    %47 = math.tanh %46 : vector<8x128xf32>
    %48 = arith.mulf %43, %47 : vector<8x128xf32>
    %49 = vector.extract_strided_slice %15 {offsets = [8, 0], sizes = [8, 512], strides = [1, 1]} : vector<64x512xf32> to vector<8x512xf32>
    %50 = vector.extract_strided_slice %15 {offsets = [48, 0], sizes = [8, 512], strides = [1, 1]} : vector<64x512xf32> to vector<8x512xf32>
    %51 = arith.select %9, %49, %50 : vector<8x512xi1>, vector<8x512xf32>
    %cst_13 = arith.constant dense<0.000000e+00> : vector<8x512xf32>
    %52 = tpu.matmul %48, %16, %cst_13 {dimension_numbers = #tpu.dot_dimension_numbers<[1], [0], [0], [1], [0, 0, 1, 1], [], []>} : vector<8x128xf32>, vector<128x512xf32>, vector<8x512xf32> -> vector<8x512xf32>
    %53 = arith.addf %51, %52 : vector<8x512xf32>
    %54 = vector.extract_strided_slice %53 {offsets = [0, 0], sizes = [8, 128], strides = [1, 1]} : vector<8x512xf32> to vector<8x128xf32>
    %55 = arith.negf %54 : vector<8x128xf32>
    %56 = math.exp %55 : vector<8x128xf32>
    %cst_14 = arith.constant 1.000000e+00 : f32
    %57 = vector.broadcast %cst_14 : f32 to vector<8x128xf32>
    %58 = arith.addf %57, %56 : vector<8x128xf32>
    %59 = arith.divf %57, %58 : vector<8x128xf32>
    %60 = vector.extract_strided_slice %53 {offsets = [0, 128], sizes = [8, 128], strides = [1, 1]} : vector<8x512xf32> to vector<8x128xf32>
    %61 = arith.negf %60 : vector<8x128xf32>
    %62 = math.exp %61 : vector<8x128xf32>
    %cst_15 = arith.constant 1.000000e+00 : f32
    %63 = vector.broadcast %cst_15 : f32 to vector<8x128xf32>
    %64 = arith.addf %63, %62 : vector<8x128xf32>
    %65 = arith.divf %63, %64 : vector<8x128xf32>
    %66 = vector.extract_strided_slice %53 {offsets = [0, 256], sizes = [8, 128], strides = [1, 1]} : vector<8x512xf32> to vector<8x128xf32>
    %67 = math.tanh %66 : vector<8x128xf32>
    %68 = vector.extract_strided_slice %53 {offsets = [0, 384], sizes = [8, 128], strides = [1, 1]} : vector<8x512xf32> to vector<8x128xf32>
    %69 = arith.negf %68 : vector<8x128xf32>
    %70 = math.exp %69 : vector<8x128xf32>
    %cst_16 = arith.constant 1.000000e+00 : f32
    %71 = vector.broadcast %cst_16 : f32 to vector<8x128xf32>
    %72 = arith.addf %71, %70 : vector<8x128xf32>
    %73 = arith.divf %71, %72 : vector<8x128xf32>
    %74 = arith.mulf %65, %46 : vector<8x128xf32>
    %75 = arith.mulf %59, %67 : vector<8x128xf32>
    %76 = arith.addf %74, %75 : vector<8x128xf32>
    %77 = math.tanh %76 : vector<8x128xf32>
    %78 = arith.mulf %73, %77 : vector<8x128xf32>
    %79 = vector.extract_strided_slice %15 {offsets = [16, 0], sizes = [8, 512], strides = [1, 1]} : vector<64x512xf32> to vector<8x512xf32>
    %80 = vector.extract_strided_slice %15 {offsets = [40, 0], sizes = [8, 512], strides = [1, 1]} : vector<64x512xf32> to vector<8x512xf32>
    %81 = arith.select %9, %79, %80 : vector<8x512xi1>, vector<8x512xf32>
    %cst_17 = arith.constant dense<0.000000e+00> : vector<8x512xf32>
    %82 = tpu.matmul %78, %16, %cst_17 {dimension_numbers = #tpu.dot_dimension_numbers<[1], [0], [0], [1], [0, 0, 1, 1], [], []>} : vector<8x128xf32>, vector<128x512xf32>, vector<8x512xf32> -> vector<8x512xf32>
    %83 = arith.addf %81, %82 : vector<8x512xf32>
    %84 = vector.extract_strided_slice %83 {offsets = [0, 0], sizes = [8, 128], strides = [1, 1]} : vector<8x512xf32> to vector<8x128xf32>
    %85 = arith.negf %84 : vector<8x128xf32>
    %86 = math.exp %85 : vector<8x128xf32>
    %cst_18 = arith.constant 1.000000e+00 : f32
    %87 = vector.broadcast %cst_18 : f32 to vector<8x128xf32>
    %88 = arith.addf %87, %86 : vector<8x128xf32>
    %89 = arith.divf %87, %88 : vector<8x128xf32>
    %90 = vector.extract_strided_slice %83 {offsets = [0, 128], sizes = [8, 128], strides = [1, 1]} : vector<8x512xf32> to vector<8x128xf32>
    %91 = arith.negf %90 : vector<8x128xf32>
    %92 = math.exp %91 : vector<8x128xf32>
    %cst_19 = arith.constant 1.000000e+00 : f32
    %93 = vector.broadcast %cst_19 : f32 to vector<8x128xf32>
    %94 = arith.addf %93, %92 : vector<8x128xf32>
    %95 = arith.divf %93, %94 : vector<8x128xf32>
    %96 = vector.extract_strided_slice %83 {offsets = [0, 256], sizes = [8, 128], strides = [1, 1]} : vector<8x512xf32> to vector<8x128xf32>
    %97 = math.tanh %96 : vector<8x128xf32>
    %98 = vector.extract_strided_slice %83 {offsets = [0, 384], sizes = [8, 128], strides = [1, 1]} : vector<8x512xf32> to vector<8x128xf32>
    %99 = arith.negf %98 : vector<8x128xf32>
    %100 = math.exp %99 : vector<8x128xf32>
    %cst_20 = arith.constant 1.000000e+00 : f32
    %101 = vector.broadcast %cst_20 : f32 to vector<8x128xf32>
    %102 = arith.addf %101, %100 : vector<8x128xf32>
    %103 = arith.divf %101, %102 : vector<8x128xf32>
    %104 = arith.mulf %95, %76 : vector<8x128xf32>
    %105 = arith.mulf %89, %97 : vector<8x128xf32>
    %106 = arith.addf %104, %105 : vector<8x128xf32>
    %107 = math.tanh %106 : vector<8x128xf32>
    %108 = arith.mulf %103, %107 : vector<8x128xf32>
    %109 = vector.extract_strided_slice %15 {offsets = [24, 0], sizes = [8, 512], strides = [1, 1]} : vector<64x512xf32> to vector<8x512xf32>
    %110 = vector.extract_strided_slice %15 {offsets = [32, 0], sizes = [8, 512], strides = [1, 1]} : vector<64x512xf32> to vector<8x512xf32>
    %111 = arith.select %9, %109, %110 : vector<8x512xi1>, vector<8x512xf32>
    %cst_21 = arith.constant dense<0.000000e+00> : vector<8x512xf32>
    %112 = tpu.matmul %108, %16, %cst_21 {dimension_numbers = #tpu.dot_dimension_numbers<[1], [0], [0], [1], [0, 0, 1, 1], [], []>} : vector<8x128xf32>, vector<128x512xf32>, vector<8x512xf32> -> vector<8x512xf32>
    %113 = arith.addf %111, %112 : vector<8x512xf32>
    %114 = vector.extract_strided_slice %113 {offsets = [0, 0], sizes = [8, 128], strides = [1, 1]} : vector<8x512xf32> to vector<8x128xf32>
    %115 = arith.negf %114 : vector<8x128xf32>
    %116 = math.exp %115 : vector<8x128xf32>
    %cst_22 = arith.constant 1.000000e+00 : f32
    %117 = vector.broadcast %cst_22 : f32 to vector<8x128xf32>
    %118 = arith.addf %117, %116 : vector<8x128xf32>
    %119 = arith.divf %117, %118 : vector<8x128xf32>
    %120 = vector.extract_strided_slice %113 {offsets = [0, 128], sizes = [8, 128], strides = [1, 1]} : vector<8x512xf32> to vector<8x128xf32>
    %121 = arith.negf %120 : vector<8x128xf32>
    %122 = math.exp %121 : vector<8x128xf32>
    %cst_23 = arith.constant 1.000000e+00 : f32
    %123 = vector.broadcast %cst_23 : f32 to vector<8x128xf32>
    %124 = arith.addf %123, %122 : vector<8x128xf32>
    %125 = arith.divf %123, %124 : vector<8x128xf32>
    %126 = vector.extract_strided_slice %113 {offsets = [0, 256], sizes = [8, 128], strides = [1, 1]} : vector<8x512xf32> to vector<8x128xf32>
    %127 = math.tanh %126 : vector<8x128xf32>
    %128 = vector.extract_strided_slice %113 {offsets = [0, 384], sizes = [8, 128], strides = [1, 1]} : vector<8x512xf32> to vector<8x128xf32>
    %129 = arith.negf %128 : vector<8x128xf32>
    %130 = math.exp %129 : vector<8x128xf32>
    %cst_24 = arith.constant 1.000000e+00 : f32
    %131 = vector.broadcast %cst_24 : f32 to vector<8x128xf32>
    %132 = arith.addf %131, %130 : vector<8x128xf32>
    %133 = arith.divf %131, %132 : vector<8x128xf32>
    %134 = arith.mulf %125, %106 : vector<8x128xf32>
    %135 = arith.mulf %119, %127 : vector<8x128xf32>
    %136 = arith.addf %134, %135 : vector<8x128xf32>
    %137 = math.tanh %136 : vector<8x128xf32>
    %138 = arith.mulf %133, %137 : vector<8x128xf32>
    %139 = vector.extract_strided_slice %15 {offsets = [32, 0], sizes = [8, 512], strides = [1, 1]} : vector<64x512xf32> to vector<8x512xf32>
    %140 = vector.extract_strided_slice %15 {offsets = [24, 0], sizes = [8, 512], strides = [1, 1]} : vector<64x512xf32> to vector<8x512xf32>
    %141 = arith.select %9, %139, %140 : vector<8x512xi1>, vector<8x512xf32>
    %cst_25 = arith.constant dense<0.000000e+00> : vector<8x512xf32>
    %142 = tpu.matmul %138, %16, %cst_25 {dimension_numbers = #tpu.dot_dimension_numbers<[1], [0], [0], [1], [0, 0, 1, 1], [], []>} : vector<8x128xf32>, vector<128x512xf32>, vector<8x512xf32> -> vector<8x512xf32>
    %143 = arith.addf %141, %142 : vector<8x512xf32>
    %144 = vector.extract_strided_slice %143 {offsets = [0, 0], sizes = [8, 128], strides = [1, 1]} : vector<8x512xf32> to vector<8x128xf32>
    %145 = arith.negf %144 : vector<8x128xf32>
    %146 = math.exp %145 : vector<8x128xf32>
    %cst_26 = arith.constant 1.000000e+00 : f32
    %147 = vector.broadcast %cst_26 : f32 to vector<8x128xf32>
    %148 = arith.addf %147, %146 : vector<8x128xf32>
    %149 = arith.divf %147, %148 : vector<8x128xf32>
    %150 = vector.extract_strided_slice %143 {offsets = [0, 128], sizes = [8, 128], strides = [1, 1]} : vector<8x512xf32> to vector<8x128xf32>
    %151 = arith.negf %150 : vector<8x128xf32>
    %152 = math.exp %151 : vector<8x128xf32>
    %cst_27 = arith.constant 1.000000e+00 : f32
    %153 = vector.broadcast %cst_27 : f32 to vector<8x128xf32>
    %154 = arith.addf %153, %152 : vector<8x128xf32>
    %155 = arith.divf %153, %154 : vector<8x128xf32>
    %156 = vector.extract_strided_slice %143 {offsets = [0, 256], sizes = [8, 128], strides = [1, 1]} : vector<8x512xf32> to vector<8x128xf32>
    %157 = math.tanh %156 : vector<8x128xf32>
    %158 = vector.extract_strided_slice %143 {offsets = [0, 384], sizes = [8, 128], strides = [1, 1]} : vector<8x512xf32> to vector<8x128xf32>
    %159 = arith.negf %158 : vector<8x128xf32>
    %160 = math.exp %159 : vector<8x128xf32>
    %cst_28 = arith.constant 1.000000e+00 : f32
    %161 = vector.broadcast %cst_28 : f32 to vector<8x128xf32>
    %162 = arith.addf %161, %160 : vector<8x128xf32>
    %163 = arith.divf %161, %162 : vector<8x128xf32>
    %164 = arith.mulf %155, %136 : vector<8x128xf32>
    %165 = arith.mulf %149, %157 : vector<8x128xf32>
    %166 = arith.addf %164, %165 : vector<8x128xf32>
    %167 = math.tanh %166 : vector<8x128xf32>
    %168 = arith.mulf %163, %167 : vector<8x128xf32>
    %169 = vector.extract_strided_slice %15 {offsets = [40, 0], sizes = [8, 512], strides = [1, 1]} : vector<64x512xf32> to vector<8x512xf32>
    %170 = vector.extract_strided_slice %15 {offsets = [16, 0], sizes = [8, 512], strides = [1, 1]} : vector<64x512xf32> to vector<8x512xf32>
    %171 = arith.select %9, %169, %170 : vector<8x512xi1>, vector<8x512xf32>
    %cst_29 = arith.constant dense<0.000000e+00> : vector<8x512xf32>
    %172 = tpu.matmul %168, %16, %cst_29 {dimension_numbers = #tpu.dot_dimension_numbers<[1], [0], [0], [1], [0, 0, 1, 1], [], []>} : vector<8x128xf32>, vector<128x512xf32>, vector<8x512xf32> -> vector<8x512xf32>
    %173 = arith.addf %171, %172 : vector<8x512xf32>
    %174 = vector.extract_strided_slice %173 {offsets = [0, 0], sizes = [8, 128], strides = [1, 1]} : vector<8x512xf32> to vector<8x128xf32>
    %175 = arith.negf %174 : vector<8x128xf32>
    %176 = math.exp %175 : vector<8x128xf32>
    %cst_30 = arith.constant 1.000000e+00 : f32
    %177 = vector.broadcast %cst_30 : f32 to vector<8x128xf32>
    %178 = arith.addf %177, %176 : vector<8x128xf32>
    %179 = arith.divf %177, %178 : vector<8x128xf32>
    %180 = vector.extract_strided_slice %173 {offsets = [0, 128], sizes = [8, 128], strides = [1, 1]} : vector<8x512xf32> to vector<8x128xf32>
    %181 = arith.negf %180 : vector<8x128xf32>
    %182 = math.exp %181 : vector<8x128xf32>
    %cst_31 = arith.constant 1.000000e+00 : f32
    %183 = vector.broadcast %cst_31 : f32 to vector<8x128xf32>
    %184 = arith.addf %183, %182 : vector<8x128xf32>
    %185 = arith.divf %183, %184 : vector<8x128xf32>
    %186 = vector.extract_strided_slice %173 {offsets = [0, 256], sizes = [8, 128], strides = [1, 1]} : vector<8x512xf32> to vector<8x128xf32>
    %187 = math.tanh %186 : vector<8x128xf32>
    %188 = vector.extract_strided_slice %173 {offsets = [0, 384], sizes = [8, 128], strides = [1, 1]} : vector<8x512xf32> to vector<8x128xf32>
    %189 = arith.negf %188 : vector<8x128xf32>
    %190 = math.exp %189 : vector<8x128xf32>
    %cst_32 = arith.constant 1.000000e+00 : f32
    %191 = vector.broadcast %cst_32 : f32 to vector<8x128xf32>
    %192 = arith.addf %191, %190 : vector<8x128xf32>
    %193 = arith.divf %191, %192 : vector<8x128xf32>
    %194 = arith.mulf %185, %166 : vector<8x128xf32>
    %195 = arith.mulf %179, %187 : vector<8x128xf32>
    %196 = arith.addf %194, %195 : vector<8x128xf32>
    %197 = math.tanh %196 : vector<8x128xf32>
    %198 = arith.mulf %193, %197 : vector<8x128xf32>
    %199 = vector.extract_strided_slice %15 {offsets = [48, 0], sizes = [8, 512], strides = [1, 1]} : vector<64x512xf32> to vector<8x512xf32>
    %200 = vector.extract_strided_slice %15 {offsets = [8, 0], sizes = [8, 512], strides = [1, 1]} : vector<64x512xf32> to vector<8x512xf32>
    %201 = arith.select %9, %199, %200 : vector<8x512xi1>, vector<8x512xf32>
    %cst_33 = arith.constant dense<0.000000e+00> : vector<8x512xf32>
    %202 = tpu.matmul %198, %16, %cst_33 {dimension_numbers = #tpu.dot_dimension_numbers<[1], [0], [0], [1], [0, 0, 1, 1], [], []>} : vector<8x128xf32>, vector<128x512xf32>, vector<8x512xf32> -> vector<8x512xf32>
    %203 = arith.addf %201, %202 : vector<8x512xf32>
    %204 = vector.extract_strided_slice %203 {offsets = [0, 0], sizes = [8, 128], strides = [1, 1]} : vector<8x512xf32> to vector<8x128xf32>
    %205 = arith.negf %204 : vector<8x128xf32>
    %206 = math.exp %205 : vector<8x128xf32>
    %cst_34 = arith.constant 1.000000e+00 : f32
    %207 = vector.broadcast %cst_34 : f32 to vector<8x128xf32>
    %208 = arith.addf %207, %206 : vector<8x128xf32>
    %209 = arith.divf %207, %208 : vector<8x128xf32>
    %210 = vector.extract_strided_slice %203 {offsets = [0, 128], sizes = [8, 128], strides = [1, 1]} : vector<8x512xf32> to vector<8x128xf32>
    %211 = arith.negf %210 : vector<8x128xf32>
    %212 = math.exp %211 : vector<8x128xf32>
    %cst_35 = arith.constant 1.000000e+00 : f32
    %213 = vector.broadcast %cst_35 : f32 to vector<8x128xf32>
    %214 = arith.addf %213, %212 : vector<8x128xf32>
    %215 = arith.divf %213, %214 : vector<8x128xf32>
    %216 = vector.extract_strided_slice %203 {offsets = [0, 256], sizes = [8, 128], strides = [1, 1]} : vector<8x512xf32> to vector<8x128xf32>
    %217 = math.tanh %216 : vector<8x128xf32>
    %218 = vector.extract_strided_slice %203 {offsets = [0, 384], sizes = [8, 128], strides = [1, 1]} : vector<8x512xf32> to vector<8x128xf32>
    %219 = arith.negf %218 : vector<8x128xf32>
    %220 = math.exp %219 : vector<8x128xf32>
    %cst_36 = arith.constant 1.000000e+00 : f32
    %221 = vector.broadcast %cst_36 : f32 to vector<8x128xf32>
    %222 = arith.addf %221, %220 : vector<8x128xf32>
    %223 = arith.divf %221, %222 : vector<8x128xf32>
    %224 = arith.mulf %215, %196 : vector<8x128xf32>
    %225 = arith.mulf %209, %217 : vector<8x128xf32>
    %226 = arith.addf %224, %225 : vector<8x128xf32>
    %227 = math.tanh %226 : vector<8x128xf32>
    %228 = arith.mulf %223, %227 : vector<8x128xf32>
    %229 = vector.extract_strided_slice %15 {offsets = [56, 0], sizes = [8, 512], strides = [1, 1]} : vector<64x512xf32> to vector<8x512xf32>
    %230 = vector.extract_strided_slice %15 {offsets = [0, 0], sizes = [8, 512], strides = [1, 1]} : vector<64x512xf32> to vector<8x512xf32>
    %231 = arith.select %9, %229, %230 : vector<8x512xi1>, vector<8x512xf32>
    %cst_37 = arith.constant dense<0.000000e+00> : vector<8x512xf32>
    %232 = tpu.matmul %228, %16, %cst_37 {dimension_numbers = #tpu.dot_dimension_numbers<[1], [0], [0], [1], [0, 0, 1, 1], [], []>} : vector<8x128xf32>, vector<128x512xf32>, vector<8x512xf32> -> vector<8x512xf32>
    %233 = arith.addf %231, %232 : vector<8x512xf32>
    %234 = vector.extract_strided_slice %233 {offsets = [0, 0], sizes = [8, 128], strides = [1, 1]} : vector<8x512xf32> to vector<8x128xf32>
    %235 = arith.negf %234 : vector<8x128xf32>
    %236 = math.exp %235 : vector<8x128xf32>
    %cst_38 = arith.constant 1.000000e+00 : f32
    %237 = vector.broadcast %cst_38 : f32 to vector<8x128xf32>
    %238 = arith.addf %237, %236 : vector<8x128xf32>
    %239 = arith.divf %237, %238 : vector<8x128xf32>
    %240 = vector.extract_strided_slice %233 {offsets = [0, 128], sizes = [8, 128], strides = [1, 1]} : vector<8x512xf32> to vector<8x128xf32>
    %241 = arith.negf %240 : vector<8x128xf32>
    %242 = math.exp %241 : vector<8x128xf32>
    %cst_39 = arith.constant 1.000000e+00 : f32
    %243 = vector.broadcast %cst_39 : f32 to vector<8x128xf32>
    %244 = arith.addf %243, %242 : vector<8x128xf32>
    %245 = arith.divf %243, %244 : vector<8x128xf32>
    %246 = vector.extract_strided_slice %233 {offsets = [0, 256], sizes = [8, 128], strides = [1, 1]} : vector<8x512xf32> to vector<8x128xf32>
    %247 = math.tanh %246 : vector<8x128xf32>
    %248 = vector.extract_strided_slice %233 {offsets = [0, 384], sizes = [8, 128], strides = [1, 1]} : vector<8x512xf32> to vector<8x128xf32>
    %249 = arith.negf %248 : vector<8x128xf32>
    %250 = math.exp %249 : vector<8x128xf32>
    %cst_40 = arith.constant 1.000000e+00 : f32
    %251 = vector.broadcast %cst_40 : f32 to vector<8x128xf32>
    %252 = arith.addf %251, %250 : vector<8x128xf32>
    %253 = arith.divf %251, %252 : vector<8x128xf32>
    %254 = arith.mulf %245, %226 : vector<8x128xf32>
    %255 = arith.mulf %239, %247 : vector<8x128xf32>
    %256 = arith.addf %254, %255 : vector<8x128xf32>
    %257 = math.tanh %256 : vector<8x128xf32>
    %258 = arith.mulf %253, %257 : vector<8x128xf32>
    %259 = arith.select %8, %48, %258 : vector<8x128xi1>, vector<8x128xf32>
    %260 = arith.select %8, %78, %228 : vector<8x128xi1>, vector<8x128xf32>
    %261 = arith.select %8, %108, %198 : vector<8x128xi1>, vector<8x128xf32>
    %262 = arith.select %8, %138, %168 : vector<8x128xi1>, vector<8x128xf32>
    %263 = arith.select %8, %168, %138 : vector<8x128xi1>, vector<8x128xf32>
    %264 = arith.select %8, %198, %108 : vector<8x128xi1>, vector<8x128xf32>
    %265 = arith.select %8, %228, %78 : vector<8x128xi1>, vector<8x128xf32>
    %266 = arith.select %8, %258, %48 : vector<8x128xi1>, vector<8x128xf32>
    %267 = tpu.concatenate %259, %260, %261, %262, %263, %264, %265, %266 in 0 : vector<8x128xf32>, vector<8x128xf32>, vector<8x128xf32>, vector<8x128xf32>, vector<8x128xf32>, vector<8x128xf32>, vector<8x128xf32>, vector<8x128xf32> -> vector<64x128xf32>
    %c0_41 = arith.constant 0 : index
    %c0_42 = arith.constant 0 : index
    %268 = vector.load %arg4[%c0_41, %c0_42] : memref<128x512xf32, #tpu.memory_space<vmem>>, vector<128x512xf32>
    %cst_43 = arith.constant dense<0.000000e+00> : vector<64x512xf32>
    %269 = tpu.matmul %267, %268, %cst_43 {dimension_numbers = #tpu.dot_dimension_numbers<[1], [0], [0], [1], [0, 0, 1, 1], [], []>} : vector<64x128xf32>, vector<128x512xf32>, vector<64x512xf32> -> vector<64x512xf32>
    %c0_44 = arith.constant 0 : index
    %c0_45 = arith.constant 0 : index
    %270 = vector.load %arg5[%c0_44, %c0_45] : memref<1x512xf32, #tpu.memory_space<vmem>>, vector<1x512xf32>
    %271 = vector.broadcast %270 : vector<1x512xf32> to vector<64x512xf32>
    %272 = arith.addf %269, %271 : vector<64x512xf32>
    %c0_46 = arith.constant 0 : index
    %c0_47 = arith.constant 0 : index
    %273 = vector.load %arg6[%c0_46, %c0_47] : memref<128x512xf32, #tpu.memory_space<vmem>>, vector<128x512xf32>
    %cst_48 = arith.constant 0.000000e+00 : f32
    %274 = vector.broadcast %cst_48 : f32 to vector<8x128xf32>
    %cst_49 = arith.constant 0.000000e+00 : f32
    %275 = vector.broadcast %cst_49 : f32 to vector<8x128xf32>
    %276 = vector.extract_strided_slice %272 {offsets = [0, 0], sizes = [8, 512], strides = [1, 1]} : vector<64x512xf32> to vector<8x512xf32>
    %277 = vector.extract_strided_slice %272 {offsets = [56, 0], sizes = [8, 512], strides = [1, 1]} : vector<64x512xf32> to vector<8x512xf32>
    %278 = arith.select %9, %276, %277 : vector<8x512xi1>, vector<8x512xf32>
    %cst_50 = arith.constant dense<0.000000e+00> : vector<8x512xf32>
    %279 = tpu.matmul %274, %273, %cst_50 {dimension_numbers = #tpu.dot_dimension_numbers<[1], [0], [0], [1], [0, 0, 1, 1], [], []>} : vector<8x128xf32>, vector<128x512xf32>, vector<8x512xf32> -> vector<8x512xf32>
    %280 = arith.addf %278, %279 : vector<8x512xf32>
    %281 = vector.extract_strided_slice %280 {offsets = [0, 0], sizes = [8, 128], strides = [1, 1]} : vector<8x512xf32> to vector<8x128xf32>
    %282 = arith.negf %281 : vector<8x128xf32>
    %283 = math.exp %282 : vector<8x128xf32>
    %cst_51 = arith.constant 1.000000e+00 : f32
    %284 = vector.broadcast %cst_51 : f32 to vector<8x128xf32>
    %285 = arith.addf %284, %283 : vector<8x128xf32>
    %286 = arith.divf %284, %285 : vector<8x128xf32>
    %287 = vector.extract_strided_slice %280 {offsets = [0, 128], sizes = [8, 128], strides = [1, 1]} : vector<8x512xf32> to vector<8x128xf32>
    %288 = arith.negf %287 : vector<8x128xf32>
    %289 = math.exp %288 : vector<8x128xf32>
    %cst_52 = arith.constant 1.000000e+00 : f32
    %290 = vector.broadcast %cst_52 : f32 to vector<8x128xf32>
    %291 = arith.addf %290, %289 : vector<8x128xf32>
    %292 = arith.divf %290, %291 : vector<8x128xf32>
    %293 = vector.extract_strided_slice %280 {offsets = [0, 256], sizes = [8, 128], strides = [1, 1]} : vector<8x512xf32> to vector<8x128xf32>
    %294 = math.tanh %293 : vector<8x128xf32>
    %295 = vector.extract_strided_slice %280 {offsets = [0, 384], sizes = [8, 128], strides = [1, 1]} : vector<8x512xf32> to vector<8x128xf32>
    %296 = arith.negf %295 : vector<8x128xf32>
    %297 = math.exp %296 : vector<8x128xf32>
    %cst_53 = arith.constant 1.000000e+00 : f32
    %298 = vector.broadcast %cst_53 : f32 to vector<8x128xf32>
    %299 = arith.addf %298, %297 : vector<8x128xf32>
    %300 = arith.divf %298, %299 : vector<8x128xf32>
    %301 = arith.mulf %292, %275 : vector<8x128xf32>
    %302 = arith.mulf %286, %294 : vector<8x128xf32>
    %303 = arith.addf %301, %302 : vector<8x128xf32>
    %304 = math.tanh %303 : vector<8x128xf32>
    %305 = arith.mulf %300, %304 : vector<8x128xf32>
    %306 = vector.extract_strided_slice %272 {offsets = [8, 0], sizes = [8, 512], strides = [1, 1]} : vector<64x512xf32> to vector<8x512xf32>
    %307 = vector.extract_strided_slice %272 {offsets = [48, 0], sizes = [8, 512], strides = [1, 1]} : vector<64x512xf32> to vector<8x512xf32>
    %308 = arith.select %9, %306, %307 : vector<8x512xi1>, vector<8x512xf32>
    %cst_54 = arith.constant dense<0.000000e+00> : vector<8x512xf32>
    %309 = tpu.matmul %305, %273, %cst_54 {dimension_numbers = #tpu.dot_dimension_numbers<[1], [0], [0], [1], [0, 0, 1, 1], [], []>} : vector<8x128xf32>, vector<128x512xf32>, vector<8x512xf32> -> vector<8x512xf32>
    %310 = arith.addf %308, %309 : vector<8x512xf32>
    %311 = vector.extract_strided_slice %310 {offsets = [0, 0], sizes = [8, 128], strides = [1, 1]} : vector<8x512xf32> to vector<8x128xf32>
    %312 = arith.negf %311 : vector<8x128xf32>
    %313 = math.exp %312 : vector<8x128xf32>
    %cst_55 = arith.constant 1.000000e+00 : f32
    %314 = vector.broadcast %cst_55 : f32 to vector<8x128xf32>
    %315 = arith.addf %314, %313 : vector<8x128xf32>
    %316 = arith.divf %314, %315 : vector<8x128xf32>
    %317 = vector.extract_strided_slice %310 {offsets = [0, 128], sizes = [8, 128], strides = [1, 1]} : vector<8x512xf32> to vector<8x128xf32>
    %318 = arith.negf %317 : vector<8x128xf32>
    %319 = math.exp %318 : vector<8x128xf32>
    %cst_56 = arith.constant 1.000000e+00 : f32
    %320 = vector.broadcast %cst_56 : f32 to vector<8x128xf32>
    %321 = arith.addf %320, %319 : vector<8x128xf32>
    %322 = arith.divf %320, %321 : vector<8x128xf32>
    %323 = vector.extract_strided_slice %310 {offsets = [0, 256], sizes = [8, 128], strides = [1, 1]} : vector<8x512xf32> to vector<8x128xf32>
    %324 = math.tanh %323 : vector<8x128xf32>
    %325 = vector.extract_strided_slice %310 {offsets = [0, 384], sizes = [8, 128], strides = [1, 1]} : vector<8x512xf32> to vector<8x128xf32>
    %326 = arith.negf %325 : vector<8x128xf32>
    %327 = math.exp %326 : vector<8x128xf32>
    %cst_57 = arith.constant 1.000000e+00 : f32
    %328 = vector.broadcast %cst_57 : f32 to vector<8x128xf32>
    %329 = arith.addf %328, %327 : vector<8x128xf32>
    %330 = arith.divf %328, %329 : vector<8x128xf32>
    %331 = arith.mulf %322, %303 : vector<8x128xf32>
    %332 = arith.mulf %316, %324 : vector<8x128xf32>
    %333 = arith.addf %331, %332 : vector<8x128xf32>
    %334 = math.tanh %333 : vector<8x128xf32>
    %335 = arith.mulf %330, %334 : vector<8x128xf32>
    %336 = vector.extract_strided_slice %272 {offsets = [16, 0], sizes = [8, 512], strides = [1, 1]} : vector<64x512xf32> to vector<8x512xf32>
    %337 = vector.extract_strided_slice %272 {offsets = [40, 0], sizes = [8, 512], strides = [1, 1]} : vector<64x512xf32> to vector<8x512xf32>
    %338 = arith.select %9, %336, %337 : vector<8x512xi1>, vector<8x512xf32>
    %cst_58 = arith.constant dense<0.000000e+00> : vector<8x512xf32>
    %339 = tpu.matmul %335, %273, %cst_58 {dimension_numbers = #tpu.dot_dimension_numbers<[1], [0], [0], [1], [0, 0, 1, 1], [], []>} : vector<8x128xf32>, vector<128x512xf32>, vector<8x512xf32> -> vector<8x512xf32>
    %340 = arith.addf %338, %339 : vector<8x512xf32>
    %341 = vector.extract_strided_slice %340 {offsets = [0, 0], sizes = [8, 128], strides = [1, 1]} : vector<8x512xf32> to vector<8x128xf32>
    %342 = arith.negf %341 : vector<8x128xf32>
    %343 = math.exp %342 : vector<8x128xf32>
    %cst_59 = arith.constant 1.000000e+00 : f32
    %344 = vector.broadcast %cst_59 : f32 to vector<8x128xf32>
    %345 = arith.addf %344, %343 : vector<8x128xf32>
    %346 = arith.divf %344, %345 : vector<8x128xf32>
    %347 = vector.extract_strided_slice %340 {offsets = [0, 128], sizes = [8, 128], strides = [1, 1]} : vector<8x512xf32> to vector<8x128xf32>
    %348 = arith.negf %347 : vector<8x128xf32>
    %349 = math.exp %348 : vector<8x128xf32>
    %cst_60 = arith.constant 1.000000e+00 : f32
    %350 = vector.broadcast %cst_60 : f32 to vector<8x128xf32>
    %351 = arith.addf %350, %349 : vector<8x128xf32>
    %352 = arith.divf %350, %351 : vector<8x128xf32>
    %353 = vector.extract_strided_slice %340 {offsets = [0, 256], sizes = [8, 128], strides = [1, 1]} : vector<8x512xf32> to vector<8x128xf32>
    %354 = math.tanh %353 : vector<8x128xf32>
    %355 = vector.extract_strided_slice %340 {offsets = [0, 384], sizes = [8, 128], strides = [1, 1]} : vector<8x512xf32> to vector<8x128xf32>
    %356 = arith.negf %355 : vector<8x128xf32>
    %357 = math.exp %356 : vector<8x128xf32>
    %cst_61 = arith.constant 1.000000e+00 : f32
    %358 = vector.broadcast %cst_61 : f32 to vector<8x128xf32>
    %359 = arith.addf %358, %357 : vector<8x128xf32>
    %360 = arith.divf %358, %359 : vector<8x128xf32>
    %361 = arith.mulf %352, %333 : vector<8x128xf32>
    %362 = arith.mulf %346, %354 : vector<8x128xf32>
    %363 = arith.addf %361, %362 : vector<8x128xf32>
    %364 = math.tanh %363 : vector<8x128xf32>
    %365 = arith.mulf %360, %364 : vector<8x128xf32>
    %366 = vector.extract_strided_slice %272 {offsets = [24, 0], sizes = [8, 512], strides = [1, 1]} : vector<64x512xf32> to vector<8x512xf32>
    %367 = vector.extract_strided_slice %272 {offsets = [32, 0], sizes = [8, 512], strides = [1, 1]} : vector<64x512xf32> to vector<8x512xf32>
    %368 = arith.select %9, %366, %367 : vector<8x512xi1>, vector<8x512xf32>
    %cst_62 = arith.constant dense<0.000000e+00> : vector<8x512xf32>
    %369 = tpu.matmul %365, %273, %cst_62 {dimension_numbers = #tpu.dot_dimension_numbers<[1], [0], [0], [1], [0, 0, 1, 1], [], []>} : vector<8x128xf32>, vector<128x512xf32>, vector<8x512xf32> -> vector<8x512xf32>
    %370 = arith.addf %368, %369 : vector<8x512xf32>
    %371 = vector.extract_strided_slice %370 {offsets = [0, 0], sizes = [8, 128], strides = [1, 1]} : vector<8x512xf32> to vector<8x128xf32>
    %372 = arith.negf %371 : vector<8x128xf32>
    %373 = math.exp %372 : vector<8x128xf32>
    %cst_63 = arith.constant 1.000000e+00 : f32
    %374 = vector.broadcast %cst_63 : f32 to vector<8x128xf32>
    %375 = arith.addf %374, %373 : vector<8x128xf32>
    %376 = arith.divf %374, %375 : vector<8x128xf32>
    %377 = vector.extract_strided_slice %370 {offsets = [0, 128], sizes = [8, 128], strides = [1, 1]} : vector<8x512xf32> to vector<8x128xf32>
    %378 = arith.negf %377 : vector<8x128xf32>
    %379 = math.exp %378 : vector<8x128xf32>
    %cst_64 = arith.constant 1.000000e+00 : f32
    %380 = vector.broadcast %cst_64 : f32 to vector<8x128xf32>
    %381 = arith.addf %380, %379 : vector<8x128xf32>
    %382 = arith.divf %380, %381 : vector<8x128xf32>
    %383 = vector.extract_strided_slice %370 {offsets = [0, 256], sizes = [8, 128], strides = [1, 1]} : vector<8x512xf32> to vector<8x128xf32>
    %384 = math.tanh %383 : vector<8x128xf32>
    %385 = vector.extract_strided_slice %370 {offsets = [0, 384], sizes = [8, 128], strides = [1, 1]} : vector<8x512xf32> to vector<8x128xf32>
    %386 = arith.negf %385 : vector<8x128xf32>
    %387 = math.exp %386 : vector<8x128xf32>
    %cst_65 = arith.constant 1.000000e+00 : f32
    %388 = vector.broadcast %cst_65 : f32 to vector<8x128xf32>
    %389 = arith.addf %388, %387 : vector<8x128xf32>
    %390 = arith.divf %388, %389 : vector<8x128xf32>
    %391 = arith.mulf %382, %363 : vector<8x128xf32>
    %392 = arith.mulf %376, %384 : vector<8x128xf32>
    %393 = arith.addf %391, %392 : vector<8x128xf32>
    %394 = math.tanh %393 : vector<8x128xf32>
    %395 = arith.mulf %390, %394 : vector<8x128xf32>
    %396 = vector.extract_strided_slice %272 {offsets = [32, 0], sizes = [8, 512], strides = [1, 1]} : vector<64x512xf32> to vector<8x512xf32>
    %397 = vector.extract_strided_slice %272 {offsets = [24, 0], sizes = [8, 512], strides = [1, 1]} : vector<64x512xf32> to vector<8x512xf32>
    %398 = arith.select %9, %396, %397 : vector<8x512xi1>, vector<8x512xf32>
    %cst_66 = arith.constant dense<0.000000e+00> : vector<8x512xf32>
    %399 = tpu.matmul %395, %273, %cst_66 {dimension_numbers = #tpu.dot_dimension_numbers<[1], [0], [0], [1], [0, 0, 1, 1], [], []>} : vector<8x128xf32>, vector<128x512xf32>, vector<8x512xf32> -> vector<8x512xf32>
    %400 = arith.addf %398, %399 : vector<8x512xf32>
    %401 = vector.extract_strided_slice %400 {offsets = [0, 0], sizes = [8, 128], strides = [1, 1]} : vector<8x512xf32> to vector<8x128xf32>
    %402 = arith.negf %401 : vector<8x128xf32>
    %403 = math.exp %402 : vector<8x128xf32>
    %cst_67 = arith.constant 1.000000e+00 : f32
    %404 = vector.broadcast %cst_67 : f32 to vector<8x128xf32>
    %405 = arith.addf %404, %403 : vector<8x128xf32>
    %406 = arith.divf %404, %405 : vector<8x128xf32>
    %407 = vector.extract_strided_slice %400 {offsets = [0, 128], sizes = [8, 128], strides = [1, 1]} : vector<8x512xf32> to vector<8x128xf32>
    %408 = arith.negf %407 : vector<8x128xf32>
    %409 = math.exp %408 : vector<8x128xf32>
    %cst_68 = arith.constant 1.000000e+00 : f32
    %410 = vector.broadcast %cst_68 : f32 to vector<8x128xf32>
    %411 = arith.addf %410, %409 : vector<8x128xf32>
    %412 = arith.divf %410, %411 : vector<8x128xf32>
    %413 = vector.extract_strided_slice %400 {offsets = [0, 256], sizes = [8, 128], strides = [1, 1]} : vector<8x512xf32> to vector<8x128xf32>
    %414 = math.tanh %413 : vector<8x128xf32>
    %415 = vector.extract_strided_slice %400 {offsets = [0, 384], sizes = [8, 128], strides = [1, 1]} : vector<8x512xf32> to vector<8x128xf32>
    %416 = arith.negf %415 : vector<8x128xf32>
    %417 = math.exp %416 : vector<8x128xf32>
    %cst_69 = arith.constant 1.000000e+00 : f32
    %418 = vector.broadcast %cst_69 : f32 to vector<8x128xf32>
    %419 = arith.addf %418, %417 : vector<8x128xf32>
    %420 = arith.divf %418, %419 : vector<8x128xf32>
    %421 = arith.mulf %412, %393 : vector<8x128xf32>
    %422 = arith.mulf %406, %414 : vector<8x128xf32>
    %423 = arith.addf %421, %422 : vector<8x128xf32>
    %424 = math.tanh %423 : vector<8x128xf32>
    %425 = arith.mulf %420, %424 : vector<8x128xf32>
    %426 = vector.extract_strided_slice %272 {offsets = [40, 0], sizes = [8, 512], strides = [1, 1]} : vector<64x512xf32> to vector<8x512xf32>
    %427 = vector.extract_strided_slice %272 {offsets = [16, 0], sizes = [8, 512], strides = [1, 1]} : vector<64x512xf32> to vector<8x512xf32>
    %428 = arith.select %9, %426, %427 : vector<8x512xi1>, vector<8x512xf32>
    %cst_70 = arith.constant dense<0.000000e+00> : vector<8x512xf32>
    %429 = tpu.matmul %425, %273, %cst_70 {dimension_numbers = #tpu.dot_dimension_numbers<[1], [0], [0], [1], [0, 0, 1, 1], [], []>} : vector<8x128xf32>, vector<128x512xf32>, vector<8x512xf32> -> vector<8x512xf32>
    %430 = arith.addf %428, %429 : vector<8x512xf32>
    %431 = vector.extract_strided_slice %430 {offsets = [0, 0], sizes = [8, 128], strides = [1, 1]} : vector<8x512xf32> to vector<8x128xf32>
    %432 = arith.negf %431 : vector<8x128xf32>
    %433 = math.exp %432 : vector<8x128xf32>
    %cst_71 = arith.constant 1.000000e+00 : f32
    %434 = vector.broadcast %cst_71 : f32 to vector<8x128xf32>
    %435 = arith.addf %434, %433 : vector<8x128xf32>
    %436 = arith.divf %434, %435 : vector<8x128xf32>
    %437 = vector.extract_strided_slice %430 {offsets = [0, 128], sizes = [8, 128], strides = [1, 1]} : vector<8x512xf32> to vector<8x128xf32>
    %438 = arith.negf %437 : vector<8x128xf32>
    %439 = math.exp %438 : vector<8x128xf32>
    %cst_72 = arith.constant 1.000000e+00 : f32
    %440 = vector.broadcast %cst_72 : f32 to vector<8x128xf32>
    %441 = arith.addf %440, %439 : vector<8x128xf32>
    %442 = arith.divf %440, %441 : vector<8x128xf32>
    %443 = vector.extract_strided_slice %430 {offsets = [0, 256], sizes = [8, 128], strides = [1, 1]} : vector<8x512xf32> to vector<8x128xf32>
    %444 = math.tanh %443 : vector<8x128xf32>
    %445 = vector.extract_strided_slice %430 {offsets = [0, 384], sizes = [8, 128], strides = [1, 1]} : vector<8x512xf32> to vector<8x128xf32>
    %446 = arith.negf %445 : vector<8x128xf32>
    %447 = math.exp %446 : vector<8x128xf32>
    %cst_73 = arith.constant 1.000000e+00 : f32
    %448 = vector.broadcast %cst_73 : f32 to vector<8x128xf32>
    %449 = arith.addf %448, %447 : vector<8x128xf32>
    %450 = arith.divf %448, %449 : vector<8x128xf32>
    %451 = arith.mulf %442, %423 : vector<8x128xf32>
    %452 = arith.mulf %436, %444 : vector<8x128xf32>
    %453 = arith.addf %451, %452 : vector<8x128xf32>
    %454 = math.tanh %453 : vector<8x128xf32>
    %455 = arith.mulf %450, %454 : vector<8x128xf32>
    %456 = vector.extract_strided_slice %272 {offsets = [48, 0], sizes = [8, 512], strides = [1, 1]} : vector<64x512xf32> to vector<8x512xf32>
    %457 = vector.extract_strided_slice %272 {offsets = [8, 0], sizes = [8, 512], strides = [1, 1]} : vector<64x512xf32> to vector<8x512xf32>
    %458 = arith.select %9, %456, %457 : vector<8x512xi1>, vector<8x512xf32>
    %cst_74 = arith.constant dense<0.000000e+00> : vector<8x512xf32>
    %459 = tpu.matmul %455, %273, %cst_74 {dimension_numbers = #tpu.dot_dimension_numbers<[1], [0], [0], [1], [0, 0, 1, 1], [], []>} : vector<8x128xf32>, vector<128x512xf32>, vector<8x512xf32> -> vector<8x512xf32>
    %460 = arith.addf %458, %459 : vector<8x512xf32>
    %461 = vector.extract_strided_slice %460 {offsets = [0, 0], sizes = [8, 128], strides = [1, 1]} : vector<8x512xf32> to vector<8x128xf32>
    %462 = arith.negf %461 : vector<8x128xf32>
    %463 = math.exp %462 : vector<8x128xf32>
    %cst_75 = arith.constant 1.000000e+00 : f32
    %464 = vector.broadcast %cst_75 : f32 to vector<8x128xf32>
    %465 = arith.addf %464, %463 : vector<8x128xf32>
    %466 = arith.divf %464, %465 : vector<8x128xf32>
    %467 = vector.extract_strided_slice %460 {offsets = [0, 128], sizes = [8, 128], strides = [1, 1]} : vector<8x512xf32> to vector<8x128xf32>
    %468 = arith.negf %467 : vector<8x128xf32>
    %469 = math.exp %468 : vector<8x128xf32>
    %cst_76 = arith.constant 1.000000e+00 : f32
    %470 = vector.broadcast %cst_76 : f32 to vector<8x128xf32>
    %471 = arith.addf %470, %469 : vector<8x128xf32>
    %472 = arith.divf %470, %471 : vector<8x128xf32>
    %473 = vector.extract_strided_slice %460 {offsets = [0, 256], sizes = [8, 128], strides = [1, 1]} : vector<8x512xf32> to vector<8x128xf32>
    %474 = math.tanh %473 : vector<8x128xf32>
    %475 = vector.extract_strided_slice %460 {offsets = [0, 384], sizes = [8, 128], strides = [1, 1]} : vector<8x512xf32> to vector<8x128xf32>
    %476 = arith.negf %475 : vector<8x128xf32>
    %477 = math.exp %476 : vector<8x128xf32>
    %cst_77 = arith.constant 1.000000e+00 : f32
    %478 = vector.broadcast %cst_77 : f32 to vector<8x128xf32>
    %479 = arith.addf %478, %477 : vector<8x128xf32>
    %480 = arith.divf %478, %479 : vector<8x128xf32>
    %481 = arith.mulf %472, %453 : vector<8x128xf32>
    %482 = arith.mulf %466, %474 : vector<8x128xf32>
    %483 = arith.addf %481, %482 : vector<8x128xf32>
    %484 = math.tanh %483 : vector<8x128xf32>
    %485 = arith.mulf %480, %484 : vector<8x128xf32>
    %486 = vector.extract_strided_slice %272 {offsets = [56, 0], sizes = [8, 512], strides = [1, 1]} : vector<64x512xf32> to vector<8x512xf32>
    %487 = vector.extract_strided_slice %272 {offsets = [0, 0], sizes = [8, 512], strides = [1, 1]} : vector<64x512xf32> to vector<8x512xf32>
    %488 = arith.select %9, %486, %487 : vector<8x512xi1>, vector<8x512xf32>
    %cst_78 = arith.constant dense<0.000000e+00> : vector<8x512xf32>
    %489 = tpu.matmul %485, %273, %cst_78 {dimension_numbers = #tpu.dot_dimension_numbers<[1], [0], [0], [1], [0, 0, 1, 1], [], []>} : vector<8x128xf32>, vector<128x512xf32>, vector<8x512xf32> -> vector<8x512xf32>
    %490 = arith.addf %488, %489 : vector<8x512xf32>
    %491 = vector.extract_strided_slice %490 {offsets = [0, 0], sizes = [8, 128], strides = [1, 1]} : vector<8x512xf32> to vector<8x128xf32>
    %492 = arith.negf %491 : vector<8x128xf32>
    %493 = math.exp %492 : vector<8x128xf32>
    %cst_79 = arith.constant 1.000000e+00 : f32
    %494 = vector.broadcast %cst_79 : f32 to vector<8x128xf32>
    %495 = arith.addf %494, %493 : vector<8x128xf32>
    %496 = arith.divf %494, %495 : vector<8x128xf32>
    %497 = vector.extract_strided_slice %490 {offsets = [0, 128], sizes = [8, 128], strides = [1, 1]} : vector<8x512xf32> to vector<8x128xf32>
    %498 = arith.negf %497 : vector<8x128xf32>
    %499 = math.exp %498 : vector<8x128xf32>
    %cst_80 = arith.constant 1.000000e+00 : f32
    %500 = vector.broadcast %cst_80 : f32 to vector<8x128xf32>
    %501 = arith.addf %500, %499 : vector<8x128xf32>
    %502 = arith.divf %500, %501 : vector<8x128xf32>
    %503 = vector.extract_strided_slice %490 {offsets = [0, 256], sizes = [8, 128], strides = [1, 1]} : vector<8x512xf32> to vector<8x128xf32>
    %504 = math.tanh %503 : vector<8x128xf32>
    %505 = vector.extract_strided_slice %490 {offsets = [0, 384], sizes = [8, 128], strides = [1, 1]} : vector<8x512xf32> to vector<8x128xf32>
    %506 = arith.negf %505 : vector<8x128xf32>
    %507 = math.exp %506 : vector<8x128xf32>
    %cst_81 = arith.constant 1.000000e+00 : f32
    %508 = vector.broadcast %cst_81 : f32 to vector<8x128xf32>
    %509 = arith.addf %508, %507 : vector<8x128xf32>
    %510 = arith.divf %508, %509 : vector<8x128xf32>
    %511 = arith.mulf %502, %483 : vector<8x128xf32>
    %512 = arith.mulf %496, %504 : vector<8x128xf32>
    %513 = arith.addf %511, %512 : vector<8x128xf32>
    %514 = math.tanh %513 : vector<8x128xf32>
    %515 = arith.mulf %510, %514 : vector<8x128xf32>
    %c0_82 = arith.constant 0 : index
    %c0_83 = arith.constant 0 : index
    %516 = vector.load %arg7[%c0_82, %c0_83] : memref<128x128xf32, #tpu.memory_space<vmem>>, vector<128x128xf32>
    %cst_84 = arith.constant dense<0.000000e+00> : vector<8x128xf32>
    %517 = tpu.matmul %515, %516, %cst_84 {dimension_numbers = #tpu.dot_dimension_numbers<[1], [0], [0], [1], [0, 0, 1, 1], [], []>} : vector<8x128xf32>, vector<128x128xf32>, vector<8x128xf32> -> vector<8x128xf32>
    %c0_85 = arith.constant 0 : index
    %c0_86 = arith.constant 0 : index
    %518 = vector.load %arg8[%c0_85, %c0_86] : memref<1x128xf32, #tpu.memory_space<vmem>>, vector<1x128xf32>
    %519 = vector.broadcast %518 : vector<1x128xf32> to vector<8x128xf32>
    %520 = arith.addf %517, %519 : vector<8x128xf32>
    %cst_87 = arith.constant 0.000000e+00 : f32
    %521 = vector.broadcast %cst_87 : f32 to vector<8x128xf32>
    %522 = arith.maximumf %520, %521 : vector<8x128xf32>
    %c0_88 = arith.constant 0 : index
    %c0_89 = arith.constant 0 : index
    %523 = vector.load %arg9[%c0_88, %c0_89] : memref<128x128xf32, #tpu.memory_space<vmem>>, vector<128x128xf32>
    %cst_90 = arith.constant dense<0.000000e+00> : vector<8x128xf32>
    %524 = tpu.matmul %522, %523, %cst_90 {dimension_numbers = #tpu.dot_dimension_numbers<[1], [0], [0], [1], [0, 0, 1, 1], [], []>} : vector<8x128xf32>, vector<128x128xf32>, vector<8x128xf32> -> vector<8x128xf32>
    %c0_91 = arith.constant 0 : index
    %c0_92 = arith.constant 0 : index
    %525 = vector.load %arg10[%c0_91, %c0_92] : memref<1x128xf32, #tpu.memory_space<vmem>>, vector<1x128xf32>
    %526 = vector.broadcast %525 : vector<1x128xf32> to vector<8x128xf32>
    %527 = arith.addf %524, %526 : vector<8x128xf32>
    %cst_93 = arith.constant 0.000000e+00 : f32
    %528 = vector.broadcast %cst_93 : f32 to vector<8x128xf32>
    %529 = arith.maximumf %527, %528 : vector<8x128xf32>
    %c0_94 = arith.constant 0 : index
    %c0_95 = arith.constant 0 : index
    %530 = vector.load %arg11[%c0_94, %c0_95] : memref<128x4xf32, #tpu.memory_space<vmem>>, vector<128x4xf32>
    %cst_96 = arith.constant dense<0.000000e+00> : vector<8x4xf32>
    %531 = tpu.matmul %529, %530, %cst_96 {dimension_numbers = #tpu.dot_dimension_numbers<[1], [0], [0], [1], [0, 0, 1, 1], [], []>} : vector<8x128xf32>, vector<128x4xf32>, vector<8x4xf32> -> vector<8x4xf32>
    %c0_97 = arith.constant 0 : index
    %c0_98 = arith.constant 0 : index
    %532 = vector.load %arg12[%c0_97, %c0_98] : memref<1x4xf32, #tpu.memory_space<vmem>>, vector<1x4xf32>
    %533 = vector.broadcast %532 : vector<1x4xf32> to vector<8x4xf32>
    %534 = arith.addf %531, %533 : vector<8x4xf32>
    %535 = vector.extract_strided_slice %534 {offsets = [0, 0], sizes = [2, 4], strides = [1, 1]} : vector<8x4xf32> to vector<2x4xf32>
    %c0_99 = arith.constant 0 : index
    %c0_100 = arith.constant 0 : index
    %536 = vector.load %arg13[%c0_99, %c0_100] : memref<2x4xf32, #tpu.memory_space<vmem>>, vector<2x4xf32>
    tpu.vector_store %arg13[%c0_99, %c0_100], %535 {strides = array<i32>} : memref<2x4xf32, #tpu.memory_space<vmem>>, vector<2x4xf32>,
    return
  }
}

</mosaic_0001>

<llo_original>
// kernel: twin_rnn_classifier.1
$region0: #{twin_rnn_classifier.1}
  #allocation0 [shape = 'u32[]', space=smem, size = 0x4, offset = 0x4, fixed_abs, tag = 'smem constant byte address 0x4 - core index']
  #allocation1 [shape = 'u32[144,128]{1,0:T(1,128)}', space=vmem, size = 0x12000, scoped, tag = 'internal scratch']
  %s0 = inlined_call_operand.vmem [shape: f32[64,32], index: 0, kind: input, shape index: {}]
  %s1 = inlined_call_operand.vmem [shape: f32[32,512], index: 1, kind: input, shape index: {}]
  %s2 = inlined_call_operand.vmem [shape: f32[1,512], index: 2, kind: input, shape index: {}]
  %s3 = inlined_call_operand.hbm [shape: f32[128,512], index: 3, kind: input, shape index: {}]
  %s4 = inlined_call_operand.hbm [shape: f32[128,512], index: 4, kind: input, shape index: {}]
  %s5 = inlined_call_operand.vmem [shape: f32[1,512], index: 5, kind: input, shape index: {}]
  %s6 = inlined_call_operand.hbm [shape: f32[128,512], index: 6, kind: input, shape index: {}]
  %s7 = inlined_call_operand.vmem [shape: f32[128,128], index: 7, kind: input, shape index: {}]
  %s8 = inlined_call_operand.vmem [shape: f32[1,128], index: 8, kind: input, shape index: {}]
  %s9 = inlined_call_operand.hbm [shape: f32[128,128], index: 9, kind: input, shape index: {}]
  %s10 = inlined_call_operand.vmem [shape: f32[1,128], index: 10, kind: input, shape index: {}]
  %s11 = inlined_call_operand.vmem [shape: f32[128,4], index: 11, kind: input, shape index: {}]
  %s12 = inlined_call_operand.vmem [shape: f32[1,4], index: 12, kind: input, shape index: {}]
  %s13 = inlined_call_operand.hbm [shape: f32[2,4], index: 13, kind: output, shape index: {}]
  %s14 = sld [smem:[#allocation0]]
  $region78: #{twin_rnn_classifier.1} parent=0
    _
  %s16 = ssub.s32 1, %s14
  %s17 = scalar_select 0, %s16, %s14
  $region1: #{twin_rnn_classifier.1} parent=0
    #allocation2 [shape = 'u8[262144]{0}', space=vmem, size = 0x40000, scoped, tag = 'input window, operand 3, single buffered']
    #allocation3 [shape = 's32[1]{0}', space=sflag, size = 0x4, scoped, tag = 'scoped memory for twin_rnn_classifier.1']
    #allocation4 [shape = 's32[1]{0}', space=sflag, size = 0x4, scoped, tag = 'scoped memory for twin_rnn_classifier.1']
    #allocation5 [shape = 'u8[262144]{0}', space=vmem, size = 0x40000, scoped, tag = 'input window, operand 4, single buffered']
    #allocation6 [shape = 's32[1]{0}', space=sflag, size = 0x4, scoped, tag = 'scoped memory for twin_rnn_classifier.1']
    #allocation7 [shape = 'u8[262144]{0}', space=vmem, size = 0x40000, scoped, tag = 'input window, operand 6, single buffered']
    #allocation8 [shape = 'u8[65536]{0}', space=vmem, size = 0x10000, scoped, tag = 'input window, operand 9, single buffered']
    #allocation9 [shape = 's32[1]{0}', space=sflag, size = 0x4, scoped, tag = 'scoped memory for twin_rnn_classifier.1']
    #allocation10 [shape = 'u8[1024]{0}', space=vmem, size = 0x400, scoped, tag = 'output window, operand 0, single buffered']
    %18 = vsyncpa [#allocation3], 0
    %19 = vsyncpa [#allocation6], 0
    %20 = vsyncpa [#allocation9], 0
    %21 = vsyncpa [#allocation4], 0
    // Predicated region
    $region2: #{twin_rnn_classifier.1} parent=1 // pred_check
      _
    $region3: #{twin_rnn_classifier.1} parent=1 // pred_check_branch
      %23 = sbr.rel (0) target = $region5
    $region4: #{twin_rnn_classifier.1} parent=1 // pred_region
      _
    $region5: #{twin_rnn_classifier.1} parent=1 // pred_fallthru
      _
    // Predicated region
    $region6: #{twin_rnn_classifier.1} parent=1 // pred_check
      _
    $region7: #{twin_rnn_classifier.1} parent=1 // pred_check_branch
      %25 = sbr.rel (0) target = $region9
    $region8: #{twin_rnn_classifier.1} parent=1 // pred_region
      _
    $region9: #{twin_rnn_classifier.1} parent=1 // pred_fallthru
      _
    // Predicated region
    $region10: #{twin_rnn_classifier.1} parent=1 // pred_check
      _
    $region11: #{twin_rnn_classifier.1} parent=1 // pred_check_branch
      %27 = sbr.rel (0) target = $region13
    $region12: #{twin_rnn_classifier.1} parent=1 // pred_region
      _
    $region13: #{twin_rnn_classifier.1} parent=1 // pred_fallthru
      _
    // Predicated region
    $region14: #{twin_rnn_classifier.1} parent=1 // pred_check
      _
    $region15: #{twin_rnn_classifier.1} parent=1 // pred_check_branch
      %29 = sbr.rel (0) target = $region17
    $region16: #{twin_rnn_classifier.1} parent=1 // pred_region
      %s31 = ssub.s32 8192, 8192
      %32 = vsyncadd [#allocation3], %s31
      %s33 = sshll.u32 [#allocation2], 4
      %s34 = int_to_ptr.vmem [resolvable:$true] %s33
      %39 = dma.hbm_to_vmem [thread:$0]  %s3, 8192, %s34, [#allocation3], 512, 512, 32
    $region17: #{twin_rnn_classifier.1} parent=1 // pred_fallthru
      _
    // Predicated region
    $region18: #{twin_rnn_classifier.1} parent=1 // pred_check
      _
    $region19: #{twin_rnn_classifier.1} parent=1 // pred_check_branch
      %41 = sbr.rel (0) target = $region21
    $region20: #{twin_rnn_classifier.1} parent=1 // pred_region
      %s43 = ssub.s32 8192, 8192
      %44 = vsyncadd [#allocation6], %s43
      %s45 = sshll.u32 [#allocation5], 4
      %s46 = int_to_ptr.vmem [resolvable:$true] %s45
      %51 = dma.hbm_to_vmem [thread:$0]  %s4, 8192, %s46, [#allocation6], 512, 512, 32
    $region21: #{twin_rnn_classifier.1} parent=1 // pred_fallthru
      _
    // Predicated region
    $region22: #{twin_rnn_classifier.1} parent=1 // pred_check
      _
    $region23: #{twin_rnn_classifier.1} parent=1 // pred_check_branch
      %53 = sbr.rel (0) target = $region25
    $region24: #{twin_rnn_classifier.1} parent=1 // pred_region
      _
    $region25: #{twin_rnn_classifier.1} parent=1 // pred_fallthru
      _
    // Predicated region
    $region26: #{twin_rnn_classifier.1} parent=1 // pred_check
      _
    $region27: #{twin_rnn_classifier.1} parent=1 // pred_check_branch
      %55 = sbr.rel (0) target = $region29
    $region28: #{twin_rnn_classifier.1} parent=1 // pred_region
      %s57 = ssub.s32 8192, 8192
      %58 = vsyncadd [#allocation6], %s57
      %s59 = sshll.u32 [#allocation7], 4
      %s60 = int_to_ptr.vmem [resolvable:$true] %s59
      %65 = dma.hbm_to_vmem [thread:$0]  %s6, 8192, %s60, [#allocation6], 512, 512, 32
    $region29: #{twin_rnn_classifier.1} parent=1 // pred_fallthru
      _
    // Predicated region
    $region30: #{twin_rnn_classifier.1} parent=1 // pred_check
      _
    $region31: #{twin_rnn_classifier.1} parent=1 // pred_check_branch
      %67 = sbr.rel (0) target = $region33
    $region32: #{twin_rnn_classifier.1} parent=1 // pred_region
      _
    $region33: #{twin_rnn_classifier.1} parent=1 // pred_fallthru
      _
    // Predicated region
    $region34: #{twin_rnn_classifier.1} parent=1 // pred_check
      _
    $region35: #{twin_rnn_classifier.1} parent=1 // pred_check_branch
      %69 = sbr.rel (0) target = $region37
    $region36: #{twin_rnn_classifier.1} parent=1 // pred_region
      _
    $region37: #{twin_rnn_classifier.1} parent=1 // pred_fallthru
      _
    // Predicated region
    $region38: #{twin_rnn_classifier.1} parent=1 // pred_check
      _
    $region39: #{twin_rnn_classifier.1} parent=1 // pred_check_branch
      %71 = sbr.rel (0) target = $region41
    $region40: #{twin_rnn_classifier.1} parent=1 // pred_region
      %s73 = ssub.s32 2048, 2048
      %74 = vsyncadd [#allocation9], %s73
      %s75 = sshll.u32 [#allocation8], 4
      %s76 = int_to_ptr.vmem [resolvable:$true] %s75
      %81 = dma.hbm_to_vmem [thread:$0]  %s9, 2048, %s76, [#allocation9], 128, 128, 8
    $region41: #{twin_rnn_classifier.1} parent=1 // pred_fallthru
      _
    // Predicated region
    $region42: #{twin_rnn_classifier.1} parent=1 // pred_check
      _
    $region43: #{twin_rnn_classifier.1} parent=1 // pred_check_branch
      %83 = sbr.rel (0) target = $region45
    $region44: #{twin_rnn_classifier.1} parent=1 // pred_region
      _
    $region45: #{twin_rnn_classifier.1} parent=1 // pred_fallthru
      _
    // Predicated region
    $region46: #{twin_rnn_classifier.1} parent=1 // pred_check
      _
    $region47: #{twin_rnn_classifier.1} parent=1 // pred_check_branch
      %85 = sbr.rel (0) target = $region49
    $region48: #{twin_rnn_classifier.1} parent=1 // pred_region
      _
    $region49: #{twin_rnn_classifier.1} parent=1 // pred_fallthru
      _
    // Predicated region
    $region50: #{twin_rnn_classifier.1} parent=1 // pred_check
      _
    $region51: #{twin_rnn_classifier.1} parent=1 // pred_check_branch
      %87 = sbr.rel (0) target = $region53
    $region52: #{twin_rnn_classifier.1} parent=1 // pred_region
      _
    $region53: #{twin_rnn_classifier.1} parent=1 // pred_fallthru
      _
    // Predicated region
    $region54: #{twin_rnn_classifier.1} parent=1 // pred_check
      _
    $region55: #{twin_rnn_classifier.1} parent=1 // pred_check_branch
      %89 = sbr.rel (0) target = $region57
    $region56: #{twin_rnn_classifier.1} parent=1 // pred_region
      %90 = dma.done [#allocation3], 8192
    $region57: #{twin_rnn_classifier.1} parent=1 // pred_fallthru
      _
    // Predicated region
    $region58: #{twin_rnn_classifier.1} parent=1 // pred_check
      _
    $region59: #{twin_rnn_classifier.1} parent=1 // pred_check_branch
      %92 = sbr.rel (0) target = $region61
    $region60: #{twin_rnn_classifier.1} parent=1 // pred_region
      %93 = dma.done [#allocation6], 8192
    $region61: #{twin_rnn_classifier.1} parent=1 // pred_fallthru
      _
    // Predicated region
    $region62: #{twin_rnn_classifier.1} parent=1 // pred_check
      _
    $region63: #{twin_rnn_classifier.1} parent=1 // pred_check_branch
      %95 = sbr.rel (0) target = $region65
    $region64: #{twin_rnn_classifier.1} parent=1 // pred_region
      %96 = dma.done [#allocation6], 8192
    $region65: #{twin_rnn_classifier.1} parent=1 // pred_fallthru
      _
    // Predicated region
    $region66: #{twin_rnn_classifier.1} parent=1 // pred_check
      _
    $region67: #{twin_rnn_classifier.1} parent=1 // pred_check_branch
      %98 = sbr.rel (0) target = $region69
    $region68: #{twin_rnn_classifier.1} parent=1 // pred_region
      %99 = dma.done [#allocation9], 2048
    $region69: #{twin_rnn_classifier.1} parent=1 // pred_fallthru
      _
    %v100 = vlaneseq
    %v101 = vand.u32 %v100, 127
    %vm102 = vcmp.lt.s32.totalorder %v101, 32
    %vm103 = vcmp.ge.s32.totalorder %v101, 64
    %vm104 = vcmp.lt.s32.totalorder %v101, 96
    %vm105 = vmand %vm103, %vm104
    %vm106 = vmor %vm102, %vm105
    %v107 = vld [vmem:[%s0] sm:$0xff]
    %v108 = vld [vmem:[%s0 + $0x8] sm:$0xff]
    %v109 = vld [vmem:[%s0 + $0x10] sm:$0xff]
    %v110 = vld [vmem:[%s0 + $0x18] sm:$0xff]
    %v111 = vld [vmem:[%s0 + $0x20] sm:$0xff]
    %v112 = vld [vmem:[%s0 + $0x28] sm:$0xff]
    %v113 = vld [vmem:[%s0 + $0x30] sm:$0xff]
    %v114 = vld [vmem:[%s0 + $0x38] sm:$0xff]
    %v115 = vld [vmem:[%s1] sm:$0xff]
    %v116 = vld [vmem:[%s1 + $0x8] sm:$0xff]
    %v117 = vld [vmem:[%s1 + $0x10] sm:$0xff]
    %v118 = vld [vmem:[%s1 + $0x18] sm:$0xff]
    %v119 = vld [vmem:[%s1 + $0x20] sm:$0xff]
    %v120 = vld [vmem:[%s1 + $0x28] sm:$0xff]
    %v121 = vld [vmem:[%s1 + $0x30] sm:$0xff]
    %v122 = vld [vmem:[%s1 + $0x38] sm:$0xff]
    %v123 = vld [vmem:[%s1 + $0x40] sm:$0xff]
    %v124 = vld [vmem:[%s1 + $0x48] sm:$0xff]
    %v125 = vld [vmem:[%s1 + $0x50] sm:$0xff]
    %v126 = vld [vmem:[%s1 + $0x58] sm:$0xff]
    %v127 = vld [vmem:[%s1 + $0x60] sm:$0xff]
    %v128 = vld [vmem:[%s1 + $0x68] sm:$0xff]
    %v129 = vld [vmem:[%s1 + $0x70] sm:$0xff]
    %v130 = vld [vmem:[%s1 + $0x78] sm:$0xff]
    %v131 = vld [vmem:[%s2] sm:$0xf]
    %v133 = vlaneseq
    %v134 = vshrl.u32 %v133, 7
    %v135 = vsub.s32 0, %v134
    %v136 = vrot.slane %v131, %v135
    %v137 = vlaneseq
    %v138 = vshrl.u32 %v137, 7
    %v139 = vsub.s32 1, %v138
    %v140 = vrot.slane %v131, %v139
    %v141 = vlaneseq
    %v142 = vshrl.u32 %v141, 7
    %v143 = vsub.s32 2, %v142
    %v144 = vrot.slane %v131, %v143
    %v145 = vlaneseq
    %v146 = vshrl.u32 %v145, 7
    %v147 = vsub.s32 3, %v146
    %v148 = vrot.slane %v131, %v147
    %vm153 = vcmask 261120
    %v155 = vsel %vm153, %v107, 0
    %v158 = vsel %vm153, %v108, 0
    %v161 = vsel %vm153, %v109, 0
    %v164 = vsel %vm153, %v110, 0
    %v167 = vsel %vm153, %v111, 0
    %v170 = vsel %vm153, %v112, 0
    %v173 = vsel %vm153, %v113, 0
    %v176 = vsel %vm153, %v114, 0
    %178 = vmatprep.subr.mxu0 %v116
    %179 = vmatpush1.msra.mxu0 %v115
    %180 = vmatprep.subr.mxu0 %v120
    %181 = vmatpush1.msra.mxu0 %v119
    %182 = vmatprep.subr.mxu0 %v124
    %183 = vmatpush1.msra.mxu0 %v123
    %184 = vmatprep.subr.mxu0 %v128
    %185 = vmatpush1.msra.mxu0 %v127
    %186 = vmatprep.subr.mxu0 0.0
    %187 = vmatpush1.msra.mxu0 0.0
    %188 = vmatprep.subr.mxu0 0.0
    %189 = vmatpush1.msra.mxu0 0.0
    %190 = vmatprep.subr.mxu0 0.0
    %191 = vmatpush1.msra.mxu0 0.0
    %192 = vmatprep.subr.mxu0 0.0
    %193 = vmatpush1.msra.mxu0 0.0
    %194 = vmatprep.subr.mxu0 0.0
    %195 = vmatpush1.msra.mxu0 0.0
    %196 = vmatprep.subr.mxu0 0.0
    %197 = vmatpush1.msra.mxu0 0.0
    %198 = vmatprep.subr.mxu0 0.0
    %199 = vmatpush1.msra.mxu0 0.0
    %200 = vmatprep.subr.mxu0 0.0
    %201 = vmatpush1.msra.mxu0 0.0
    %202 = vmatprep.subr.mxu0 0.0
    %203 = vmatpush1.msra.mxu0 0.0
    %204 = vmatprep.subr.mxu0 0.0
    %205 = vmatpush1.msra.mxu0 0.0
    %206 = vmatprep.subr.mxu0 0.0
    %207 = vmatpush1.msra.mxu0 0.0
    %208 = vmatprep.subr.mxu0 0.0
    %209 = vmatpush1.msra.mxu0 0.0
    %210 = vmatprep.subr.mxu0 0.0
    %211 = vmatpush1.msra.mxu0 0.0
    %212 = vmatprep.subr.mxu0 0.0
    %213 = vmatpush1.msra.mxu0 0.0
    %214 = vmatprep.subr.mxu0 0.0
    %215 = vmatpush1.msra.mxu0 0.0
    %216 = vmatprep.subr.mxu0 0.0
    %217 = vmatpush1.msra.mxu0 0.0
    %218 = vmatprep.subr.mxu0 0.0
    %219 = vmatpush1.msra.mxu0 0.0
    %220 = vmatprep.subr.mxu0 0.0
    %221 = vmatpush1.msra.mxu0 0.0
    %222 = vmatprep.subr.mxu0 0.0
    %223 = vmatpush1.msra.mxu0 0.0
    %224 = vmatprep.subr.mxu0 0.0
    %225 = vmatpush1.msra.mxu0 0.0
    %226 = vmatprep.subr.mxu0 0.0
    %227 = vmatpush1.msra.mxu0 0.0
    %228 = vmatprep.subr.mxu0 0.0
    %229 = vmatpush1.msra.mxu0 0.0
    %230 = vmatprep.subr.mxu0 0.0
    %231 = vmatpush1.msra.mxu0 0.0
    %232 = vmatprep.subr.mxu0 0.0
    %233 = vmatpush1.msra.mxu0 0.0
    %234 = vmatprep.subr.mxu0 0.0
    %235 = vmatpush1.msra.mxu0 0.0
    %236 = vmatprep.subr.mxu0 0.0
    %237 = vmatpush1.msra.mxu0 0.0
    %238 = vmatprep.subr.mxu0 0.0
    %239 = vmatpush1.msra.mxu0 0.0
    %240 = vmatprep.subr.mxu0 0.0
    %241 = vmatpush1.msra.mxu0 0.0
    %242 = vmatprep.mubr.f32.mxu0 0.0
    %243 = vmatmul.mubr.f32.gmra.mrb[0].mxu0 %v155
    %v244 = vpop.f32.mrb[0].mxu0
    %v245 = vadd.f32 %v136, %v244
    %v246 = vpop.f32.mrb[0].mxu0
    %v247 = vadd.f32 %v140, %v246
    %248 = vmatprep.mubr.f32.mxu0 0.0
    %249 = vmatmul.mubr.f32.gmra.mrb[0].mxu0 %v158
    %v250 = vpop.f32.mrb[0].mxu0
    %v251 = vadd.f32 %v136, %v250
    %v252 = vpop.f32.mrb[0].mxu0
    %v253 = vadd.f32 %v140, %v252
    %254 = vmatprep.mubr.f32.mxu0 0.0
    %255 = vmatmul.mubr.f32.gmra.mrb[0].mxu0 %v161
    %v256 = vpop.f32.mrb[0].mxu0
    %v257 = vadd.f32 %v136, %v256
    %v258 = vpop.f32.mrb[0].mxu0
    %v259 = vadd.f32 %v140, %v258
    %260 = vmatprep.mubr.f32.mxu0 0.0
    %261 = vmatmul.mubr.f32.gmra.mrb[0].mxu0 %v164
    %v262 = vpop.f32.mrb[0].mxu0
    %v263 = vadd.f32 %v136, %v262
    %v264 = vpop.f32.mrb[0].mxu0
    %v265 = vadd.f32 %v140, %v264
    %266 = vmatprep.mubr.f32.mxu0 0.0
    %267 = vmatmul.mubr.f32.gmra.mrb[0].mxu0 %v167
    %v268 = vpop.f32.mrb[0].mxu0
    %v269 = vadd.f32 %v136, %v268
    %v270 = vpop.f32.mrb[0].mxu0
    %v271 = vadd.f32 %v140, %v270
    %272 = vmatprep.mubr.f32.mxu0 0.0
    %273 = vmatmul.mubr.f32.gmra.mrb[0].mxu0 %v170
    %v274 = vpop.f32.mrb[0].mxu0
    %v275 = vadd.f32 %v136, %v274
    %v276 = vpop.f32.mrb[0].mxu0
    %v277 = vadd.f32 %v140, %v276
    %278 = vmatprep.mubr.f32.mxu0 0.0
    %279 = vmatmul.mubr.f32.gmra.mrb[0].mxu0 %v173
    %v280 = vpop.f32.mrb[0].mxu0
    %v281 = vadd.f32 %v136, %v280
    %v282 = vpop.f32.mrb[0].mxu0
    %v283 = vadd.f32 %v140, %v282
    %284 = vmatprep.mubr.f32.mxu0 0.0
    %285 = vmatmul.mubr.f32.gmra.mrb[0].mxu0 %v176
    %v286 = vpop.f32.mrb[0].mxu0
    %v287 = vadd.f32 %v136, %v286
    %v288 = vpop.f32.mrb[0].mxu0
    %v289 = vadd.f32 %v140, %v288
    %290 = vdwg.mxu0
    %291 = vmatprep.subr.mxu0 %v118
    %292 = vmatpush1.msra.mxu0 %v117
    %293 = vmatprep.subr.mxu0 %v122
    %294 = vmatpush1.msra.mxu0 %v121
    %295 = vmatprep.subr.mxu0 %v126
    %296 = vmatpush1.msra.mxu0 %v125
    %297 = vmatprep.subr.mxu0 %v130
    %298 = vmatpush1.msra.mxu0 %v129
    %299 = vmatprep.subr.mxu0 0.0
    %300 = vmatpush1.msra.mxu0 0.0
    %301 = vmatprep.subr.mxu0 0.0
    %302 = vmatpush1.msra.mxu0 0.0
    %303 = vmatprep.subr.mxu0 0.0
    %304 = vmatpush1.msra.mxu0 0.0
    %305 = vmatprep.subr.mxu0 0.0
    %306 = vmatpush1.msra.mxu0 0.0
    %307 = vmatprep.subr.mxu0 0.0
    %308 = vmatpush1.msra.mxu0 0.0
    %309 = vmatprep.subr.mxu0 0.0
    %310 = vmatpush1.msra.mxu0 0.0
    %311 = vmatprep.subr.mxu0 0.0
    %312 = vmatpush1.msra.mxu0 0.0
    %313 = vmatprep.subr.mxu0 0.0
    %314 = vmatpush1.msra.mxu0 0.0
    %315 = vmatprep.subr.mxu0 0.0
    %316 = vmatpush1.msra.mxu0 0.0
    %317 = vmatprep.subr.mxu0 0.0
    %318 = vmatpush1.msra.mxu0 0.0
    %319 = vmatprep.subr.mxu0 0.0
    %320 = vmatpush1.msra.mxu0 0.0
    %321 = vmatprep.subr.mxu0 0.0
    %322 = vmatpush1.msra.mxu0 0.0
    %323 = vmatprep.subr.mxu0 0.0
    %324 = vmatpush1.msra.mxu0 0.0
    %325 = vmatprep.subr.mxu0 0.0
    %326 = vmatpush1.msra.mxu0 0.0
    %327 = vmatprep.subr.mxu0 0.0
    %328 = vmatpush1.msra.mxu0 0.0
    %329 = vmatprep.subr.mxu0 0.0
    %330 = vmatpush1.msra.mxu0 0.0
    %331 = vmatprep.subr.mxu0 0.0
    %332 = vmatpush1.msra.mxu0 0.0
    %333 = vmatprep.subr.mxu0 0.0
    %334 = vmatpush1.msra.mxu0 0.0
    %335 = vmatprep.subr.mxu0 0.0
    %336 = vmatpush1.msra.mxu0 0.0
    %337 = vmatprep.subr.mxu0 0.0
    %338 = vmatpush1.msra.mxu0 0.0
    %339 = vmatprep.subr.mxu0 0.0
    %340 = vmatpush1.msra.mxu0 0.0
    %341 = vmatprep.subr.mxu0 0.0
    %342 = vmatpush1.msra.mxu0 0.0
    %343 = vmatprep.subr.mxu0 0.0
    %344 = vmatpush1.msra.mxu0 0.0
    %345 = vmatprep.subr.mxu0 0.0
    %346 = vmatpush1.msra.mxu0 0.0
    %347 = vmatprep.subr.mxu0 0.0
    %348 = vmatpush1.msra.mxu0 0.0
    %349 = vmatprep.subr.mxu0 0.0
    %350 = vmatpush1.msra.mxu0 0.0
    %351 = vmatprep.subr.mxu0 0.0
    %352 = vmatpush1.msra.mxu0 0.0
    %353 = vmatprep.subr.mxu0 0.0
    %354 = vmatpush1.msra.mxu0 0.0
    %355 = vmatprep.mubr.f32.mxu0 0.0
    %356 = vmatmul.mubr.f32.gmra.mrb[0].mxu0 %v155
    %v357 = vpop.f32.mrb[0].mxu0
    %v358 = vadd.f32 %v144, %v357
    %v359 = vpop.f32.mrb[0].mxu0
    %v360 = vadd.f32 %v148, %v359
    %361 = vmatprep.mubr.f32.mxu0 0.0
    %362 = vmatmul.mubr.f32.gmra.mrb[0].mxu0 %v158
    %v363 = vpop.f32.mrb[0].mxu0
    %v364 = vadd.f32 %v144, %v363
    %v365 = vpop.f32.mrb[0].mxu0
    %v366 = vadd.f32 %v148, %v365
    %367 = vmatprep.mubr.f32.mxu0 0.0
    %368 = vmatmul.mubr.f32.gmra.mrb[0].mxu0 %v161
    %v369 = vpop.f32.mrb[0].mxu0
    %v370 = vadd.f32 %v144, %v369
    %v371 = vpop.f32.mrb[0].mxu0
    %v372 = vadd.f32 %v148, %v371
    %373 = vmatprep.mubr.f32.mxu0 0.0
    %374 = vmatmul.mubr.f32.gmra.mrb[0].mxu0 %v164
    %v375 = vpop.f32.mrb[0].mxu0
    %v376 = vadd.f32 %v144, %v375
    %v377 = vpop.f32.mrb[0].mxu0
    %v378 = vadd.f32 %v148, %v377
    %379 = vmatprep.mubr.f32.mxu0 0.0
    %380 = vmatmul.mubr.f32.gmra.mrb[0].mxu0 %v167
    %v381 = vpop.f32.mrb[0].mxu0
    %v382 = vadd.f32 %v144, %v381
    %v383 = vpop.f32.mrb[0].mxu0
    %v384 = vadd.f32 %v148, %v383
    %385 = vmatprep.mubr.f32.mxu0 0.0
    %386 = vmatmul.mubr.f32.gmra.mrb[0].mxu0 %v170
    %v387 = vpop.f32.mrb[0].mxu0
    %v388 = vadd.f32 %v144, %v387
    %v389 = vpop.f32.mrb[0].mxu0
    %v390 = vadd.f32 %v148, %v389
    %391 = vmatprep.mubr.f32.mxu0 0.0
    %392 = vmatmul.mubr.f32.gmra.mrb[0].mxu0 %v173
    %v393 = vpop.f32.mrb[0].mxu0
    %v394 = vadd.f32 %v144, %v393
    %v395 = vpop.f32.mrb[0].mxu0
    %v396 = vadd.f32 %v148, %v395
    %397 = vmatprep.mubr.f32.mxu0 0.0
    %398 = vmatmul.mubr.f32.gmra.mrb[0].mxu0 %v176
    %v399 = vpop.f32.mrb[0].mxu0
    %v400 = vadd.f32 %v144, %v399
    %v401 = vpop.f32.mrb[0].mxu0
    %v402 = vadd.f32 %v148, %v401
    %403 = vdwg.mxu0
    %v404 = vld [vmem:[#allocation2] sm:$0xff]
    %v405 = vld [vmem:[#allocation2 + $0x8] sm:$0xff]
    %v406 = vld [vmem:[#allocation2 + $0x10] sm:$0xff]
    %v407 = vld [vmem:[#allocation2 + $0x18] sm:$0xff]
    %v408 = vld [vmem:[#allocation2 + $0x20] sm:$0xff]
    %v409 = vld [vmem:[#allocation2 + $0x28] sm:$0xff]
    %v410 = vld [vmem:[#allocation2 + $0x30] sm:$0xff]
    %v411 = vld [vmem:[#allocation2 + $0x38] sm:$0xff]
    %v412 = vld [vmem:[#allocation2 + $0x40] sm:$0xff]
    %v413 = vld [vmem:[#allocation2 + $0x48] sm:$0xff]
    %v414 = vld [vmem:[#allocation2 + $0x50] sm:$0xff]
    %v415 = vld [vmem:[#allocation2 + $0x58] sm:$0xff]
    %v416 = vld [vmem:[#allocation2 + $0x60] sm:$0xff]
    %v417 = vld [vmem:[#allocation2 + $0x68] sm:$0xff]
    %v418 = vld [vmem:[#allocation2 + $0x70] sm:$0xff]
    %v419 = vld [vmem:[#allocation2 + $0x78] sm:$0xff]
    %v420 = vld [vmem:[#allocation2 + $0x80] sm:$0xff]
    %v421 = vld [vmem:[#allocation2 + $0x88] sm:$0xff]
    %v422 = vld [vmem:[#allocation2 + $0x90] sm:$0xff]
    %v423 = vld [vmem:[#allocation2 + $0x98] sm:$0xff]
    %v424 = vld [vmem:[#allocation2 + $0xa0] sm:$0xff]
    %v425 = vld [vmem:[#allocation2 + $0xa8] sm:$0xff]
    %v426 = vld [vmem:[#allocation2 + $0xb0] sm:$0xff]
    %v427 = vld [vmem:[#allocation2 + $0xb8] sm:$0xff]
    %v428 = vld [vmem:[#allocation2 + $0xc0] sm:$0xff]
    %v429 = vld [vmem:[#allocation2 + $0xc8] sm:$0xff]
    %v430 = vld [vmem:[#allocation2 + $0xd0] sm:$0xff]
    %v431 = vld [vmem:[#allocation2 + $0xd8] sm:$0xff]
    %v432 = vld [vmem:[#allocation2 + $0xe0] sm:$0xff]
    %v433 = vld [vmem:[#allocation2 + $0xe8] sm:$0xff]
    %v434 = vld [vmem:[#allocation2 + $0xf0] sm:$0xff]
    %v435 = vld [vmem:[#allocation2 + $0xf8] sm:$0xff]
    %v436 = vld [vmem:[#allocation2 + $0x100] sm:$0xff]
    %v437 = vld [vmem:[#allocation2 + $0x108] sm:$0xff]
    %v438 = vld [vmem:[#allocation2 + $0x110] sm:$0xff]
    %v439 = vld [vmem:[#allocation2 + $0x118] sm:$0xff]
    %v440 = vld [vmem:[#allocation2 + $0x120] sm:$0xff]
    %v441 = vld [vmem:[#allocation2 + $0x128] sm:$0xff]
    %v442 = vld [vmem:[#allocation2 + $0x130] sm:$0xff]
    %v443 = vld [vmem:[#allocation2 + $0x138] sm:$0xff]
    %v444 = vld [vmem:[#allocation2 + $0x140] sm:$0xff]
    %v445 = vld [vmem:[#allocation2 + $0x148] sm:$0xff]
    %v446 = vld [vmem:[#allocation2 + $0x150] sm:$0xff]
    %v447 = vld [vmem:[#allocation2 + $0x158] sm:$0xff]
    %v448 = vld [vmem:[#allocation2 + $0x160] sm:$0xff]
    %v449 = vld [vmem:[#allocation2 + $0x168] sm:$0xff]
    %v450 = vld [vmem:[#allocation2 + $0x170] sm:$0xff]
    %v451 = vld [vmem:[#allocation2 + $0x178] sm:$0xff]
    %v452 = vld [vmem:[#allocation2 + $0x180] sm:$0xff]
    %v453 = vld [vmem:[#allocation2 + $0x188] sm:$0xff]
    %v454 = vld [vmem:[#allocation2 + $0x190] sm:$0xff]
    %v455 = vld [vmem:[#allocation2 + $0x198] sm:$0xff]
    %v456 = vld [vmem:[#allocation2 + $0x1a0] sm:$0xff]
    %v457 = vld [vmem:[#allocation2 + $0x1a8] sm:$0xff]
    %v458 = vld [vmem:[#allocation2 + $0x1b0] sm:$0xff]
    %v459 = vld [vmem:[#allocation2 + $0x1b8] sm:$0xff]
    %v460 = vld [vmem:[#allocation2 + $0x1c0] sm:$0xff]
    %v461 = vld [vmem:[#allocation2 + $0x1c8] sm:$0xff]
    %v462 = vld [vmem:[#allocation2 + $0x1d0] sm:$0xff]
    %v463 = vld [vmem:[#allocation2 + $0x1d8] sm:$0xff]
    %v464 = vld [vmem:[#allocation2 + $0x1e0] sm:$0xff]
    %v465 = vld [vmem:[#allocation2 + $0x1e8] sm:$0xff]
    %v466 = vld [vmem:[#allocation2 + $0x1f0] sm:$0xff]
    %v467 = vld [vmem:[#allocation2 + $0x1f8] sm:$0xff]
    %v468 = vsel %vm106, %v245, %v287
    %v469 = vsel %vm106, %v247, %v289
    %v470 = vsel %vm106, %v358, %v400
    %v471 = vsel %vm106, %v360, %v402
    %472 = vmatprep.subr.mxu0 %v405
    %473 = vmatpush1.msra.mxu0 %v404
    %474 = vmatprep.subr.mxu0 %v409
    %475 = vmatpush1.msra.mxu0 %v408
    %476 = vmatprep.subr.mxu0 %v413
    %477 = vmatpush1.msra.mxu0 %v412
    %478 = vmatprep.subr.mxu0 %v417
    %479 = vmatpush1.msra.mxu0 %v416
    %480 = vmatprep.subr.mxu0 %v421
    %481 = vmatpush1.msra.mxu0 %v420
    %482 = vmatprep.subr.mxu0 %v425
    %483 = vmatpush1.msra.mxu0 %v424
    %484 = vmatprep.subr.mxu0 %v429
    %485 = vmatpush1.msra.mxu0 %v428
    %486 = vmatprep.subr.mxu0 %v433
    %487 = vmatpush1.msra.mxu0 %v432
    %488 = vmatprep.subr.mxu0 %v437
    %489 = vmatpush1.msra.mxu0 %v436
    %490 = vmatprep.subr.mxu0 %v441
    %491 = vmatpush1.msra.mxu0 %v440
    %492 = vmatprep.subr.mxu0 %v445
    %493 = vmatpush1.msra.mxu0 %v444
    %494 = vmatprep.subr.mxu0 %v449
    %495 = vmatpush1.msra.mxu0 %v448
    %496 = vmatprep.subr.mxu0 %v453
    %497 = vmatpush1.msra.mxu0 %v452
    %498 = vmatprep.subr.mxu0 %v457
    %499 = vmatpush1.msra.mxu0 %v456
    %500 = vmatprep.subr.mxu0 %v461
    %501 = vmatpush1.msra.mxu0 %v460
    %502 = vmatprep.subr.mxu0 %v465
    %503 = vmatpush1.msra.mxu0 %v464
    %504 = vmatprep.subr.mxu0 0.0
    %505 = vmatpush1.msra.mxu0 0.0
    %506 = vmatprep.subr.mxu0 0.0
    %507 = vmatpush1.msra.mxu0 0.0
    %508 = vmatprep.subr.mxu0 0.0
    %509 = vmatpush1.msra.mxu0 0.0
    %510 = vmatprep.subr.mxu0 0.0
    %511 = vmatpush1.msra.mxu0 0.0
    %512 = vmatprep.subr.mxu0 0.0
    %513 = vmatpush1.msra.mxu0 0.0
    %514 = vmatprep.subr.mxu0 0.0
    %515 = vmatpush1.msra.mxu0 0.0
    %516 = vmatprep.subr.mxu0 0.0
    %517 = vmatpush1.msra.mxu0 0.0
    %518 = vmatprep.subr.mxu0 0.0
    %519 = vmatpush1.msra.mxu0 0.0
    %520 = vmatprep.subr.mxu0 0.0
    %521 = vmatpush1.msra.mxu0 0.0
    %522 = vmatprep.subr.mxu0 0.0
    %523 = vmatpush1.msra.mxu0 0.0
    %524 = vmatprep.subr.mxu0 0.0
    %525 = vmatpush1.msra.mxu0 0.0
    %526 = vmatprep.subr.mxu0 0.0
    %527 = vmatpush1.msra.mxu0 0.0
    %528 = vmatprep.subr.mxu0 0.0
    %529 = vmatpush1.msra.mxu0 0.0
    %530 = vmatprep.subr.mxu0 0.0
    %531 = vmatpush1.msra.mxu0 0.0
    %532 = vmatprep.subr.mxu0 0.0
    %533 = vmatpush1.msra.mxu0 0.0
    %534 = vmatprep.subr.mxu0 0.0
    %535 = vmatpush1.msra.mxu0 0.0
    %536 = vmatprep.mubr.f32.mxu0 0.0
    %537 = vmatmul.mubr.f32.gmra.mrb[0].mxu0 0.0
    %v538 = vpop.f32.mrb[0].mxu0
    %v539 = vadd.f32 0.0, %v538
    %v540 = vpop.f32.mrb[0].mxu0
    %v541 = vadd.f32 0.0, %v540
    %542 = vdwg.mxu0
    %543 = vmatprep.subr.mxu0 %v407
    %544 = vmatpush1.msra.mxu0 %v406
    %545 = vmatprep.subr.mxu0 %v411
    %546 = vmatpush1.msra.mxu0 %v410
    %547 = vmatprep.subr.mxu0 %v415
    %548 = vmatpush1.msra.mxu0 %v414
    %549 = vmatprep.subr.mxu0 %v419
    %550 = vmatpush1.msra.mxu0 %v418
    %551 = vmatprep.subr.mxu0 %v423
    %552 = vmatpush1.msra.mxu0 %v422
    %553 = vmatprep.subr.mxu0 %v427
    %554 = vmatpush1.msra.mxu0 %v426
    %555 = vmatprep.subr.mxu0 %v431
    %556 = vmatpush1.msra.mxu0 %v430
    %557 = vmatprep.subr.mxu0 %v435
    %558 = vmatpush1.msra.mxu0 %v434
    %559 = vmatprep.subr.mxu0 %v439
    %560 = vmatpush1.msra.mxu0 %v438
    %561 = vmatprep.subr.mxu0 %v443
    %562 = vmatpush1.msra.mxu0 %v442
    %563 = vmatprep.subr.mxu0 %v447
    %564 = vmatpush1.msra.mxu0 %v446
    %565 = vmatprep.subr.mxu0 %v451
    %566 = vmatpush1.msra.mxu0 %v450
    %567 = vmatprep.subr.mxu0 %v455
    %568 = vmatpush1.msra.mxu0 %v454
    %569 = vmatprep.subr.mxu0 %v459
    %570 = vmatpush1.msra.mxu0 %v458
    %571 = vmatprep.subr.mxu0 %v463
    %572 = vmatpush1.msra.mxu0 %v462
    %573 = vmatprep.subr.mxu0 %v467
    %574 = vmatpush1.msra.mxu0 %v466
    %575 = vmatprep.subr.mxu0 0.0
    %576 = vmatpush1.msra.mxu0 0.0
    %577 = vmatprep.subr.mxu0 0.0
    %578 = vmatpush1.msra.mxu0 0.0
    %579 = vmatprep.subr.mxu0 0.0
    %580 = vmatpush1.msra.mxu0 0.0
    %581 = vmatprep.subr.mxu0 0.0
    %582 = vmatpush1.msra.mxu0 0.0
    %583 = vmatprep.subr.mxu0 0.0
    %584 = vmatpush1.msra.mxu0 0.0
    %585 = vmatprep.subr.mxu0 0.0
    %586 = vmatpush1.msra.mxu0 0.0
    %587 = vmatprep.subr.mxu0 0.0
    %588 = vmatpush1.msra.mxu0 0.0
    %589 = vmatprep.subr.mxu0 0.0
    %590 = vmatpush1.msra.mxu0 0.0
    %591 = vmatprep.subr.mxu0 0.0
    %592 = vmatpush1.msra.mxu0 0.0
    %593 = vmatprep.subr.mxu0 0.0
    %594 = vmatpush1.msra.mxu0 0.0
    %595 = vmatprep.subr.mxu0 0.0
    %596 = vmatpush1.msra.mxu0 0.0
    %597 = vmatprep.subr.mxu0 0.0
    %598 = vmatpush1.msra.mxu0 0.0
    %599 = vmatprep.subr.mxu0 0.0
    %600 = vmatpush1.msra.mxu0 0.0
    %601 = vmatprep.subr.mxu0 0.0
    %602 = vmatpush1.msra.mxu0 0.0
    %603 = vmatprep.subr.mxu0 0.0
    %604 = vmatpush1.msra.mxu0 0.0
    %605 = vmatprep.subr.mxu0 0.0
    %606 = vmatpush1.msra.mxu0 0.0
    %607 = vmatprep.mubr.f32.mxu0 0.0
    %608 = vmatmul.mubr.f32.gmra.mrb[0].mxu0 0.0
    %v609 = vpop.f32.mrb[0].mxu0
    %v610 = vadd.f32 0.0, %v609
    %v611 = vpop.f32.mrb[0].mxu0
    %v612 = vadd.f32 0.0, %v611
    %613 = vdwg.mxu0
    %v614 = vadd.f32 %v468, %v539
    %v615 = vadd.f32 %v469, %v541
    %v616 = vadd.f32 %v470, %v610
    %v617 = vadd.f32 %v471, %v612
    %v618 = vxor.u32 %v614, 2147483648
    %v619 = vmul.f32 %v618, 1.442695
    %v620 = vpow.pop %v619
    %v621 = vadd.f32 %v620, 1.0
    %v622 = vrcp.pop %v621
    %v623 = vmul.f32 1.0, %v622
    %v624 = vxor.u32 %v615, 2147483648
    %v625 = vmul.f32 %v624, 1.442695
    %v626 = vpow.pop %v625
    %v627 = vadd.f32 %v626, 1.0
    %v628 = vrcp.pop %v627
    %v629 = vmul.f32 1.0, %v628
    %v630 = vtanh.pop %v616
    %v631 = vxor.u32 %v617, 2147483648
    %v632 = vmul.f32 %v631, 1.442695
    %v633 = vpow.pop %v632
    %v634 = vadd.f32 %v633, 1.0
    %v635 = vrcp.pop %v634
    %v636 = vmul.f32 1.0, %v635
    %v637 = vmul.f32 %v629, 0.0
    %v638 = vmul.f32 %v623, %v630
    %v639 = vadd.f32 %v637, %v638
    %v640 = vtanh.pop %v639
    %v641 = vmul.f32 %v636, %v640
    %v642 = vsel %vm106, %v251, %v281
    %v643 = vsel %vm106, %v253, %v283
    %v644 = vsel %vm106, %v364, %v394
    %v645 = vsel %vm106, %v366, %v396
    %646 = vmatprep.subr.mxu0 %v405
    %647 = vmatpush1.msra.mxu0 %v404
    %648 = vmatprep.subr.mxu0 %v409
    %649 = vmatpush1.msra.mxu0 %v408
    %650 = vmatprep.subr.mxu0 %v413
    %651 = vmatpush1.msra.mxu0 %v412
    %652 = vmatprep.subr.mxu0 %v417
    %653 = vmatpush1.msra.mxu0 %v416
    %654 = vmatprep.subr.mxu0 %v421
    %655 = vmatpush1.msra.mxu0 %v420
    %656 = vmatprep.subr.mxu0 %v425
    %657 = vmatpush1.msra.mxu0 %v424
    %658 = vmatprep.subr.mxu0 %v429
    %659 = vmatpush1.msra.mxu0 %v428
    %660 = vmatprep.subr.mxu0 %v433
    %661 = vmatpush1.msra.mxu0 %v432
    %662 = vmatprep.subr.mxu0 %v437
    %663 = vmatpush1.msra.mxu0 %v436
    %664 = vmatprep.subr.mxu0 %v441
    %665 = vmatpush1.msra.mxu0 %v440
    %666 = vmatprep.subr.mxu0 %v445
    %667 = vmatpush1.msra.mxu0 %v444
    %668 = vmatprep.subr.mxu0 %v449
    %669 = vmatpush1.msra.mxu0 %v448
    %670 = vmatprep.subr.mxu0 %v453
    %671 = vmatpush1.msra.mxu0 %v452
    %672 = vmatprep.subr.mxu0 %v457
    %673 = vmatpush1.msra.mxu0 %v456
    %674 = vmatprep.subr.mxu0 %v461
    %675 = vmatpush1.msra.mxu0 %v460
    %676 = vmatprep.subr.mxu0 %v465
    %677 = vmatpush1.msra.mxu0 %v464
    %678 = vmatprep.subr.mxu0 0.0
    %679 = vmatpush1.msra.mxu0 0.0
    %680 = vmatprep.subr.mxu0 0.0
    %681 = vmatpush1.msra.mxu0 0.0
    %682 = vmatprep.subr.mxu0 0.0
    %683 = vmatpush1.msra.mxu0 0.0
    %684 = vmatprep.subr.mxu0 0.0
    %685 = vmatpush1.msra.mxu0 0.0
    %686 = vmatprep.subr.mxu0 0.0
    %687 = vmatpush1.msra.mxu0 0.0
    %688 = vmatprep.subr.mxu0 0.0
    %689 = vmatpush1.msra.mxu0 0.0
    %690 = vmatprep.subr.mxu0 0.0
    %691 = vmatpush1.msra.mxu0 0.0
    %692 = vmatprep.subr.mxu0 0.0
    %693 = vmatpush1.msra.mxu0 0.0
    %694 = vmatprep.subr.mxu0 0.0
    %695 = vmatpush1.msra.mxu0 0.0
    %696 = vmatprep.subr.mxu0 0.0
    %697 = vmatpush1.msra.mxu0 0.0
    %698 = vmatprep.subr.mxu0 0.0
    %699 = vmatpush1.msra.mxu0 0.0
    %700 = vmatprep.subr.mxu0 0.0
    %701 = vmatpush1.msra.mxu0 0.0
    %702 = vmatprep.subr.mxu0 0.0
    %703 = vmatpush1.msra.mxu0 0.0
    %704 = vmatprep.subr.mxu0 0.0
    %705 = vmatpush1.msra.mxu0 0.0
    %706 = vmatprep.subr.mxu0 0.0
    %707 = vmatpush1.msra.mxu0 0.0
    %708 = vmatprep.subr.mxu0 0.0
    %709 = vmatpush1.msra.mxu0 0.0
    %710 = vmatprep.mubr.f32.mxu0 0.0
    %711 = vmatmul.mubr.f32.gmra.mrb[0].mxu0 %v641
    %v712 = vpop.f32.mrb[0].mxu0
    %v713 = vadd.f32 0.0, %v712
    %v714 = vpop.f32.mrb[0].mxu0
    %v715 = vadd.f32 0.0, %v714
    %716 = vdwg.mxu0
    %717 = vmatprep.subr.mxu0 %v407
    %718 = vmatpush1.msra.mxu0 %v406
    %719 = vmatprep.subr.mxu0 %v411
    %720 = vmatpush1.msra.mxu0 %v410
    %721 = vmatprep.subr.mxu0 %v415
    %722 = vmatpush1.msra.mxu0 %v414
    %723 = vmatprep.subr.mxu0 %v419
    %724 = vmatpush1.msra.mxu0 %v418
    %725 = vmatprep.subr.mxu0 %v423
    %726 = vmatpush1.msra.mxu0 %v422
    %727 = vmatprep.subr.mxu0 %v427
    %728 = vmatpush1.msra.mxu0 %v426
    %729 = vmatprep.subr.mxu0 %v431
    %730 = vmatpush1.msra.mxu0 %v430
    %731 = vmatprep.subr.mxu0 %v435
    %732 = vmatpush1.msra.mxu0 %v434
    %733 = vmatprep.subr.mxu0 %v439
    %734 = vmatpush1.msra.mxu0 %v438
    %735 = vmatprep.subr.mxu0 %v443
    %736 = vmatpush1.msra.mxu0 %v442
    %737 = vmatprep.subr.mxu0 %v447
    %738 = vmatpush1.msra.mxu0 %v446
    %739 = vmatprep.subr.mxu0 %v451
    %740 = vmatpush1.msra.mxu0 %v450
    %741 = vmatprep.subr.mxu0 %v455
    %742 = vmatpush1.msra.mxu0 %v454
    %743 = vmatprep.subr.mxu0 %v459
    %744 = vmatpush1.msra.mxu0 %v458
    %745 = vmatprep.subr.mxu0 %v463
    %746 = vmatpush1.msra.mxu0 %v462
    %747 = vmatprep.subr.mxu0 %v467
    %748 = vmatpush1.msra.mxu0 %v466
    %749 = vmatprep.subr.mxu0 0.0
    %750 = vmatpush1.msra.mxu0 0.0
    %751 = vmatprep.subr.mxu0 0.0
    %752 = vmatpush1.msra.mxu0 0.0
    %753 = vmatprep.subr.mxu0 0.0
    %754 = vmatpush1.msra.mxu0 0.0
    %755 = vmatprep.subr.mxu0 0.0
    %756 = vmatpush1.msra.mxu0 0.0
    %757 = vmatprep.subr.mxu0 0.0
    %758 = vmatpush1.msra.mxu0 0.0
    %759 = vmatprep.subr.mxu0 0.0
    %760 = vmatpush1.msra.mxu0 0.0
    %761 = vmatprep.subr.mxu0 0.0
    %762 = vmatpush1.msra.mxu0 0.0
    %763 = vmatprep.subr.mxu0 0.0
    %764 = vmatpush1.msra.mxu0 0.0
    %765 = vmatprep.subr.mxu0 0.0
    %766 = vmatpush1.msra.mxu0 0.0
    %767 = vmatprep.subr.mxu0 0.0
    %768 = vmatpush1.msra.mxu0 0.0
    %769 = vmatprep.subr.mxu0 0.0
    %770 = vmatpush1.msra.mxu0 0.0
    %771 = vmatprep.subr.mxu0 0.0
    %772 = vmatpush1.msra.mxu0 0.0
    %773 = vmatprep.subr.mxu0 0.0
    %774 = vmatpush1.msra.mxu0 0.0
    %775 = vmatprep.subr.mxu0 0.0
    %776 = vmatpush1.msra.mxu0 0.0
    %777 = vmatprep.subr.mxu0 0.0
    %778 = vmatpush1.msra.mxu0 0.0
    %779 = vmatprep.subr.mxu0 0.0
    %780 = vmatpush1.msra.mxu0 0.0
    %781 = vmatprep.mubr.f32.mxu0 0.0
    %782 = vmatmul.mubr.f32.gmra.mrb[0].mxu0 %v641
    %v783 = vpop.f32.mrb[0].mxu0
    %v784 = vadd.f32 0.0, %v783
    %v785 = vpop.f32.mrb[0].mxu0
    %v786 = vadd.f32 0.0, %v785
    %787 = vdwg.mxu0
    %v788 = vadd.f32 %v642, %v713
    %v789 = vadd.f32 %v643, %v715
    %v790 = vadd.f32 %v644, %v784
    %v791 = vadd.f32 %v645, %v786
    %v792 = vxor.u32 %v788, 2147483648
    %v793 = vmul.f32 %v792, 1.442695
    %v794 = vpow.pop %v793
    %v795 = vadd.f32 %v794, 1.0
    %v796 = vrcp.pop %v795
    %v797 = vmul.f32 1.0, %v796
    %v798 = vxor.u32 %v789, 2147483648
    %v799 = vmul.f32 %v798, 1.442695
    %v800 = vpow.pop %v799
    %v801 = vadd.f32 %v800, 1.0
    %v802 = vrcp.pop %v801
    %v803 = vmul.f32 1.0, %v802
    %v804 = vtanh.pop %v790
    %v805 = vxor.u32 %v791, 2147483648
    %v806 = vmul.f32 %v805, 1.442695
    %v807 = vpow.pop %v806
    %v808 = vadd.f32 %v807, 1.0
    %v809 = vrcp.pop %v808
    %v810 = vmul.f32 1.0, %v809
    %v811 = vmul.f32 %v803, %v639
    %v812 = vmul.f32 %v797, %v804
    %v813 = vadd.f32 %v811, %v812
    %v814 = vtanh.pop %v813
    %v815 = vmul.f32 %v810, %v814
    %v816 = vsel %vm106, %v257, %v275
    %v817 = vsel %vm106, %v259, %v277
    %v818 = vsel %vm106, %v370, %v388
    %v819 = vsel %vm106, %v372, %v390
    %820 = vmatprep.subr.mxu0 %v405
    %821 = vmatpush1.msra.mxu0 %v404
    %822 = vmatprep.subr.mxu0 %v409
    %823 = vmatpush1.msra.mxu0 %v408
    %824 = vmatprep.subr.mxu0 %v413
    %825 = vmatpush1.msra.mxu0 %v412
    %826 = vmatprep.subr.mxu0 %v417
    %827 = vmatpush1.msra.mxu0 %v416
    %828 = vmatprep.subr.mxu0 %v421
    %829 = vmatpush1.msra.mxu0 %v420
    %830 = vmatprep.subr.mxu0 %v425
    %831 = vmatpush1.msra.mxu0 %v424
    %832 = vmatprep.subr.mxu0 %v429
    %833 = vmatpush1.msra.mxu0 %v428
    %834 = vmatprep.subr.mxu0 %v433
    %835 = vmatpush1.msra.mxu0 %v432
    %836 = vmatprep.subr.mxu0 %v437
    %837 = vmatpush1.msra.mxu0 %v436
    %838 = vmatprep.subr.mxu0 %v441
    %839 = vmatpush1.msra.mxu0 %v440
    %840 = vmatprep.subr.mxu0 %v445
    %841 = vmatpush1.msra.mxu0 %v444
    %842 = vmatprep.subr.mxu0 %v449
    %843 = vmatpush1.msra.mxu0 %v448
    %844 = vmatprep.subr.mxu0 %v453
    %845 = vmatpush1.msra.mxu0 %v452
    %846 = vmatprep.subr.mxu0 %v457
    %847 = vmatpush1.msra.mxu0 %v456
    %848 = vmatprep.subr.mxu0 %v461
    %849 = vmatpush1.msra.mxu0 %v460
    %850 = vmatprep.subr.mxu0 %v465
    %851 = vmatpush1.msra.mxu0 %v464
    %852 = vmatprep.subr.mxu0 0.0
    %853 = vmatpush1.msra.mxu0 0.0
    %854 = vmatprep.subr.mxu0 0.0
    %855 = vmatpush1.msra.mxu0 0.0
    %856 = vmatprep.subr.mxu0 0.0
    %857 = vmatpush1.msra.mxu0 0.0
    %858 = vmatprep.subr.mxu0 0.0
    %859 = vmatpush1.msra.mxu0 0.0
    %860 = vmatprep.subr.mxu0 0.0
    %861 = vmatpush1.msra.mxu0 0.0
    %862 = vmatprep.subr.mxu0 0.0
    %863 = vmatpush1.msra.mxu0 0.0
    %864 = vmatprep.subr.mxu0 0.0
    %865 = vmatpush1.msra.mxu0 0.0
    %866 = vmatprep.subr.mxu0 0.0
    %867 = vmatpush1.msra.mxu0 0.0
    %868 = vmatprep.subr.mxu0 0.0
    %869 = vmatpush1.msra.mxu0 0.0
    %870 = vmatprep.subr.mxu0 0.0
    %871 = vmatpush1.msra.mxu0 0.0
    %872 = vmatprep.subr.mxu0 0.0
    %873 = vmatpush1.msra.mxu0 0.0
    %874 = vmatprep.subr.mxu0 0.0
    %875 = vmatpush1.msra.mxu0 0.0
    %876 = vmatprep.subr.mxu0 0.0
    %877 = vmatpush1.msra.mxu0 0.0
    %878 = vmatprep.subr.mxu0 0.0
    %879 = vmatpush1.msra.mxu0 0.0
    %880 = vmatprep.subr.mxu0 0.0
    %881 = vmatpush1.msra.mxu0 0.0
    %882 = vmatprep.subr.mxu0 0.0
    %883 = vmatpush1.msra.mxu0 0.0
    %884 = vmatprep.mubr.f32.mxu0 0.0
    %885 = vmatmul.mubr.f32.gmra.mrb[0].mxu0 %v815
    %v886 = vpop.f32.mrb[0].mxu0
    %v887 = vadd.f32 0.0, %v886
    %v888 = vpop.f32.mrb[0].mxu0
    %v889 = vadd.f32 0.0, %v888
    %890 = vdwg.mxu0
    %891 = vmatprep.subr.mxu0 %v407
    %892 = vmatpush1.msra.mxu0 %v406
    %893 = vmatprep.subr.mxu0 %v411
    %894 = vmatpush1.msra.mxu0 %v410
    %895 = vmatprep.subr.mxu0 %v415
    %896 = vmatpush1.msra.mxu0 %v414
    %897 = vmatprep.subr.mxu0 %v419
    %898 = vmatpush1.msra.mxu0 %v418
    %899 = vmatprep.subr.mxu0 %v423
    %900 = vmatpush1.msra.mxu0 %v422
    %901 = vmatprep.subr.mxu0 %v427
    %902 = vmatpush1.msra.mxu0 %v426
    %903 = vmatprep.subr.mxu0 %v431
    %904 = vmatpush1.msra.mxu0 %v430
    %905 = vmatprep.subr.mxu0 %v435
    %906 = vmatpush1.msra.mxu0 %v434
    %907 = vmatprep.subr.mxu0 %v439
    %908 = vmatpush1.msra.mxu0 %v438
    %909 = vmatprep.subr.mxu0 %v443
    %910 = vmatpush1.msra.mxu0 %v442
    %911 = vmatprep.subr.mxu0 %v447
    %912 = vmatpush1.msra.mxu0 %v446
    %913 = vmatprep.subr.mxu0 %v451
    %914 = vmatpush1.msra.mxu0 %v450
    %915 = vmatprep.subr.mxu0 %v455
    %916 = vmatpush1.msra.mxu0 %v454
    %917 = vmatprep.subr.mxu0 %v459
    %918 = vmatpush1.msra.mxu0 %v458
    %919 = vmatprep.subr.mxu0 %v463
    %920 = vmatpush1.msra.mxu0 %v462
    %921 = vmatprep.subr.mxu0 %v467
    %922 = vmatpush1.msra.mxu0 %v466
    %923 = vmatprep.subr.mxu0 0.0
    %924 = vmatpush1.msra.mxu0 0.0
    %925 = vmatprep.subr.mxu0 0.0
    %926 = vmatpush1.msra.mxu0 0.0
    %927 = vmatprep.subr.mxu0 0.0
    %928 = vmatpush1.msra.mxu0 0.0
    %929 = vmatprep.subr.mxu0 0.0
    %930 = vmatpush1.msra.mxu0 0.0
    %931 = vmatprep.subr.mxu0 0.0
    %932 = vmatpush1.msra.mxu0 0.0
    %933 = vmatprep.subr.mxu0 0.0
    %934 = vmatpush1.msra.mxu0 0.0
    %935 = vmatprep.subr.mxu0 0.0
    %936 = vmatpush1.msra.mxu0 0.0
    %937 = vmatprep.subr.mxu0 0.0
    %938 = vmatpush1.msra.mxu0 0.0
    %939 = vmatprep.subr.mxu0 0.0
    %940 = vmatpush1.msra.mxu0 0.0
    %941 = vmatprep.subr.mxu0 0.0
    %942 = vmatpush1.msra.mxu0 0.0
    %943 = vmatprep.subr.mxu0 0.0
    %944 = vmatpush1.msra.mxu0 0.0
    %945 = vmatprep.subr.mxu0 0.0
    %946 = vmatpush1.msra.mxu0 0.0
    %947 = vmatprep.subr.mxu0 0.0
    %948 = vmatpush1.msra.mxu0 0.0
    %949 = vmatprep.subr.mxu0 0.0
    %950 = vmatpush1.msra.mxu0 0.0
    %951 = vmatprep.subr.mxu0 0.0
    %952 = vmatpush1.msra.mxu0 0.0
    %953 = vmatprep.subr.mxu0 0.0
    %954 = vmatpush1.msra.mxu0 0.0
    %955 = vmatprep.mubr.f32.mxu0 0.0
    %956 = vmatmul.mubr.f32.gmra.mrb[0].mxu0 %v815
    %v957 = vpop.f32.mrb[0].mxu0
    %v958 = vadd.f32 0.0, %v957
    %v959 = vpop.f32.mrb[0].mxu0
    %v960 = vadd.f32 0.0, %v959
    %961 = vdwg.mxu0
    %v962 = vadd.f32 %v816, %v887
    %v963 = vadd.f32 %v817, %v889
    %v964 = vadd.f32 %v818, %v958
    %v965 = vadd.f32 %v819, %v960
    %v966 = vxor.u32 %v962, 2147483648
    %v967 = vmul.f32 %v966, 1.442695
    %v968 = vpow.pop %v967
    %v969 = vadd.f32 %v968, 1.0
    %v970 = vrcp.pop %v969
    %v971 = vmul.f32 1.0, %v970
    %v972 = vxor.u32 %v963, 2147483648
    %v973 = vmul.f32 %v972, 1.442695
    %v974 = vpow.pop %v973
    %v975 = vadd.f32 %v974, 1.0
    %v976 = vrcp.pop %v975
    %v977 = vmul.f32 1.0, %v976
    %v978 = vtanh.pop %v964
    %v979 = vxor.u32 %v965, 2147483648
    %v980 = vmul.f32 %v979, 1.442695
    %v981 = vpow.pop %v980
    %v982 = vadd.f32 %v981, 1.0
    %v983 = vrcp.pop %v982
    %v984 = vmul.f32 1.0, %v983
    %v985 = vmul.f32 %v977, %v813
    %v986 = vmul.f32 %v971, %v978
    %v987 = vadd.f32 %v985, %v986
    %v988 = vtanh.pop %v987
    %v989 = vmul.f32 %v984, %v988
    %v990 = vsel %vm106, %v263, %v269
    %v991 = vsel %vm106, %v265, %v271
    %v992 = vsel %vm106, %v376, %v382
    %v993 = vsel %vm106, %v378, %v384
    %994 = vmatprep.subr.mxu0 %v405
    %995 = vmatpush1.msra.mxu0 %v404
    %996 = vmatprep.subr.mxu0 %v409
    %997 = vmatpush1.msra.mxu0 %v408
    %998 = vmatprep.subr.mxu0 %v413
    %999 = vmatpush1.msra.mxu0 %v412
    %1000 = vmatprep.subr.mxu0 %v417
    %1001 = vmatpush1.msra.mxu0 %v416
    %1002 = vmatprep.subr.mxu0 %v421
    %1003 = vmatpush1.msra.mxu0 %v420
    %1004 = vmatprep.subr.mxu0 %v425
    %1005 = vmatpush1.msra.mxu0 %v424
    %1006 = vmatprep.subr.mxu0 %v429
    %1007 = vmatpush1.msra.mxu0 %v428
    %1008 = vmatprep.subr.mxu0 %v433
    %1009 = vmatpush1.msra.mxu0 %v432
    %1010 = vmatprep.subr.mxu0 %v437
    %1011 = vmatpush1.msra.mxu0 %v436
    %1012 = vmatprep.subr.mxu0 %v441
    %1013 = vmatpush1.msra.mxu0 %v440
    %1014 = vmatprep.subr.mxu0 %v445
    %1015 = vmatpush1.msra.mxu0 %v444
    %1016 = vmatprep.subr.mxu0 %v449
    %1017 = vmatpush1.msra.mxu0 %v448
    %1018 = vmatprep.subr.mxu0 %v453
    %1019 = vmatpush1.msra.mxu0 %v452
    %1020 = vmatprep.subr.mxu0 %v457
    %1021 = vmatpush1.msra.mxu0 %v456
    %1022 = vmatprep.subr.mxu0 %v461
    %1023 = vmatpush1.msra.mxu0 %v460
    %1024 = vmatprep.subr.mxu0 %v465
    %1025 = vmatpush1.msra.mxu0 %v464
    %1026 = vmatprep.subr.mxu0 0.0
    %1027 = vmatpush1.msra.mxu0 0.0
    %1028 = vmatprep.subr.mxu0 0.0
    %1029 = vmatpush1.msra.mxu0 0.0
    %1030 = vmatprep.subr.mxu0 0.0
    %1031 = vmatpush1.msra.mxu0 0.0
    %1032 = vmatprep.subr.mxu0 0.0
    %1033 = vmatpush1.msra.mxu0 0.0
    %1034 = vmatprep.subr.mxu0 0.0
    %1035 = vmatpush1.msra.mxu0 0.0
    %1036 = vmatprep.subr.mxu0 0.0
    %1037 = vmatpush1.msra.mxu0 0.0
    %1038 = vmatprep.subr.mxu0 0.0
    %1039 = vmatpush1.msra.mxu0 0.0
    %1040 = vmatprep.subr.mxu0 0.0
    %1041 = vmatpush1.msra.mxu0 0.0
    %1042 = vmatprep.subr.mxu0 0.0
    %1043 = vmatpush1.msra.mxu0 0.0
    %1044 = vmatprep.subr.mxu0 0.0
    %1045 = vmatpush1.msra.mxu0 0.0
    %1046 = vmatprep.subr.mxu0 0.0
    %1047 = vmatpush1.msra.mxu0 0.0
    %1048 = vmatprep.subr.mxu0 0.0
    %1049 = vmatpush1.msra.mxu0 0.0
    %1050 = vmatprep.subr.mxu0 0.0
    %1051 = vmatpush1.msra.mxu0 0.0
    %1052 = vmatprep.subr.mxu0 0.0
    %1053 = vmatpush1.msra.mxu0 0.0
    %1054 = vmatprep.subr.mxu0 0.0
    %1055 = vmatpush1.msra.mxu0 0.0
    %1056 = vmatprep.subr.mxu0 0.0
    %1057 = vmatpush1.msra.mxu0 0.0
    %1058 = vmatprep.mubr.f32.mxu0 0.0
    %1059 = vmatmul.mubr.f32.gmra.mrb[0].mxu0 %v989
    %v1060 = vpop.f32.mrb[0].mxu0
    %v1061 = vadd.f32 0.0, %v1060
    %v1062 = vpop.f32.mrb[0].mxu0
    %v1063 = vadd.f32 0.0, %v1062
    %1064 = vdwg.mxu0
    %1065 = vmatprep.subr.mxu0 %v407
    %1066 = vmatpush1.msra.mxu0 %v406
    %1067 = vmatprep.subr.mxu0 %v411
    %1068 = vmatpush1.msra.mxu0 %v410
    %1069 = vmatprep.subr.mxu0 %v415
    %1070 = vmatpush1.msra.mxu0 %v414
    %1071 = vmatprep.subr.mxu0 %v419
    %1072 = vmatpush1.msra.mxu0 %v418
    %1073 = vmatprep.subr.mxu0 %v423
    %1074 = vmatpush1.msra.mxu0 %v422
    %1075 = vmatprep.subr.mxu0 %v427
    %1076 = vmatpush1.msra.mxu0 %v426
    %1077 = vmatprep.subr.mxu0 %v431
    %1078 = vmatpush1.msra.mxu0 %v430
    %1079 = vmatprep.subr.mxu0 %v435
    %1080 = vmatpush1.msra.mxu0 %v434
    %1081 = vmatprep.subr.mxu0 %v439
    %1082 = vmatpush1.msra.mxu0 %v438
    %1083 = vmatprep.subr.mxu0 %v443
    %1084 = vmatpush1.msra.mxu0 %v442
    %1085 = vmatprep.subr.mxu0 %v447
    %1086 = vmatpush1.msra.mxu0 %v446
    %1087 = vmatprep.subr.mxu0 %v451
    %1088 = vmatpush1.msra.mxu0 %v450
    %1089 = vmatprep.subr.mxu0 %v455
    %1090 = vmatpush1.msra.mxu0 %v454
    %1091 = vmatprep.subr.mxu0 %v459
    %1092 = vmatpush1.msra.mxu0 %v458
    %1093 = vmatprep.subr.mxu0 %v463
    %1094 = vmatpush1.msra.mxu0 %v462
    %1095 = vmatprep.subr.mxu0 %v467
    %1096 = vmatpush1.msra.mxu0 %v466
    %1097 = vmatprep.subr.mxu0 0.0
    %1098 = vmatpush1.msra.mxu0 0.0
    %1099 = vmatprep.subr.mxu0 0.0
    %1100 = vmatpush1.msra.mxu0 0.0
    %1101 = vmatprep.subr.mxu0 0.0
    %1102 = vmatpush1.msra.mxu0 0.0
    %1103 = vmatprep.subr.mxu0 0.0
    %1104 = vmatpush1.msra.mxu0 0.0
    %1105 = vmatprep.subr.mxu0 0.0
    %1106 = vmatpush1.msra.mxu0 0.0
    %1107 = vmatprep.subr.mxu0 0.0
    %1108 = vmatpush1.msra.mxu0 0.0
    %1109 = vmatprep.subr.mxu0 0.0
    %1110 = vmatpush1.msra.mxu0 0.0
    %1111 = vmatprep.subr.mxu0 0.0
    %1112 = vmatpush1.msra.mxu0 0.0
    %1113 = vmatprep.subr.mxu0 0.0
    %1114 = vmatpush1.msra.mxu0 0.0
    %1115 = vmatprep.subr.mxu0 0.0
    %1116 = vmatpush1.msra.mxu0 0.0
    %1117 = vmatprep.subr.mxu0 0.0
    %1118 = vmatpush1.msra.mxu0 0.0
    %1119 = vmatprep.subr.mxu0 0.0
    %1120 = vmatpush1.msra.mxu0 0.0
    %1121 = vmatprep.subr.mxu0 0.0
    %1122 = vmatpush1.msra.mxu0 0.0
    %1123 = vmatprep.subr.mxu0 0.0
    %1124 = vmatpush1.msra.mxu0 0.0
    %1125 = vmatprep.subr.mxu0 0.0
    %1126 = vmatpush1.msra.mxu0 0.0
    %1127 = vmatprep.subr.mxu0 0.0
    %1128 = vmatpush1.msra.mxu0 0.0
    %1129 = vmatprep.mubr.f32.mxu0 0.0
    %1130 = vmatmul.mubr.f32.gmra.mrb[0].mxu0 %v989
    %v1131 = vpop.f32.mrb[0].mxu0
    %v1132 = vadd.f32 0.0, %v1131
    %v1133 = vpop.f32.mrb[0].mxu0
    %v1134 = vadd.f32 0.0, %v1133
    %1135 = vdwg.mxu0
    %v1136 = vadd.f32 %v990, %v1061
    %v1137 = vadd.f32 %v991, %v1063
    %v1138 = vadd.f32 %v992, %v1132
    %v1139 = vadd.f32 %v993, %v1134
    %v1140 = vxor.u32 %v1136, 2147483648
    %v1141 = vmul.f32 %v1140, 1.442695
    %v1142 = vpow.pop %v1141
    %v1143 = vadd.f32 %v1142, 1.0
    %v1144 = vrcp.pop %v1143
    %v1145 = vmul.f32 1.0, %v1144
    %v1146 = vxor.u32 %v1137, 2147483648
    %v1147 = vmul.f32 %v1146, 1.442695
    %v1148 = vpow.pop %v1147
    %v1149 = vadd.f32 %v1148, 1.0
    %v1150 = vrcp.pop %v1149
    %v1151 = vmul.f32 1.0, %v1150
    %v1152 = vtanh.pop %v1138
    %v1153 = vxor.u32 %v1139, 2147483648
    %v1154 = vmul.f32 %v1153, 1.442695
    %v1155 = vpow.pop %v1154
    %v1156 = vadd.f32 %v1155, 1.0
    %v1157 = vrcp.pop %v1156
    %v1158 = vmul.f32 1.0, %v1157
    %v1159 = vmul.f32 %v1151, %v987
    %v1160 = vmul.f32 %v1145, %v1152
    %v1161 = vadd.f32 %v1159, %v1160
    %v1162 = vtanh.pop %v1161
    %v1163 = vmul.f32 %v1158, %v1162
    %v1164 = vsel %vm106, %v269, %v263
    %v1165 = vsel %vm106, %v271, %v265
    %v1166 = vsel %vm106, %v382, %v376
    %v1167 = vsel %vm106, %v384, %v378
    %1168 = vmatprep.subr.mxu0 %v405
    %1169 = vmatpush1.msra.mxu0 %v404
    %1170 = vmatprep.subr.mxu0 %v409
    %1171 = vmatpush1.msra.mxu0 %v408
    %1172 = vmatprep.subr.mxu0 %v413
    %1173 = vmatpush1.msra.mxu0 %v412
    %1174 = vmatprep.subr.mxu0 %v417
    %1175 = vmatpush1.msra.mxu0 %v416
    %1176 = vmatprep.subr.mxu0 %v421
    %1177 = vmatpush1.msra.mxu0 %v420
    %1178 = vmatprep.subr.mxu0 %v425
    %1179 = vmatpush1.msra.mxu0 %v424
    %1180 = vmatprep.subr.mxu0 %v429
    %1181 = vmatpush1.msra.mxu0 %v428
    %1182 = vmatprep.subr.mxu0 %v433
    %1183 = vmatpush1.msra.mxu0 %v432
    %1184 = vmatprep.subr.mxu0 %v437
    %1185 = vmatpush1.msra.mxu0 %v436
    %1186 = vmatprep.subr.mxu0 %v441
    %1187 = vmatpush1.msra.mxu0 %v440
    %1188 = vmatprep.subr.mxu0 %v445
    %1189 = vmatpush1.msra.mxu0 %v444
    %1190 = vmatprep.subr.mxu0 %v449
    %1191 = vmatpush1.msra.mxu0 %v448
    %1192 = vmatprep.subr.mxu0 %v453
    %1193 = vmatpush1.msra.mxu0 %v452
    %1194 = vmatprep.subr.mxu0 %v457
    %1195 = vmatpush1.msra.mxu0 %v456
    %1196 = vmatprep.subr.mxu0 %v461
    %1197 = vmatpush1.msra.mxu0 %v460
    %1198 = vmatprep.subr.mxu0 %v465
    %1199 = vmatpush1.msra.mxu0 %v464
    %1200 = vmatprep.subr.mxu0 0.0
    %1201 = vmatpush1.msra.mxu0 0.0
    %1202 = vmatprep.subr.mxu0 0.0
    %1203 = vmatpush1.msra.mxu0 0.0
    %1204 = vmatprep.subr.mxu0 0.0
    %1205 = vmatpush1.msra.mxu0 0.0
    %1206 = vmatprep.subr.mxu0 0.0
    %1207 = vmatpush1.msra.mxu0 0.0
    %1208 = vmatprep.subr.mxu0 0.0
    %1209 = vmatpush1.msra.mxu0 0.0
    %1210 = vmatprep.subr.mxu0 0.0
    %1211 = vmatpush1.msra.mxu0 0.0
    %1212 = vmatprep.subr.mxu0 0.0
    %1213 = vmatpush1.msra.mxu0 0.0
    %1214 = vmatprep.subr.mxu0 0.0
    %1215 = vmatpush1.msra.mxu0 0.0
    %1216 = vmatprep.subr.mxu0 0.0
    %1217 = vmatpush1.msra.mxu0 0.0
    %1218 = vmatprep.subr.mxu0 0.0
    %1219 = vmatpush1.msra.mxu0 0.0
    %1220 = vmatprep.subr.mxu0 0.0
    %1221 = vmatpush1.msra.mxu0 0.0
    %1222 = vmatprep.subr.mxu0 0.0
    %1223 = vmatpush1.msra.mxu0 0.0
    %1224 = vmatprep.subr.mxu0 0.0
    %1225 = vmatpush1.msra.mxu0 0.0
    %1226 = vmatprep.subr.mxu0 0.0
    %1227 = vmatpush1.msra.mxu0 0.0
    %1228 = vmatprep.subr.mxu0 0.0
    %1229 = vmatpush1.msra.mxu0 0.0
    %1230 = vmatprep.subr.mxu0 0.0
    %1231 = vmatpush1.msra.mxu0 0.0
    %1232 = vmatprep.mubr.f32.mxu0 0.0
    %1233 = vmatmul.mubr.f32.gmra.mrb[0].mxu0 %v1163
    %v1234 = vpop.f32.mrb[0].mxu0
    %v1235 = vadd.f32 0.0, %v1234
    %v1236 = vpop.f32.mrb[0].mxu0
    %v1237 = vadd.f32 0.0, %v1236
    %1238 = vdwg.mxu0
    %1239 = vmatprep.subr.mxu0 %v407
    %1240 = vmatpush1.msra.mxu0 %v406
    %1241 = vmatprep.subr.mxu0 %v411
    %1242 = vmatpush1.msra.mxu0 %v410
    %1243 = vmatprep.subr.mxu0 %v415
    %1244 = vmatpush1.msra.mxu0 %v414
    %1245 = vmatprep.subr.mxu0 %v419
    %1246 = vmatpush1.msra.mxu0 %v418
    %1247 = vmatprep.subr.mxu0 %v423
    %1248 = vmatpush1.msra.mxu0 %v422
    %1249 = vmatprep.subr.mxu0 %v427
    %1250 = vmatpush1.msra.mxu0 %v426
    %1251 = vmatprep.subr.mxu0 %v431
    %1252 = vmatpush1.msra.mxu0 %v430
    %1253 = vmatprep.subr.mxu0 %v435
    %1254 = vmatpush1.msra.mxu0 %v434
    %1255 = vmatprep.subr.mxu0 %v439
    %1256 = vmatpush1.msra.mxu0 %v438
    %1257 = vmatprep.subr.mxu0 %v443
    %1258 = vmatpush1.msra.mxu0 %v442
    %1259 = vmatprep.subr.mxu0 %v447
    %1260 = vmatpush1.msra.mxu0 %v446
    %1261 = vmatprep.subr.mxu0 %v451
    %1262 = vmatpush1.msra.mxu0 %v450
    %1263 = vmatprep.subr.mxu0 %v455
    %1264 = vmatpush1.msra.mxu0 %v454
    %1265 = vmatprep.subr.mxu0 %v459
    %1266 = vmatpush1.msra.mxu0 %v458
    %1267 = vmatprep.subr.mxu0 %v463
    %1268 = vmatpush1.msra.mxu0 %v462
    %1269 = vmatprep.subr.mxu0 %v467
    %1270 = vmatpush1.msra.mxu0 %v466
    %1271 = vmatprep.subr.mxu0 0.0
    %1272 = vmatpush1.msra.mxu0 0.0
    %1273 = vmatprep.subr.mxu0 0.0
    %1274 = vmatpush1.msra.mxu0 0.0
    %1275 = vmatprep.subr.mxu0 0.0
    %1276 = vmatpush1.msra.mxu0 0.0
    %1277 = vmatprep.subr.mxu0 0.0
    %1278 = vmatpush1.msra.mxu0 0.0
    %1279 = vmatprep.subr.mxu0 0.0
    %1280 = vmatpush1.msra.mxu0 0.0
    %1281 = vmatprep.subr.mxu0 0.0
    %1282 = vmatpush1.msra.mxu0 0.0
    %1283 = vmatprep.subr.mxu0 0.0
    %1284 = vmatpush1.msra.mxu0 0.0
    %1285 = vmatprep.subr.mxu0 0.0
    %1286 = vmatpush1.msra.mxu0 0.0
    %1287 = vmatprep.subr.mxu0 0.0
    %1288 = vmatpush1.msra.mxu0 0.0
    %1289 = vmatprep.subr.mxu0 0.0
    %1290 = vmatpush1.msra.mxu0 0.0
    %1291 = vmatprep.subr.mxu0 0.0
    %1292 = vmatpush1.msra.mxu0 0.0
    %1293 = vmatprep.subr.mxu0 0.0
    %1294 = vmatpush1.msra.mxu0 0.0
    %1295 = vmatprep.subr.mxu0 0.0
    %1296 = vmatpush1.msra.mxu0 0.0
    %1297 = vmatprep.subr.mxu0 0.0
    %1298 = vmatpush1.msra.mxu0 0.0
    %1299 = vmatprep.subr.mxu0 0.0
    %1300 = vmatpush1.msra.mxu0 0.0
    %1301 = vmatprep.subr.mxu0 0.0
    %1302 = vmatpush1.msra.mxu0 0.0
    %1303 = vmatprep.mubr.f32.mxu0 0.0
    %1304 = vmatmul.mubr.f32.gmra.mrb[0].mxu0 %v1163
    %v1305 = vpop.f32.mrb[0].mxu0
    %v1306 = vadd.f32 0.0, %v1305
    %v1307 = vpop.f32.mrb[0].mxu0
    %v1308 = vadd.f32 0.0, %v1307
    %1309 = vdwg.mxu0
    %v1310 = vadd.f32 %v1164, %v1235
    %v1311 = vadd.f32 %v1165, %v1237
    %v1312 = vadd.f32 %v1166, %v1306
    %v1313 = vadd.f32 %v1167, %v1308
    %v1314 = vxor.u32 %v1310, 2147483648
    %v1315 = vmul.f32 %v1314, 1.442695
    %v1316 = vpow.pop %v1315
    %v1317 = vadd.f32 %v1316, 1.0
    %v1318 = vrcp.pop %v1317
    %v1319 = vmul.f32 1.0, %v1318
    %v1320 = vxor.u32 %v1311, 2147483648
    %v1321 = vmul.f32 %v1320, 1.442695
    %v1322 = vpow.pop %v1321
    %v1323 = vadd.f32 %v1322, 1.0
    %v1324 = vrcp.pop %v1323
    %v1325 = vmul.f32 1.0, %v1324
    %v1326 = vtanh.pop %v1312
    %v1327 = vxor.u32 %v1313, 2147483648
    %v1328 = vmul.f32 %v1327, 1.442695
    %v1329 = vpow.pop %v1328
    %v1330 = vadd.f32 %v1329, 1.0
    %v1331 = vrcp.pop %v1330
    %v1332 = vmul.f32 1.0, %v1331
    %v1333 = vmul.f32 %v1325, %v1161
    %v1334 = vmul.f32 %v1319, %v1326
    %v1335 = vadd.f32 %v1333, %v1334
    %v1336 = vtanh.pop %v1335
    %v1337 = vmul.f32 %v1332, %v1336
    %v1338 = vsel %vm106, %v275, %v257
    %v1339 = vsel %vm106, %v277, %v259
    %v1340 = vsel %vm106, %v388, %v370
    %v1341 = vsel %vm106, %v390, %v372
    %1342 = vmatprep.subr.mxu0 %v405
    %1343 = vmatpush1.msra.mxu0 %v404
    %1344 = vmatprep.subr.mxu0 %v409
    %1345 = vmatpush1.msra.mxu0 %v408
    %1346 = vmatprep.subr.mxu0 %v413
    %1347 = vmatpush1.msra.mxu0 %v412
    %1348 = vmatprep.subr.mxu0 %v417
    %1349 = vmatpush1.msra.mxu0 %v416
    %1350 = vmatprep.subr.mxu0 %v421
    %1351 = vmatpush1.msra.mxu0 %v420
    %1352 = vmatprep.subr.mxu0 %v425
    %1353 = vmatpush1.msra.mxu0 %v424
    %1354 = vmatprep.subr.mxu0 %v429
    %1355 = vmatpush1.msra.mxu0 %v428
    %1356 = vmatprep.subr.mxu0 %v433
    %1357 = vmatpush1.msra.mxu0 %v432
    %1358 = vmatprep.subr.mxu0 %v437
    %1359 = vmatpush1.msra.mxu0 %v436
    %1360 = vmatprep.subr.mxu0 %v441
    %1361 = vmatpush1.msra.mxu0 %v440
    %1362 = vmatprep.subr.mxu0 %v445
    %1363 = vmatpush1.msra.mxu0 %v444
    %1364 = vmatprep.subr.mxu0 %v449
    %1365 = vmatpush1.msra.mxu0 %v448
    %1366 = vmatprep.subr.mxu0 %v453
    %1367 = vmatpush1.msra.mxu0 %v452
    %1368 = vmatprep.subr.mxu0 %v457
    %1369 = vmatpush1.msra.mxu0 %v456
    %1370 = vmatprep.subr.mxu0 %v461
    %1371 = vmatpush1.msra.mxu0 %v460
    %1372 = vmatprep.subr.mxu0 %v465
    %1373 = vmatpush1.msra.mxu0 %v464
    %1374 = vmatprep.subr.mxu0 0.0
    %1375 = vmatpush1.msra.mxu0 0.0
    %1376 = vmatprep.subr.mxu0 0.0
    %1377 = vmatpush1.msra.mxu0 0.0
    %1378 = vmatprep.subr.mxu0 0.0
    %1379 = vmatpush1.msra.mxu0 0.0
    %1380 = vmatprep.subr.mxu0 0.0
    %1381 = vmatpush1.msra.mxu0 0.0
    %1382 = vmatprep.subr.mxu0 0.0
    %1383 = vmatpush1.msra.mxu0 0.0
    %1384 = vmatprep.subr.mxu0 0.0
    %1385 = vmatpush1.msra.mxu0 0.0
    %1386 = vmatprep.subr.mxu0 0.0
    %1387 = vmatpush1.msra.mxu0 0.0
    %1388 = vmatprep.subr.mxu0 0.0
    %1389 = vmatpush1.msra.mxu0 0.0
    %1390 = vmatprep.subr.mxu0 0.0
    %1391 = vmatpush1.msra.mxu0 0.0
    %1392 = vmatprep.subr.mxu0 0.0
    %1393 = vmatpush1.msra.mxu0 0.0
    %1394 = vmatprep.subr.mxu0 0.0
    %1395 = vmatpush1.msra.mxu0 0.0
    %1396 = vmatprep.subr.mxu0 0.0
    %1397 = vmatpush1.msra.mxu0 0.0
    %1398 = vmatprep.subr.mxu0 0.0
    %1399 = vmatpush1.msra.mxu0 0.0
    %1400 = vmatprep.subr.mxu0 0.0
    %1401 = vmatpush1.msra.mxu0 0.0
    %1402 = vmatprep.subr.mxu0 0.0
    %1403 = vmatpush1.msra.mxu0 0.0
    %1404 = vmatprep.subr.mxu0 0.0
    %1405 = vmatpush1.msra.mxu0 0.0
    %1406 = vmatprep.mubr.f32.mxu0 0.0
    %1407 = vmatmul.mubr.f32.gmra.mrb[0].mxu0 %v1337
    %v1408 = vpop.f32.mrb[0].mxu0
    %v1409 = vadd.f32 0.0, %v1408
    %v1410 = vpop.f32.mrb[0].mxu0
    %v1411 = vadd.f32 0.0, %v1410
    %1412 = vdwg.mxu0
    %1413 = vmatprep.subr.mxu0 %v407
    %1414 = vmatpush1.msra.mxu0 %v406
    %1415 = vmatprep.subr.mxu0 %v411
    %1416 = vmatpush1.msra.mxu0 %v410
    %1417 = vmatprep.subr.mxu0 %v415
    %1418 = vmatpush1.msra.mxu0 %v414
    %1419 = vmatprep.subr.mxu0 %v419
    %1420 = vmatpush1.msra.mxu0 %v418
    %1421 = vmatprep.subr.mxu0 %v423
    %1422 = vmatpush1.msra.mxu0 %v422
    %1423 = vmatprep.subr.mxu0 %v427
    %1424 = vmatpush1.msra.mxu0 %v426
    %1425 = vmatprep.subr.mxu0 %v431
    %1426 = vmatpush1.msra.mxu0 %v430
    %1427 = vmatprep.subr.mxu0 %v435
    %1428 = vmatpush1.msra.mxu0 %v434
    %1429 = vmatprep.subr.mxu0 %v439
    %1430 = vmatpush1.msra.mxu0 %v438
    %1431 = vmatprep.subr.mxu0 %v443
    %1432 = vmatpush1.msra.mxu0 %v442
    %1433 = vmatprep.subr.mxu0 %v447
    %1434 = vmatpush1.msra.mxu0 %v446
    %1435 = vmatprep.subr.mxu0 %v451
    %1436 = vmatpush1.msra.mxu0 %v450
    %1437 = vmatprep.subr.mxu0 %v455
    %1438 = vmatpush1.msra.mxu0 %v454
    %1439 = vmatprep.subr.mxu0 %v459
    %1440 = vmatpush1.msra.mxu0 %v458
    %1441 = vmatprep.subr.mxu0 %v463
    %1442 = vmatpush1.msra.mxu0 %v462
    %1443 = vmatprep.subr.mxu0 %v467
    %1444 = vmatpush1.msra.mxu0 %v466
    %1445 = vmatprep.subr.mxu0 0.0
    %1446 = vmatpush1.msra.mxu0 0.0
    %1447 = vmatprep.subr.mxu0 0.0
    %1448 = vmatpush1.msra.mxu0 0.0
    %1449 = vmatprep.subr.mxu0 0.0
    %1450 = vmatpush1.msra.mxu0 0.0
    %1451 = vmatprep.subr.mxu0 0.0
    %1452 = vmatpush1.msra.mxu0 0.0
    %1453 = vmatprep.subr.mxu0 0.0
    %1454 = vmatpush1.msra.mxu0 0.0
    %1455 = vmatprep.subr.mxu0 0.0
    %1456 = vmatpush1.msra.mxu0 0.0
    %1457 = vmatprep.subr.mxu0 0.0
    %1458 = vmatpush1.msra.mxu0 0.0
    %1459 = vmatprep.subr.mxu0 0.0
    %1460 = vmatpush1.msra.mxu0 0.0
    %1461 = vmatprep.subr.mxu0 0.0
    %1462 = vmatpush1.msra.mxu0 0.0
    %1463 = vmatprep.subr.mxu0 0.0
    %1464 = vmatpush1.msra.mxu0 0.0
    %1465 = vmatprep.subr.mxu0 0.0
    %1466 = vmatpush1.msra.mxu0 0.0
    %1467 = vmatprep.subr.mxu0 0.0
    %1468 = vmatpush1.msra.mxu0 0.0
    %1469 = vmatprep.subr.mxu0 0.0
    %1470 = vmatpush1.msra.mxu0 0.0
    %1471 = vmatprep.subr.mxu0 0.0
    %1472 = vmatpush1.msra.mxu0 0.0
    %1473 = vmatprep.subr.mxu0 0.0
    %1474 = vmatpush1.msra.mxu0 0.0
    %1475 = vmatprep.subr.mxu0 0.0
    %1476 = vmatpush1.msra.mxu0 0.0
    %1477 = vmatprep.mubr.f32.mxu0 0.0
    %1478 = vmatmul.mubr.f32.gmra.mrb[0].mxu0 %v1337
    %v1479 = vpop.f32.mrb[0].mxu0
    %v1480 = vadd.f32 0.0, %v1479
    %v1481 = vpop.f32.mrb[0].mxu0
    %v1482 = vadd.f32 0.0, %v1481
    %1483 = vdwg.mxu0
    %v1484 = vadd.f32 %v1338, %v1409
    %v1485 = vadd.f32 %v1339, %v1411
    %v1486 = vadd.f32 %v1340, %v1480
    %v1487 = vadd.f32 %v1341, %v1482
    %v1488 = vxor.u32 %v1484, 2147483648
    %v1489 = vmul.f32 %v1488, 1.442695
    %v1490 = vpow.pop %v1489
    %v1491 = vadd.f32 %v1490, 1.0
    %v1492 = vrcp.pop %v1491
    %v1493 = vmul.f32 1.0, %v1492
    %v1494 = vxor.u32 %v1485, 2147483648
    %v1495 = vmul.f32 %v1494, 1.442695
    %v1496 = vpow.pop %v1495
    %v1497 = vadd.f32 %v1496, 1.0
    %v1498 = vrcp.pop %v1497
    %v1499 = vmul.f32 1.0, %v1498
    %v1500 = vtanh.pop %v1486
    %v1501 = vxor.u32 %v1487, 2147483648
    %v1502 = vmul.f32 %v1501, 1.442695
    %v1503 = vpow.pop %v1502
    %v1504 = vadd.f32 %v1503, 1.0
    %v1505 = vrcp.pop %v1504
    %v1506 = vmul.f32 1.0, %v1505
    %v1507 = vmul.f32 %v1499, %v1335
    %v1508 = vmul.f32 %v1493, %v1500
    %v1509 = vadd.f32 %v1507, %v1508
    %v1510 = vtanh.pop %v1509
    %v1511 = vmul.f32 %v1506, %v1510
    %v1512 = vsel %vm106, %v281, %v251
    %v1513 = vsel %vm106, %v283, %v253
    %v1514 = vsel %vm106, %v394, %v364
    %v1515 = vsel %vm106, %v396, %v366
    %1516 = vmatprep.subr.mxu0 %v405
    %1517 = vmatpush1.msra.mxu0 %v404
    %1518 = vmatprep.subr.mxu0 %v409
    %1519 = vmatpush1.msra.mxu0 %v408
    %1520 = vmatprep.subr.mxu0 %v413
    %1521 = vmatpush1.msra.mxu0 %v412
    %1522 = vmatprep.subr.mxu0 %v417
    %1523 = vmatpush1.msra.mxu0 %v416
    %1524 = vmatprep.subr.mxu0 %v421
    %1525 = vmatpush1.msra.mxu0 %v420
    %1526 = vmatprep.subr.mxu0 %v425
    %1527 = vmatpush1.msra.mxu0 %v424
    %1528 = vmatprep.subr.mxu0 %v429
    %1529 = vmatpush1.msra.mxu0 %v428
    %1530 = vmatprep.subr.mxu0 %v433
    %1531 = vmatpush1.msra.mxu0 %v432
    %1532 = vmatprep.subr.mxu0 %v437
    %1533 = vmatpush1.msra.mxu0 %v436
    %1534 = vmatprep.subr.mxu0 %v441
    %1535 = vmatpush1.msra.mxu0 %v440
    %1536 = vmatprep.subr.mxu0 %v445
    %1537 = vmatpush1.msra.mxu0 %v444
    %1538 = vmatprep.subr.mxu0 %v449
    %1539 = vmatpush1.msra.mxu0 %v448
    %1540 = vmatprep.subr.mxu0 %v453
    %1541 = vmatpush1.msra.mxu0 %v452
    %1542 = vmatprep.subr.mxu0 %v457
    %1543 = vmatpush1.msra.mxu0 %v456
    %1544 = vmatprep.subr.mxu0 %v461
    %1545 = vmatpush1.msra.mxu0 %v460
    %1546 = vmatprep.subr.mxu0 %v465
    %1547 = vmatpush1.msra.mxu0 %v464
    %1548 = vmatprep.subr.mxu0 0.0
    %1549 = vmatpush1.msra.mxu0 0.0
    %1550 = vmatprep.subr.mxu0 0.0
    %1551 = vmatpush1.msra.mxu0 0.0
    %1552 = vmatprep.subr.mxu0 0.0
    %1553 = vmatpush1.msra.mxu0 0.0
    %1554 = vmatprep.subr.mxu0 0.0
    %1555 = vmatpush1.msra.mxu0 0.0
    %1556 = vmatprep.subr.mxu0 0.0
    %1557 = vmatpush1.msra.mxu0 0.0
    %1558 = vmatprep.subr.mxu0 0.0
    %1559 = vmatpush1.msra.mxu0 0.0
    %1560 = vmatprep.subr.mxu0 0.0
    %1561 = vmatpush1.msra.mxu0 0.0
    %1562 = vmatprep.subr.mxu0 0.0
    %1563 = vmatpush1.msra.mxu0 0.0
    %1564 = vmatprep.subr.mxu0 0.0
    %1565 = vmatpush1.msra.mxu0 0.0
    %1566 = vmatprep.subr.mxu0 0.0
    %1567 = vmatpush1.msra.mxu0 0.0
    %1568 = vmatprep.subr.mxu0 0.0
    %1569 = vmatpush1.msra.mxu0 0.0
    %1570 = vmatprep.subr.mxu0 0.0
    %1571 = vmatpush1.msra.mxu0 0.0
    %1572 = vmatprep.subr.mxu0 0.0
    %1573 = vmatpush1.msra.mxu0 0.0
    %1574 = vmatprep.subr.mxu0 0.0
    %1575 = vmatpush1.msra.mxu0 0.0
    %1576 = vmatprep.subr.mxu0 0.0
    %1577 = vmatpush1.msra.mxu0 0.0
    %1578 = vmatprep.subr.mxu0 0.0
    %1579 = vmatpush1.msra.mxu0 0.0
    %1580 = vmatprep.mubr.f32.mxu0 0.0
    %1581 = vmatmul.mubr.f32.gmra.mrb[0].mxu0 %v1511
    %v1582 = vpop.f32.mrb[0].mxu0
    %v1583 = vadd.f32 0.0, %v1582
    %v1584 = vpop.f32.mrb[0].mxu0
    %v1585 = vadd.f32 0.0, %v1584
    %1586 = vdwg.mxu0
    %1587 = vmatprep.subr.mxu0 %v407
    %1588 = vmatpush1.msra.mxu0 %v406
    %1589 = vmatprep.subr.mxu0 %v411
    %1590 = vmatpush1.msra.mxu0 %v410
    %1591 = vmatprep.subr.mxu0 %v415
    %1592 = vmatpush1.msra.mxu0 %v414
    %1593 = vmatprep.subr.mxu0 %v419
    %1594 = vmatpush1.msra.mxu0 %v418
    %1595 = vmatprep.subr.mxu0 %v423
    %1596 = vmatpush1.msra.mxu0 %v422
    %1597 = vmatprep.subr.mxu0 %v427
    %1598 = vmatpush1.msra.mxu0 %v426
    %1599 = vmatprep.subr.mxu0 %v431
    %1600 = vmatpush1.msra.mxu0 %v430
    %1601 = vmatprep.subr.mxu0 %v435
    %1602 = vmatpush1.msra.mxu0 %v434
    %1603 = vmatprep.subr.mxu0 %v439
    %1604 = vmatpush1.msra.mxu0 %v438
    %1605 = vmatprep.subr.mxu0 %v443
    %1606 = vmatpush1.msra.mxu0 %v442
    %1607 = vmatprep.subr.mxu0 %v447
    %1608 = vmatpush1.msra.mxu0 %v446
    %1609 = vmatprep.subr.mxu0 %v451
    %1610 = vmatpush1.msra.mxu0 %v450
    %1611 = vmatprep.subr.mxu0 %v455
    %1612 = vmatpush1.msra.mxu0 %v454
    %1613 = vmatprep.subr.mxu0 %v459
    %1614 = vmatpush1.msra.mxu0 %v458
    %1615 = vmatprep.subr.mxu0 %v463
    %1616 = vmatpush1.msra.mxu0 %v462
    %1617 = vmatprep.subr.mxu0 %v467
    %1618 = vmatpush1.msra.mxu0 %v466
    %1619 = vmatprep.subr.mxu0 0.0
    %1620 = vmatpush1.msra.mxu0 0.0
    %1621 = vmatprep.subr.mxu0 0.0
    %1622 = vmatpush1.msra.mxu0 0.0
    %1623 = vmatprep.subr.mxu0 0.0
    %1624 = vmatpush1.msra.mxu0 0.0
    %1625 = vmatprep.subr.mxu0 0.0
    %1626 = vmatpush1.msra.mxu0 0.0
    %1627 = vmatprep.subr.mxu0 0.0
    %1628 = vmatpush1.msra.mxu0 0.0
    %1629 = vmatprep.subr.mxu0 0.0
    %1630 = vmatpush1.msra.mxu0 0.0
    %1631 = vmatprep.subr.mxu0 0.0
    %1632 = vmatpush1.msra.mxu0 0.0
    %1633 = vmatprep.subr.mxu0 0.0
    %1634 = vmatpush1.msra.mxu0 0.0
    %1635 = vmatprep.subr.mxu0 0.0
    %1636 = vmatpush1.msra.mxu0 0.0
    %1637 = vmatprep.subr.mxu0 0.0
    %1638 = vmatpush1.msra.mxu0 0.0
    %1639 = vmatprep.subr.mxu0 0.0
    %1640 = vmatpush1.msra.mxu0 0.0
    %1641 = vmatprep.subr.mxu0 0.0
    %1642 = vmatpush1.msra.mxu0 0.0
    %1643 = vmatprep.subr.mxu0 0.0
    %1644 = vmatpush1.msra.mxu0 0.0
    %1645 = vmatprep.subr.mxu0 0.0
    %1646 = vmatpush1.msra.mxu0 0.0
    %1647 = vmatprep.subr.mxu0 0.0
    %1648 = vmatpush1.msra.mxu0 0.0
    %1649 = vmatprep.subr.mxu0 0.0
    %1650 = vmatpush1.msra.mxu0 0.0
    %1651 = vmatprep.mubr.f32.mxu0 0.0
    %1652 = vmatmul.mubr.f32.gmra.mrb[0].mxu0 %v1511
    %v1653 = vpop.f32.mrb[0].mxu0
    %v1654 = vadd.f32 0.0, %v1653
    %v1655 = vpop.f32.mrb[0].mxu0
    %v1656 = vadd.f32 0.0, %v1655
    %1657 = vdwg.mxu0
    %v1658 = vadd.f32 %v1512, %v1583
    %v1659 = vadd.f32 %v1513, %v1585
    %v1660 = vadd.f32 %v1514, %v1654
    %v1661 = vadd.f32 %v1515, %v1656
    %v1662 = vxor.u32 %v1658, 2147483648
    %v1663 = vmul.f32 %v1662, 1.442695
    %v1664 = vpow.pop %v1663
    %v1665 = vadd.f32 %v1664, 1.0
    %v1666 = vrcp.pop %v1665
    %v1667 = vmul.f32 1.0, %v1666
    %v1668 = vxor.u32 %v1659, 2147483648
    %v1669 = vmul.f32 %v1668, 1.442695
    %v1670 = vpow.pop %v1669
    %v1671 = vadd.f32 %v1670, 1.0
    %v1672 = vrcp.pop %v1671
    %v1673 = vmul.f32 1.0, %v1672
    %v1674 = vtanh.pop %v1660
    %v1675 = vxor.u32 %v1661, 2147483648
    %v1676 = vmul.f32 %v1675, 1.442695
    %v1677 = vpow.pop %v1676
    %v1678 = vadd.f32 %v1677, 1.0
    %v1679 = vrcp.pop %v1678
    %v1680 = vmul.f32 1.0, %v1679
    %v1681 = vmul.f32 %v1673, %v1509
    %v1682 = vmul.f32 %v1667, %v1674
    %v1683 = vadd.f32 %v1681, %v1682
    %v1684 = vtanh.pop %v1683
    %v1685 = vmul.f32 %v1680, %v1684
    %v1686 = vsel %vm106, %v287, %v245
    %v1687 = vsel %vm106, %v289, %v247
    %v1688 = vsel %vm106, %v400, %v358
    %v1689 = vsel %vm106, %v402, %v360
    %1690 = vmatprep.subr.mxu0 %v405
    %1691 = vmatpush1.msra.mxu0 %v404
    %1692 = vmatprep.subr.mxu0 %v409
    %1693 = vmatpush1.msra.mxu0 %v408
    %1694 = vmatprep.subr.mxu0 %v413
    %1695 = vmatpush1.msra.mxu0 %v412
    %1696 = vmatprep.subr.mxu0 %v417
    %1697 = vmatpush1.msra.mxu0 %v416
    %1698 = vmatprep.subr.mxu0 %v421
    %1699 = vmatpush1.msra.mxu0 %v420
    %1700 = vmatprep.subr.mxu0 %v425
    %1701 = vmatpush1.msra.mxu0 %v424
    %1702 = vmatprep.subr.mxu0 %v429
    %1703 = vmatpush1.msra.mxu0 %v428
    %1704 = vmatprep.subr.mxu0 %v433
    %1705 = vmatpush1.msra.mxu0 %v432
    %1706 = vmatprep.subr.mxu0 %v437
    %1707 = vmatpush1.msra.mxu0 %v436
    %1708 = vmatprep.subr.mxu0 %v441
    %1709 = vmatpush1.msra.mxu0 %v440
    %1710 = vmatprep.subr.mxu0 %v445
    %1711 = vmatpush1.msra.mxu0 %v444
    %1712 = vmatprep.subr.mxu0 %v449
    %1713 = vmatpush1.msra.mxu0 %v448
    %1714 = vmatprep.subr.mxu0 %v453
    %1715 = vmatpush1.msra.mxu0 %v452
    %1716 = vmatprep.subr.mxu0 %v457
    %1717 = vmatpush1.msra.mxu0 %v456
    %1718 = vmatprep.subr.mxu0 %v461
    %1719 = vmatpush1.msra.mxu0 %v460
    %1720 = vmatprep.subr.mxu0 %v465
    %1721 = vmatpush1.msra.mxu0 %v464
    %1722 = vmatprep.subr.mxu0 0.0
    %1723 = vmatpush1.msra.mxu0 0.0
    %1724 = vmatprep.subr.mxu0 0.0
    %1725 = vmatpush1.msra.mxu0 0.0
    %1726 = vmatprep.subr.mxu0 0.0
    %1727 = vmatpush1.msra.mxu0 0.0
    %1728 = vmatprep.subr.mxu0 0.0
    %1729 = vmatpush1.msra.mxu0 0.0
    %1730 = vmatprep.subr.mxu0 0.0
    %1731 = vmatpush1.msra.mxu0 0.0
    %1732 = vmatprep.subr.mxu0 0.0
    %1733 = vmatpush1.msra.mxu0 0.0
    %1734 = vmatprep.subr.mxu0 0.0
    %1735 = vmatpush1.msra.mxu0 0.0
    %1736 = vmatprep.subr.mxu0 0.0
    %1737 = vmatpush1.msra.mxu0 0.0
    %1738 = vmatprep.subr.mxu0 0.0
    %1739 = vmatpush1.msra.mxu0 0.0
    %1740 = vmatprep.subr.mxu0 0.0
    %1741 = vmatpush1.msra.mxu0 0.0
    %1742 = vmatprep.subr.mxu0 0.0
    %1743 = vmatpush1.msra.mxu0 0.0
    %1744 = vmatprep.subr.mxu0 0.0
    %1745 = vmatpush1.msra.mxu0 0.0
    %1746 = vmatprep.subr.mxu0 0.0
    %1747 = vmatpush1.msra.mxu0 0.0
    %1748 = vmatprep.subr.mxu0 0.0
    %1749 = vmatpush1.msra.mxu0 0.0
    %1750 = vmatprep.subr.mxu0 0.0
    %1751 = vmatpush1.msra.mxu0 0.0
    %1752 = vmatprep.subr.mxu0 0.0
    %1753 = vmatpush1.msra.mxu0 0.0
    %1754 = vmatprep.mubr.f32.mxu0 0.0
    %1755 = vmatmul.mubr.f32.gmra.mrb[0].mxu0 %v1685
    %v1756 = vpop.f32.mrb[0].mxu0
    %v1757 = vadd.f32 0.0, %v1756
    %v1758 = vpop.f32.mrb[0].mxu0
    %v1759 = vadd.f32 0.0, %v1758
    %1760 = vdwg.mxu0
    %1761 = vmatprep.subr.mxu0 %v407
    %1762 = vmatpush1.msra.mxu0 %v406
    %1763 = vmatprep.subr.mxu0 %v411
    %1764 = vmatpush1.msra.mxu0 %v410
    %1765 = vmatprep.subr.mxu0 %v415
    %1766 = vmatpush1.msra.mxu0 %v414
    %1767 = vmatprep.subr.mxu0 %v419
    %1768 = vmatpush1.msra.mxu0 %v418
    %1769 = vmatprep.subr.mxu0 %v423
    %1770 = vmatpush1.msra.mxu0 %v422
    %1771 = vmatprep.subr.mxu0 %v427
    %1772 = vmatpush1.msra.mxu0 %v426
    %1773 = vmatprep.subr.mxu0 %v431
    %1774 = vmatpush1.msra.mxu0 %v430
    %1775 = vmatprep.subr.mxu0 %v435
    %1776 = vmatpush1.msra.mxu0 %v434
    %1777 = vmatprep.subr.mxu0 %v439
    %1778 = vmatpush1.msra.mxu0 %v438
    %1779 = vmatprep.subr.mxu0 %v443
    %1780 = vmatpush1.msra.mxu0 %v442
    %1781 = vmatprep.subr.mxu0 %v447
    %1782 = vmatpush1.msra.mxu0 %v446
    %1783 = vmatprep.subr.mxu0 %v451
    %1784 = vmatpush1.msra.mxu0 %v450
    %1785 = vmatprep.subr.mxu0 %v455
    %1786 = vmatpush1.msra.mxu0 %v454
    %1787 = vmatprep.subr.mxu0 %v459
    %1788 = vmatpush1.msra.mxu0 %v458
    %1789 = vmatprep.subr.mxu0 %v463
    %1790 = vmatpush1.msra.mxu0 %v462
    %1791 = vmatprep.subr.mxu0 %v467
    %1792 = vmatpush1.msra.mxu0 %v466
    %1793 = vmatprep.subr.mxu0 0.0
    %1794 = vmatpush1.msra.mxu0 0.0
    %1795 = vmatprep.subr.mxu0 0.0
    %1796 = vmatpush1.msra.mxu0 0.0
    %1797 = vmatprep.subr.mxu0 0.0
    %1798 = vmatpush1.msra.mxu0 0.0
    %1799 = vmatprep.subr.mxu0 0.0
    %1800 = vmatpush1.msra.mxu0 0.0
    %1801 = vmatprep.subr.mxu0 0.0
    %1802 = vmatpush1.msra.mxu0 0.0
    %1803 = vmatprep.subr.mxu0 0.0
    %1804 = vmatpush1.msra.mxu0 0.0
    %1805 = vmatprep.subr.mxu0 0.0
    %1806 = vmatpush1.msra.mxu0 0.0
    %1807 = vmatprep.subr.mxu0 0.0
    %1808 = vmatpush1.msra.mxu0 0.0
    %1809 = vmatprep.subr.mxu0 0.0
    %1810 = vmatpush1.msra.mxu0 0.0
    %1811 = vmatprep.subr.mxu0 0.0
    %1812 = vmatpush1.msra.mxu0 0.0
    %1813 = vmatprep.subr.mxu0 0.0
    %1814 = vmatpush1.msra.mxu0 0.0
    %1815 = vmatprep.subr.mxu0 0.0
    %1816 = vmatpush1.msra.mxu0 0.0
    %1817 = vmatprep.subr.mxu0 0.0
    %1818 = vmatpush1.msra.mxu0 0.0
    %1819 = vmatprep.subr.mxu0 0.0
    %1820 = vmatpush1.msra.mxu0 0.0
    %1821 = vmatprep.subr.mxu0 0.0
    %1822 = vmatpush1.msra.mxu0 0.0
    %1823 = vmatprep.subr.mxu0 0.0
    %1824 = vmatpush1.msra.mxu0 0.0
    %1825 = vmatprep.mubr.f32.mxu0 0.0
    %1826 = vmatmul.mubr.f32.gmra.mrb[0].mxu0 %v1685
    %v1827 = vpop.f32.mrb[0].mxu0
    %v1828 = vadd.f32 0.0, %v1827
    %v1829 = vpop.f32.mrb[0].mxu0
    %v1830 = vadd.f32 0.0, %v1829
    %1831 = vdwg.mxu0
    %v1832 = vadd.f32 %v1686, %v1757
    %v1833 = vadd.f32 %v1687, %v1759
    %v1834 = vadd.f32 %v1688, %v1828
    %v1835 = vadd.f32 %v1689, %v1830
    %v1836 = vxor.u32 %v1832, 2147483648
    %v1837 = vmul.f32 %v1836, 1.442695
    %v1838 = vpow.pop %v1837
    %v1839 = vadd.f32 %v1838, 1.0
    %v1840 = vrcp.pop %v1839
    %v1841 = vmul.f32 1.0, %v1840
    %v1842 = vxor.u32 %v1833, 2147483648
    %v1843 = vmul.f32 %v1842, 1.442695
    %v1844 = vpow.pop %v1843
    %v1845 = vadd.f32 %v1844, 1.0
    %v1846 = vrcp.pop %v1845
    %v1847 = vmul.f32 1.0, %v1846
    %v1848 = vtanh.pop %v1834
    %v1849 = vxor.u32 %v1835, 2147483648
    %v1850 = vmul.f32 %v1849, 1.442695
    %v1851 = vpow.pop %v1850
    %v1852 = vadd.f32 %v1851, 1.0
    %v1853 = vrcp.pop %v1852
    %v1854 = vmul.f32 1.0, %v1853
    %v1855 = vmul.f32 %v1847, %v1683
    %v1856 = vmul.f32 %v1841, %v1848
    %v1857 = vadd.f32 %v1855, %v1856
    %v1858 = vtanh.pop %v1857
    %v1859 = vmul.f32 %v1854, %v1858
    %v1860 = vsel %vm106, %v641, %v1859
    %v1861 = vsel %vm106, %v815, %v1685
    %v1862 = vsel %vm106, %v989, %v1511
    %v1863 = vsel %vm106, %v1163, %v1337
    %v1864 = vsel %vm106, %v1337, %v1163
    %v1865 = vsel %vm106, %v1511, %v989
    %v1866 = vsel %vm106, %v1685, %v815
    %v1867 = vsel %vm106, %v1859, %v641
    %v1868 = vld [vmem:[#allocation5] sm:$0xff]
    %v1869 = vld [vmem:[#allocation5 + $0x8] sm:$0xff]
    %v1870 = vld [vmem:[#allocation5 + $0x10] sm:$0xff]
    %v1871 = vld [vmem:[#allocation5 + $0x18] sm:$0xff]
    %v1872 = vld [vmem:[#allocation5 + $0x20] sm:$0xff]
    %v1873 = vld [vmem:[#allocation5 + $0x28] sm:$0xff]
    %v1874 = vld [vmem:[#allocation5 + $0x30] sm:$0xff]
    %v1875 = vld [vmem:[#allocation5 + $0x38] sm:$0xff]
    %v1876 = vld [vmem:[#allocation5 + $0x40] sm:$0xff]
    %v1877 = vld [vmem:[#allocation5 + $0x48] sm:$0xff]
    %v1878 = vld [vmem:[#allocation5 + $0x50] sm:$0xff]
    %v1879 = vld [vmem:[#allocation5 + $0x58] sm:$0xff]
    %v1880 = vld [vmem:[#allocation5 + $0x60] sm:$0xff]
    %v1881 = vld [vmem:[#allocation5 + $0x68] sm:$0xff]
    %v1882 = vld [vmem:[#allocation5 + $0x70] sm:$0xff]
    %v1883 = vld [vmem:[#allocation5 + $0x78] sm:$0xff]
    %v1884 = vld [vmem:[#allocation5 + $0x80] sm:$0xff]
    %v1885 = vld [vmem:[#allocation5 + $0x88] sm:$0xff]
    %v1886 = vld [vmem:[#allocation5 + $0x90] sm:$0xff]
    %v1887 = vld [vmem:[#allocation5 + $0x98] sm:$0xff]
    %v1888 = vld [vmem:[#allocation5 + $0xa0] sm:$0xff]
    %v1889 = vld [vmem:[#allocation5 + $0xa8] sm:$0xff]
    %v1890 = vld [vmem:[#allocation5 + $0xb0] sm:$0xff]
    %v1891 = vld [vmem:[#allocation5 + $0xb8] sm:$0xff]
    %v1892 = vld [vmem:[#allocation5 + $0xc0] sm:$0xff]
    %v1893 = vld [vmem:[#allocation5 + $0xc8] sm:$0xff]
    %v1894 = vld [vmem:[#allocation5 + $0xd0] sm:$0xff]
    %v1895 = vld [vmem:[#allocation5 + $0xd8] sm:$0xff]
    %v1896 = vld [vmem:[#allocation5 + $0xe0] sm:$0xff]
    %v1897 = vld [vmem:[#allocation5 + $0xe8] sm:$0xff]
    %v1898 = vld [vmem:[#allocation5 + $0xf0] sm:$0xff]
    %v1899 = vld [vmem:[#allocation5 + $0xf8] sm:$0xff]
    %v1900 = vld [vmem:[#allocation5 + $0x100] sm:$0xff]
    %v1901 = vld [vmem:[#allocation5 + $0x108] sm:$0xff]
    %v1902 = vld [vmem:[#allocation5 + $0x110] sm:$0xff]
    %v1903 = vld [vmem:[#allocation5 + $0x118] sm:$0xff]
    %v1904 = vld [vmem:[#allocation5 + $0x120] sm:$0xff]
    %v1905 = vld [vmem:[#allocation5 + $0x128] sm:$0xff]
    %v1906 = vld [vmem:[#allocation5 + $0x130] sm:$0xff]
    %v1907 = vld [vmem:[#allocation5 + $0x138] sm:$0xff]
    %v1908 = vld [vmem:[#allocation5 + $0x140] sm:$0xff]
    %v1909 = vld [vmem:[#allocation5 + $0x148] sm:$0xff]
    %v1910 = vld [vmem:[#allocation5 + $0x150] sm:$0xff]
    %v1911 = vld [vmem:[#allocation5 + $0x158] sm:$0xff]
    %v1912 = vld [vmem:[#allocation5 + $0x160] sm:$0xff]
    %v1913 = vld [vmem:[#allocation5 + $0x168] sm:$0xff]
    %v1914 = vld [vmem:[#allocation5 + $0x170] sm:$0xff]
    %v1915 = vld [vmem:[#allocation5 + $0x178] sm:$0xff]
    %v1916 = vld [vmem:[#allocation5 + $0x180] sm:$0xff]
    %v1917 = vld [vmem:[#allocation5 + $0x188] sm:$0xff]
    %v1918 = vld [vmem:[#allocation5 + $0x190] sm:$0xff]
    %v1919 = vld [vmem:[#allocation5 + $0x198] sm:$0xff]
    %v1920 = vld [vmem:[#allocation5 + $0x1a0] sm:$0xff]
    %v1921 = vld [vmem:[#allocation5 + $0x1a8] sm:$0xff]
    %v1922 = vld [vmem:[#allocation5 + $0x1b0] sm:$0xff]
    %v1923 = vld [vmem:[#allocation5 + $0x1b8] sm:$0xff]
    %v1924 = vld [vmem:[#allocation5 + $0x1c0] sm:$0xff]
    %v1925 = vld [vmem:[#allocation5 + $0x1c8] sm:$0xff]
    %v1926 = vld [vmem:[#allocation5 + $0x1d0] sm:$0xff]
    %v1927 = vld [vmem:[#allocation5 + $0x1d8] sm:$0xff]
    %v1928 = vld [vmem:[#allocation5 + $0x1e0] sm:$0xff]
    %v1929 = vld [vmem:[#allocation5 + $0x1e8] sm:$0xff]
    %v1930 = vld [vmem:[#allocation5 + $0x1f0] sm:$0xff]
    %v1931 = vld [vmem:[#allocation5 + $0x1f8] sm:$0xff]
    %v1932 = vld [vmem:[%s5] sm:$0xf]
    %v1934 = vlaneseq
    %v1935 = vshrl.u32 %v1934, 7
    %v1936 = vsub.s32 0, %v1935
    %v1937 = vrot.slane %v1932, %v1936
    %v1938 = vlaneseq
    %v1939 = vshrl.u32 %v1938, 7
    %v1940 = vsub.s32 1, %v1939
    %v1941 = vrot.slane %v1932, %v1940
    %v1942 = vlaneseq
    %v1943 = vshrl.u32 %v1942, 7
    %v1944 = vsub.s32 2, %v1943
    %v1945 = vrot.slane %v1932, %v1944
    %v1946 = vlaneseq
    %v1947 = vshrl.u32 %v1946, 7
    %v1948 = vsub.s32 3, %v1947
    %v1949 = vrot.slane %v1932, %v1948
    %1954 = vmatprep.subr.mxu0 %v1869
    %1955 = vmatpush1.msra.mxu0 %v1868
    %1956 = vmatprep.subr.mxu0 %v1873
    %1957 = vmatpush1.msra.mxu0 %v1872
    %1958 = vmatprep.subr.mxu0 %v1877
    %1959 = vmatpush1.msra.mxu0 %v1876
    %1960 = vmatprep.subr.mxu0 %v1881
    %1961 = vmatpush1.msra.mxu0 %v1880
    %1962 = vmatprep.subr.mxu0 %v1885
    %1963 = vmatpush1.msra.mxu0 %v1884
    %1964 = vmatprep.subr.mxu0 %v1889
    %1965 = vmatpush1.msra.mxu0 %v1888
    %1966 = vmatprep.subr.mxu0 %v1893
    %1967 = vmatpush1.msra.mxu0 %v1892
    %1968 = vmatprep.subr.mxu0 %v1897
    %1969 = vmatpush1.msra.mxu0 %v1896
    %1970 = vmatprep.subr.mxu0 %v1901
    %1971 = vmatpush1.msra.mxu0 %v1900
    %1972 = vmatprep.subr.mxu0 %v1905
    %1973 = vmatpush1.msra.mxu0 %v1904
    %1974 = vmatprep.subr.mxu0 %v1909
    %1975 = vmatpush1.msra.mxu0 %v1908
    %1976 = vmatprep.subr.mxu0 %v1913
    %1977 = vmatpush1.msra.mxu0 %v1912
    %1978 = vmatprep.subr.mxu0 %v1917
    %1979 = vmatpush1.msra.mxu0 %v1916
    %1980 = vmatprep.subr.mxu0 %v1921
    %1981 = vmatpush1.msra.mxu0 %v1920
    %1982 = vmatprep.subr.mxu0 %v1925
    %1983 = vmatpush1.msra.mxu0 %v1924
    %1984 = vmatprep.subr.mxu0 %v1929
    %1985 = vmatpush1.msra.mxu0 %v1928
    %1986 = vmatprep.subr.mxu0 0.0
    %1987 = vmatpush1.msra.mxu0 0.0
    %1988 = vmatprep.subr.mxu0 0.0
    %1989 = vmatpush1.msra.mxu0 0.0
    %1990 = vmatprep.subr.mxu0 0.0
    %1991 = vmatpush1.msra.mxu0 0.0
    %1992 = vmatprep.subr.mxu0 0.0
    %1993 = vmatpush1.msra.mxu0 0.0
    %1994 = vmatprep.subr.mxu0 0.0
    %1995 = vmatpush1.msra.mxu0 0.0
    %1996 = vmatprep.subr.mxu0 0.0
    %1997 = vmatpush1.msra.mxu0 0.0
    %1998 = vmatprep.subr.mxu0 0.0
    %1999 = vmatpush1.msra.mxu0 0.0
    %2000 = vmatprep.subr.mxu0 0.0
    %2001 = vmatpush1.msra.mxu0 0.0
    %2002 = vmatprep.subr.mxu0 0.0
    %2003 = vmatpush1.msra.mxu0 0.0
    %2004 = vmatprep.subr.mxu0 0.0
    %2005 = vmatpush1.msra.mxu0 0.0
    %2006 = vmatprep.subr.mxu0 0.0
    %2007 = vmatpush1.msra.mxu0 0.0
    %2008 = vmatprep.subr.mxu0 0.0
    %2009 = vmatpush1.msra.mxu0 0.0
    %2010 = vmatprep.subr.mxu0 0.0
    %2011 = vmatpush1.msra.mxu0 0.0
    %2012 = vmatprep.subr.mxu0 0.0
    %2013 = vmatpush1.msra.mxu0 0.0
    %2014 = vmatprep.subr.mxu0 0.0
    %2015 = vmatpush1.msra.mxu0 0.0
    %2016 = vmatprep.subr.mxu0 0.0
    %2017 = vmatpush1.msra.mxu0 0.0
    %2018 = vmatprep.mubr.f32.mxu0 0.0
    %2019 = vmatmul.mubr.f32.gmra.mrb[0].mxu0 %v1860
    %v2020 = vpop.f32.mrb[0].mxu0
    %v2021 = vadd.f32 %v1937, %v2020
    %v2022 = vpop.f32.mrb[0].mxu0
    %v2023 = vadd.f32 %v1941, %v2022
    %2024 = vmatprep.mubr.f32.mxu0 0.0
    %2025 = vmatmul.mubr.f32.gmra.mrb[0].mxu0 %v1861
    %v2026 = vpop.f32.mrb[0].mxu0
    %v2027 = vadd.f32 %v1937, %v2026
    %v2028 = vpop.f32.mrb[0].mxu0
    %v2029 = vadd.f32 %v1941, %v2028
    %2030 = vmatprep.mubr.f32.mxu0 0.0
    %2031 = vmatmul.mubr.f32.gmra.mrb[0].mxu0 %v1862
    %v2032 = vpop.f32.mrb[0].mxu0
    %v2033 = vadd.f32 %v1937, %v2032
    %v2034 = vpop.f32.mrb[0].mxu0
    %v2035 = vadd.f32 %v1941, %v2034
    %2036 = vmatprep.mubr.f32.mxu0 0.0
    %2037 = vmatmul.mubr.f32.gmra.mrb[0].mxu0 %v1863
    %v2038 = vpop.f32.mrb[0].mxu0
    %v2039 = vadd.f32 %v1937, %v2038
    %v2040 = vpop.f32.mrb[0].mxu0
    %v2041 = vadd.f32 %v1941, %v2040
    %2042 = vmatprep.mubr.f32.mxu0 0.0
    %2043 = vmatmul.mubr.f32.gmra.mrb[0].mxu0 %v1864
    %v2044 = vpop.f32.mrb[0].mxu0
    %v2045 = vadd.f32 %v1937, %v2044
    %v2046 = vpop.f32.mrb[0].mxu0
    %v2047 = vadd.f32 %v1941, %v2046
    %2048 = vmatprep.mubr.f32.mxu0 0.0
    %2049 = vmatmul.mubr.f32.gmra.mrb[0].mxu0 %v1865
    %v2050 = vpop.f32.mrb[0].mxu0
    %v2051 = vadd.f32 %v1937, %v2050
    %v2052 = vpop.f32.mrb[0].mxu0
    %v2053 = vadd.f32 %v1941, %v2052
    %2054 = vmatprep.mubr.f32.mxu0 0.0
    %2055 = vmatmul.mubr.f32.gmra.mrb[0].mxu0 %v1866
    %v2056 = vpop.f32.mrb[0].mxu0
    %v2057 = vadd.f32 %v1937, %v2056
    %v2058 = vpop.f32.mrb[0].mxu0
    %v2059 = vadd.f32 %v1941, %v2058
    %2060 = vmatprep.mubr.f32.mxu0 0.0
    %2061 = vmatmul.mubr.f32.gmra.mrb[0].mxu0 %v1867
    %v2062 = vpop.f32.mrb[0].mxu0
    %v2063 = vadd.f32 %v1937, %v2062
    %v2064 = vpop.f32.mrb[0].mxu0
    %v2065 = vadd.f32 %v1941, %v2064
    %2066 = vdwg.mxu0
    %2067 = vmatprep.subr.mxu0 %v1871
    %2068 = vmatpush1.msra.mxu0 %v1870
    %2069 = vmatprep.subr.mxu0 %v1875
    %2070 = vmatpush1.msra.mxu0 %v1874
    %2071 = vmatprep.subr.mxu0 %v1879
    %2072 = vmatpush1.msra.mxu0 %v1878
    %2073 = vmatprep.subr.mxu0 %v1883
    %2074 = vmatpush1.msra.mxu0 %v1882
    %2075 = vmatprep.subr.mxu0 %v1887
    %2076 = vmatpush1.msra.mxu0 %v1886
    %2077 = vmatprep.subr.mxu0 %v1891
    %2078 = vmatpush1.msra.mxu0 %v1890
    %2079 = vmatprep.subr.mxu0 %v1895
    %2080 = vmatpush1.msra.mxu0 %v1894
    %2081 = vmatprep.subr.mxu0 %v1899
    %2082 = vmatpush1.msra.mxu0 %v1898
    %2083 = vmatprep.subr.mxu0 %v1903
    %2084 = vmatpush1.msra.mxu0 %v1902
    %2085 = vmatprep.subr.mxu0 %v1907
    %2086 = vmatpush1.msra.mxu0 %v1906
    %2087 = vmatprep.subr.mxu0 %v1911
    %2088 = vmatpush1.msra.mxu0 %v1910
    %2089 = vmatprep.subr.mxu0 %v1915
    %2090 = vmatpush1.msra.mxu0 %v1914
    %2091 = vmatprep.subr.mxu0 %v1919
    %2092 = vmatpush1.msra.mxu0 %v1918
    %2093 = vmatprep.subr.mxu0 %v1923
    %2094 = vmatpush1.msra.mxu0 %v1922
    %2095 = vmatprep.subr.mxu0 %v1927
    %2096 = vmatpush1.msra.mxu0 %v1926
    %2097 = vmatprep.subr.mxu0 %v1931
    %2098 = vmatpush1.msra.mxu0 %v1930
    %2099 = vmatprep.subr.mxu0 0.0
    %2100 = vmatpush1.msra.mxu0 0.0
    %2101 = vmatprep.subr.mxu0 0.0
    %2102 = vmatpush1.msra.mxu0 0.0
    %2103 = vmatprep.subr.mxu0 0.0
    %2104 = vmatpush1.msra.mxu0 0.0
    %2105 = vmatprep.subr.mxu0 0.0
    %2106 = vmatpush1.msra.mxu0 0.0
    %2107 = vmatprep.subr.mxu0 0.0
    %2108 = vmatpush1.msra.mxu0 0.0
    %2109 = vmatprep.subr.mxu0 0.0
    %2110 = vmatpush1.msra.mxu0 0.0
    %2111 = vmatprep.subr.mxu0 0.0
    %2112 = vmatpush1.msra.mxu0 0.0
    %2113 = vmatprep.subr.mxu0 0.0
    %2114 = vmatpush1.msra.mxu0 0.0
    %2115 = vmatprep.subr.mxu0 0.0
    %2116 = vmatpush1.msra.mxu0 0.0
    %2117 = vmatprep.subr.mxu0 0.0
    %2118 = vmatpush1.msra.mxu0 0.0
    %2119 = vmatprep.subr.mxu0 0.0
    %2120 = vmatpush1.msra.mxu0 0.0
    %2121 = vmatprep.subr.mxu0 0.0
    %2122 = vmatpush1.msra.mxu0 0.0
    %2123 = vmatprep.subr.mxu0 0.0
    %2124 = vmatpush1.msra.mxu0 0.0
    %2125 = vmatprep.subr.mxu0 0.0
    %2126 = vmatpush1.msra.mxu0 0.0
    %2127 = vmatprep.subr.mxu0 0.0
    %2128 = vmatpush1.msra.mxu0 0.0
    %2129 = vmatprep.subr.mxu0 0.0
    %2130 = vmatpush1.msra.mxu0 0.0
    %2131 = vmatprep.mubr.f32.mxu0 0.0
    %2132 = vmatmul.mubr.f32.gmra.mrb[0].mxu0 %v1860
    %v2133 = vpop.f32.mrb[0].mxu0
    %v2134 = vadd.f32 %v1945, %v2133
    %v2135 = vpop.f32.mrb[0].mxu0
    %v2136 = vadd.f32 %v1949, %v2135
    %2137 = vmatprep.mubr.f32.mxu0 0.0
    %2138 = vmatmul.mubr.f32.gmra.mrb[0].mxu0 %v1861
    %v2139 = vpop.f32.mrb[0].mxu0
    %v2140 = vadd.f32 %v1945, %v2139
    %v2141 = vpop.f32.mrb[0].mxu0
    %v2142 = vadd.f32 %v1949, %v2141
    %2143 = vmatprep.mubr.f32.mxu0 0.0
    %2144 = vmatmul.mubr.f32.gmra.mrb[0].mxu0 %v1862
    %v2145 = vpop.f32.mrb[0].mxu0
    %v2146 = vadd.f32 %v1945, %v2145
    %v2147 = vpop.f32.mrb[0].mxu0
    %v2148 = vadd.f32 %v1949, %v2147
    %2149 = vmatprep.mubr.f32.mxu0 0.0
    %2150 = vmatmul.mubr.f32.gmra.mrb[0].mxu0 %v1863
    %v2151 = vpop.f32.mrb[0].mxu0
    %v2152 = vadd.f32 %v1945, %v2151
    %v2153 = vpop.f32.mrb[0].mxu0
    %v2154 = vadd.f32 %v1949, %v2153
    %2155 = vmatprep.mubr.f32.mxu0 0.0
    %2156 = vmatmul.mubr.f32.gmra.mrb[0].mxu0 %v1864
    %v2157 = vpop.f32.mrb[0].mxu0
    %v2158 = vadd.f32 %v1945, %v2157
    %v2159 = vpop.f32.mrb[0].mxu0
    %v2160 = vadd.f32 %v1949, %v2159
    %2161 = vmatprep.mubr.f32.mxu0 0.0
    %2162 = vmatmul.mubr.f32.gmra.mrb[0].mxu0 %v1865
    %v2163 = vpop.f32.mrb[0].mxu0
    %v2164 = vadd.f32 %v1945, %v2163
    %v2165 = vpop.f32.mrb[0].mxu0
    %v2166 = vadd.f32 %v1949, %v2165
    %2167 = vmatprep.mubr.f32.mxu0 0.0
    %2168 = vmatmul.mubr.f32.gmra.mrb[0].mxu0 %v1866
    %v2169 = vpop.f32.mrb[0].mxu0
    %v2170 = vadd.f32 %v1945, %v2169
    %v2171 = vpop.f32.mrb[0].mxu0
    %v2172 = vadd.f32 %v1949, %v2171
    %2173 = vmatprep.mubr.f32.mxu0 0.0
    %2174 = vmatmul.mubr.f32.gmra.mrb[0].mxu0 %v1867
    %v2175 = vpop.f32.mrb[0].mxu0
    %v2176 = vadd.f32 %v1945, %v2175
    %v2177 = vpop.f32.mrb[0].mxu0
    %v2178 = vadd.f32 %v1949, %v2177
    %2179 = vdwg.mxu0
    %v2180 = vld [vmem:[#allocation7] sm:$0xff]
    %v2181 = vld [vmem:[#allocation7 + $0x8] sm:$0xff]
    %v2182 = vld [vmem:[#allocation7 + $0x10] sm:$0xff]
    %v2183 = vld [vmem:[#allocation7 + $0x18] sm:$0xff]
    %v2184 = vld [vmem:[#allocation7 + $0x20] sm:$0xff]
    %v2185 = vld [vmem:[#allocation7 + $0x28] sm:$0xff]
    %v2186 = vld [vmem:[#allocation7 + $0x30] sm:$0xff]
    %v2187 = vld [vmem:[#allocation7 + $0x38] sm:$0xff]
    %v2188 = vld [vmem:[#allocation7 + $0x40] sm:$0xff]
    %v2189 = vld [vmem:[#allocation7 + $0x48] sm:$0xff]
    %v2190 = vld [vmem:[#allocation7 + $0x50] sm:$0xff]
    %v2191 = vld [vmem:[#allocation7 + $0x58] sm:$0xff]
    %v2192 = vld [vmem:[#allocation7 + $0x60] sm:$0xff]
    %v2193 = vld [vmem:[#allocation7 + $0x68] sm:$0xff]
    %v2194 = vld [vmem:[#allocation7 + $0x70] sm:$0xff]
    %v2195 = vld [vmem:[#allocation7 + $0x78] sm:$0xff]
    %v2196 = vld [vmem:[#allocation7 + $0x80] sm:$0xff]
    %v2197 = vld [vmem:[#allocation7 + $0x88] sm:$0xff]
    %v2198 = vld [vmem:[#allocation7 + $0x90] sm:$0xff]
    %v2199 = vld [vmem:[#allocation7 + $0x98] sm:$0xff]
    %v2200 = vld [vmem:[#allocation7 + $0xa0] sm:$0xff]
    %v2201 = vld [vmem:[#allocation7 + $0xa8] sm:$0xff]
    %v2202 = vld [vmem:[#allocation7 + $0xb0] sm:$0xff]
    %v2203 = vld [vmem:[#allocation7 + $0xb8] sm:$0xff]
    %v2204 = vld [vmem:[#allocation7 + $0xc0] sm:$0xff]
    %v2205 = vld [vmem:[#allocation7 + $0xc8] sm:$0xff]
    %v2206 = vld [vmem:[#allocation7 + $0xd0] sm:$0xff]
    %v2207 = vld [vmem:[#allocation7 + $0xd8] sm:$0xff]
    %v2208 = vld [vmem:[#allocation7 + $0xe0] sm:$0xff]
    %v2209 = vld [vmem:[#allocation7 + $0xe8] sm:$0xff]
    %v2210 = vld [vmem:[#allocation7 + $0xf0] sm:$0xff]
    %v2211 = vld [vmem:[#allocation7 + $0xf8] sm:$0xff]
    %v2212 = vld [vmem:[#allocation7 + $0x100] sm:$0xff]
    %v2213 = vld [vmem:[#allocation7 + $0x108] sm:$0xff]
    %v2214 = vld [vmem:[#allocation7 + $0x110] sm:$0xff]
    %v2215 = vld [vmem:[#allocation7 + $0x118] sm:$0xff]
    %v2216 = vld [vmem:[#allocation7 + $0x120] sm:$0xff]
    %v2217 = vld [vmem:[#allocation7 + $0x128] sm:$0xff]
    %v2218 = vld [vmem:[#allocation7 + $0x130] sm:$0xff]
    %v2219 = vld [vmem:[#allocation7 + $0x138] sm:$0xff]
    %v2220 = vld [vmem:[#allocation7 + $0x140] sm:$0xff]
    %v2221 = vld [vmem:[#allocation7 + $0x148] sm:$0xff]
    %v2222 = vld [vmem:[#allocation7 + $0x150] sm:$0xff]
    %v2223 = vld [vmem:[#allocation7 + $0x158] sm:$0xff]
    %v2224 = vld [vmem:[#allocation7 + $0x160] sm:$0xff]
    %v2225 = vld [vmem:[#allocation7 + $0x168] sm:$0xff]
    %v2226 = vld [vmem:[#allocation7 + $0x170] sm:$0xff]
    %v2227 = vld [vmem:[#allocation7 + $0x178] sm:$0xff]
    %v2228 = vld [vmem:[#allocation7 + $0x180] sm:$0xff]
    %v2229 = vld [vmem:[#allocation7 + $0x188] sm:$0xff]
    %v2230 = vld [vmem:[#allocation7 + $0x190] sm:$0xff]
    %v2231 = vld [vmem:[#allocation7 + $0x198] sm:$0xff]
    %v2232 = vld [vmem:[#allocation7 + $0x1a0] sm:$0xff]
    %v2233 = vld [vmem:[#allocation7 + $0x1a8] sm:$0xff]
    %v2234 = vld [vmem:[#allocation7 + $0x1b0] sm:$0xff]
    %v2235 = vld [vmem:[#allocation7 + $0x1b8] sm:$0xff]
    %v2236 = vld [vmem:[#allocation7 + $0x1c0] sm:$0xff]
    %v2237 = vld [vmem:[#allocation7 + $0x1c8] sm:$0xff]
    %v2238 = vld [vmem:[#allocation7 + $0x1d0] sm:$0xff]
    %v2239 = vld [vmem:[#allocation7 + $0x1d8] sm:$0xff]
    %v2240 = vld [vmem:[#allocation7 + $0x1e0] sm:$0xff]
    %v2241 = vld [vmem:[#allocation7 + $0x1e8] sm:$0xff]
    %v2242 = vld [vmem:[#allocation7 + $0x1f0] sm:$0xff]
    %v2243 = vld [vmem:[#allocation7 + $0x1f8] sm:$0xff]
    %v2244 = vsel %vm106, %v2021, %v2063
    %v2245 = vsel %vm106, %v2023, %v2065
    %v2246 = vsel %vm106, %v2134, %v2176
    %v2247 = vsel %vm106, %v2136, %v2178
    %2248 = vmatprep.subr.mxu0 %v2181
    %2249 = vmatpush1.msra.mxu0 %v2180
    %2250 = vmatprep.subr.mxu0 %v2185
    %2251 = vmatpush1.msra.mxu0 %v2184
    %2252 = vmatprep.subr.mxu0 %v2189
    %2253 = vmatpush1.msra.mxu0 %v2188
    %2254 = vmatprep.subr.mxu0 %v2193
    %2255 = vmatpush1.msra.mxu0 %v2192
    %2256 = vmatprep.subr.mxu0 %v2197
    %2257 = vmatpush1.msra.mxu0 %v2196
    %2258 = vmatprep.subr.mxu0 %v2201
    %2259 = vmatpush1.msra.mxu0 %v2200
    %2260 = vmatprep.subr.mxu0 %v2205
    %2261 = vmatpush1.msra.mxu0 %v2204
    %2262 = vmatprep.subr.mxu0 %v2209
    %2263 = vmatpush1.msra.mxu0 %v2208
    %2264 = vmatprep.subr.mxu0 %v2213
    %2265 = vmatpush1.msra.mxu0 %v2212
    %2266 = vmatprep.subr.mxu0 %v2217
    %2267 = vmatpush1.msra.mxu0 %v2216
    %2268 = vmatprep.subr.mxu0 %v2221
    %2269 = vmatpush1.msra.mxu0 %v2220
    %2270 = vmatprep.subr.mxu0 %v2225
    %2271 = vmatpush1.msra.mxu0 %v2224
    %2272 = vmatprep.subr.mxu0 %v2229
    %2273 = vmatpush1.msra.mxu0 %v2228
    %2274 = vmatprep.subr.mxu0 %v2233
    %2275 = vmatpush1.msra.mxu0 %v2232
    %2276 = vmatprep.subr.mxu0 %v2237
    %2277 = vmatpush1.msra.mxu0 %v2236
    %2278 = vmatprep.subr.mxu0 %v2241
    %2279 = vmatpush1.msra.mxu0 %v2240
    %2280 = vmatprep.subr.mxu0 0.0
    %2281 = vmatpush1.msra.mxu0 0.0
    %2282 = vmatprep.subr.mxu0 0.0
    %2283 = vmatpush1.msra.mxu0 0.0
    %2284 = vmatprep.subr.mxu0 0.0
    %2285 = vmatpush1.msra.mxu0 0.0
    %2286 = vmatprep.subr.mxu0 0.0
    %2287 = vmatpush1.msra.mxu0 0.0
    %2288 = vmatprep.subr.mxu0 0.0
    %2289 = vmatpush1.msra.mxu0 0.0
    %2290 = vmatprep.subr.mxu0 0.0
    %2291 = vmatpush1.msra.mxu0 0.0
    %2292 = vmatprep.subr.mxu0 0.0
    %2293 = vmatpush1.msra.mxu0 0.0
    %2294 = vmatprep.subr.mxu0 0.0
    %2295 = vmatpush1.msra.mxu0 0.0
    %2296 = vmatprep.subr.mxu0 0.0
    %2297 = vmatpush1.msra.mxu0 0.0
    %2298 = vmatprep.subr.mxu0 0.0
    %2299 = vmatpush1.msra.mxu0 0.0
    %2300 = vmatprep.subr.mxu0 0.0
    %2301 = vmatpush1.msra.mxu0 0.0
    %2302 = vmatprep.subr.mxu0 0.0
    %2303 = vmatpush1.msra.mxu0 0.0
    %2304 = vmatprep.subr.mxu0 0.0
    %2305 = vmatpush1.msra.mxu0 0.0
    %2306 = vmatprep.subr.mxu0 0.0
    %2307 = vmatpush1.msra.mxu0 0.0
    %2308 = vmatprep.subr.mxu0 0.0
    %2309 = vmatpush1.msra.mxu0 0.0
    %2310 = vmatprep.subr.mxu0 0.0
    %2311 = vmatpush1.msra.mxu0 0.0
    %2312 = vmatprep.mubr.f32.mxu0 0.0
    %2313 = vmatmul.mubr.f32.gmra.mrb[0].mxu0 0.0
    %v2314 = vpop.f32.mrb[0].mxu0
    %v2315 = vadd.f32 0.0, %v2314
    %v2316 = vpop.f32.mrb[0].mxu0
    %v2317 = vadd.f32 0.0, %v2316
    %2318 = vdwg.mxu0
    %2319 = vmatprep.subr.mxu0 %v2183
    %2320 = vmatpush1.msra.mxu0 %v2182
    %2321 = vmatprep.subr.mxu0 %v2187
    %2322 = vmatpush1.msra.mxu0 %v2186
    %2323 = vmatprep.subr.mxu0 %v2191
    %2324 = vmatpush1.msra.mxu0 %v2190
    %2325 = vmatprep.subr.mxu0 %v2195
    %2326 = vmatpush1.msra.mxu0 %v2194
    %2327 = vmatprep.subr.mxu0 %v2199
    %2328 = vmatpush1.msra.mxu0 %v2198
    %2329 = vmatprep.subr.mxu0 %v2203
    %2330 = vmatpush1.msra.mxu0 %v2202
    %2331 = vmatprep.subr.mxu0 %v2207
    %2332 = vmatpush1.msra.mxu0 %v2206
    %2333 = vmatprep.subr.mxu0 %v2211
    %2334 = vmatpush1.msra.mxu0 %v2210
    %2335 = vmatprep.subr.mxu0 %v2215
    %2336 = vmatpush1.msra.mxu0 %v2214
    %2337 = vmatprep.subr.mxu0 %v2219
    %2338 = vmatpush1.msra.mxu0 %v2218
    %2339 = vmatprep.subr.mxu0 %v2223
    %2340 = vmatpush1.msra.mxu0 %v2222
    %2341 = vmatprep.subr.mxu0 %v2227
    %2342 = vmatpush1.msra.mxu0 %v2226
    %2343 = vmatprep.subr.mxu0 %v2231
    %2344 = vmatpush1.msra.mxu0 %v2230
    %2345 = vmatprep.subr.mxu0 %v2235
    %2346 = vmatpush1.msra.mxu0 %v2234
    %2347 = vmatprep.subr.mxu0 %v2239
    %2348 = vmatpush1.msra.mxu0 %v2238
    %2349 = vmatprep.subr.mxu0 %v2243
    %2350 = vmatpush1.msra.mxu0 %v2242
    %2351 = vmatprep.subr.mxu0 0.0
    %2352 = vmatpush1.msra.mxu0 0.0
    %2353 = vmatprep.subr.mxu0 0.0
    %2354 = vmatpush1.msra.mxu0 0.0
    %2355 = vmatprep.subr.mxu0 0.0
    %2356 = vmatpush1.msra.mxu0 0.0
    %2357 = vmatprep.subr.mxu0 0.0
    %2358 = vmatpush1.msra.mxu0 0.0
    %2359 = vmatprep.subr.mxu0 0.0
    %2360 = vmatpush1.msra.mxu0 0.0
    %2361 = vmatprep.subr.mxu0 0.0
    %2362 = vmatpush1.msra.mxu0 0.0
    %2363 = vmatprep.subr.mxu0 0.0
    %2364 = vmatpush1.msra.mxu0 0.0
    %2365 = vmatprep.subr.mxu0 0.0
    %2366 = vmatpush1.msra.mxu0 0.0
    %2367 = vmatprep.subr.mxu0 0.0
    %2368 = vmatpush1.msra.mxu0 0.0
    %2369 = vmatprep.subr.mxu0 0.0
    %2370 = vmatpush1.msra.mxu0 0.0
    %2371 = vmatprep.subr.mxu0 0.0
    %2372 = vmatpush1.msra.mxu0 0.0
    %2373 = vmatprep.subr.mxu0 0.0
    %2374 = vmatpush1.msra.mxu0 0.0
    %2375 = vmatprep.subr.mxu0 0.0
    %2376 = vmatpush1.msra.mxu0 0.0
    %2377 = vmatprep.subr.mxu0 0.0
    %2378 = vmatpush1.msra.mxu0 0.0
    %2379 = vmatprep.subr.mxu0 0.0
    %2380 = vmatpush1.msra.mxu0 0.0
    %2381 = vmatprep.subr.mxu0 0.0
    %2382 = vmatpush1.msra.mxu0 0.0
    %2383 = vmatprep.mubr.f32.mxu0 0.0
    %2384 = vmatmul.mubr.f32.gmra.mrb[0].mxu0 0.0
    %v2385 = vpop.f32.mrb[0].mxu0
    %v2386 = vadd.f32 0.0, %v2385
    %v2387 = vpop.f32.mrb[0].mxu0
    %v2388 = vadd.f32 0.0, %v2387
    %2389 = vdwg.mxu0
    %v2390 = vadd.f32 %v2244, %v2315
    %v2391 = vadd.f32 %v2245, %v2317
    %v2392 = vadd.f32 %v2246, %v2386
    %v2393 = vadd.f32 %v2247, %v2388
    %v2394 = vxor.u32 %v2390, 2147483648
    %v2395 = vmul.f32 %v2394, 1.442695
    %v2396 = vpow.pop %v2395
    %v2397 = vadd.f32 %v2396, 1.0
    %v2398 = vrcp.pop %v2397
    %v2399 = vmul.f32 1.0, %v2398
    %v2400 = vxor.u32 %v2391, 2147483648
    %v2401 = vmul.f32 %v2400, 1.442695
    %v2402 = vpow.pop %v2401
    %v2403 = vadd.f32 %v2402, 1.0
    %v2404 = vrcp.pop %v2403
    %v2405 = vmul.f32 1.0, %v2404
    %v2406 = vtanh.pop %v2392
    %v2407 = vxor.u32 %v2393, 2147483648
    %v2408 = vmul.f32 %v2407, 1.442695
    %v2409 = vpow.pop %v2408
    %v2410 = vadd.f32 %v2409, 1.0
    %v2411 = vrcp.pop %v2410
    %v2412 = vmul.f32 1.0, %v2411
    %v2413 = vmul.f32 %v2405, 0.0
    %v2414 = vmul.f32 %v2399, %v2406
    %v2415 = vadd.f32 %v2413, %v2414
    %v2416 = vtanh.pop %v2415
    %v2417 = vmul.f32 %v2412, %v2416
    %v2418 = vsel %vm106, %v2027, %v2057
    %v2419 = vsel %vm106, %v2029, %v2059
    %v2420 = vsel %vm106, %v2140, %v2170
    %v2421 = vsel %vm106, %v2142, %v2172
    %2422 = vmatprep.subr.mxu0 %v2181
    %2423 = vmatpush1.msra.mxu0 %v2180
    %2424 = vmatprep.subr.mxu0 %v2185
    %2425 = vmatpush1.msra.mxu0 %v2184
    %2426 = vmatprep.subr.mxu0 %v2189
    %2427 = vmatpush1.msra.mxu0 %v2188
    %2428 = vmatprep.subr.mxu0 %v2193
    %2429 = vmatpush1.msra.mxu0 %v2192
    %2430 = vmatprep.subr.mxu0 %v2197
    %2431 = vmatpush1.msra.mxu0 %v2196
    %2432 = vmatprep.subr.mxu0 %v2201
    %2433 = vmatpush1.msra.mxu0 %v2200
    %2434 = vmatprep.subr.mxu0 %v2205
    %2435 = vmatpush1.msra.mxu0 %v2204
    %2436 = vmatprep.subr.mxu0 %v2209
    %2437 = vmatpush1.msra.mxu0 %v2208
    %2438 = vmatprep.subr.mxu0 %v2213
    %2439 = vmatpush1.msra.mxu0 %v2212
    %2440 = vmatprep.subr.mxu0 %v2217
    %2441 = vmatpush1.msra.mxu0 %v2216
    %2442 = vmatprep.subr.mxu0 %v2221
    %2443 = vmatpush1.msra.mxu0 %v2220
    %2444 = vmatprep.subr.mxu0 %v2225
    %2445 = vmatpush1.msra.mxu0 %v2224
    %2446 = vmatprep.subr.mxu0 %v2229
    %2447 = vmatpush1.msra.mxu0 %v2228
    %2448 = vmatprep.subr.mxu0 %v2233
    %2449 = vmatpush1.msra.mxu0 %v2232
    %2450 = vmatprep.subr.mxu0 %v2237
    %2451 = vmatpush1.msra.mxu0 %v2236
    %2452 = vmatprep.subr.mxu0 %v2241
    %2453 = vmatpush1.msra.mxu0 %v2240
    %2454 = vmatprep.subr.mxu0 0.0
    %2455 = vmatpush1.msra.mxu0 0.0
    %2456 = vmatprep.subr.mxu0 0.0
    %2457 = vmatpush1.msra.mxu0 0.0
    %2458 = vmatprep.subr.mxu0 0.0
    %2459 = vmatpush1.msra.mxu0 0.0
    %2460 = vmatprep.subr.mxu0 0.0
    %2461 = vmatpush1.msra.mxu0 0.0
    %2462 = vmatprep.subr.mxu0 0.0
    %2463 = vmatpush1.msra.mxu0 0.0
    %2464 = vmatprep.subr.mxu0 0.0
    %2465 = vmatpush1.msra.mxu0 0.0
    %2466 = vmatprep.subr.mxu0 0.0
    %2467 = vmatpush1.msra.mxu0 0.0
    %2468 = vmatprep.subr.mxu0 0.0
    %2469 = vmatpush1.msra.mxu0 0.0
    %2470 = vmatprep.subr.mxu0 0.0
    %2471 = vmatpush1.msra.mxu0 0.0
    %2472 = vmatprep.subr.mxu0 0.0
    %2473 = vmatpush1.msra.mxu0 0.0
    %2474 = vmatprep.subr.mxu0 0.0
    %2475 = vmatpush1.msra.mxu0 0.0
    %2476 = vmatprep.subr.mxu0 0.0
    %2477 = vmatpush1.msra.mxu0 0.0
    %2478 = vmatprep.subr.mxu0 0.0
    %2479 = vmatpush1.msra.mxu0 0.0
    %2480 = vmatprep.subr.mxu0 0.0
    %2481 = vmatpush1.msra.mxu0 0.0
    %2482 = vmatprep.subr.mxu0 0.0
    %2483 = vmatpush1.msra.mxu0 0.0
    %2484 = vmatprep.subr.mxu0 0.0
    %2485 = vmatpush1.msra.mxu0 0.0
    %2486 = vmatprep.mubr.f32.mxu0 0.0
    %2487 = vmatmul.mubr.f32.gmra.mrb[0].mxu0 %v2417
    %v2488 = vpop.f32.mrb[0].mxu0
    %v2489 = vadd.f32 0.0, %v2488
    %v2490 = vpop.f32.mrb[0].mxu0
    %v2491 = vadd.f32 0.0, %v2490
    %2492 = vdwg.mxu0
    %2493 = vmatprep.subr.mxu0 %v2183
    %2494 = vmatpush1.msra.mxu0 %v2182
    %2495 = vmatprep.subr.mxu0 %v2187
    %2496 = vmatpush1.msra.mxu0 %v2186
    %2497 = vmatprep.subr.mxu0 %v2191
    %2498 = vmatpush1.msra.mxu0 %v2190
    %2499 = vmatprep.subr.mxu0 %v2195
    %2500 = vmatpush1.msra.mxu0 %v2194
    %2501 = vmatprep.subr.mxu0 %v2199
    %2502 = vmatpush1.msra.mxu0 %v2198
    %2503 = vmatprep.subr.mxu0 %v2203
    %2504 = vmatpush1.msra.mxu0 %v2202
    %2505 = vmatprep.subr.mxu0 %v2207
    %2506 = vmatpush1.msra.mxu0 %v2206
    %2507 = vmatprep.subr.mxu0 %v2211
    %2508 = vmatpush1.msra.mxu0 %v2210
    %2509 = vmatprep.subr.mxu0 %v2215
    %2510 = vmatpush1.msra.mxu0 %v2214
    %2511 = vmatprep.subr.mxu0 %v2219
    %2512 = vmatpush1.msra.mxu0 %v2218
    %2513 = vmatprep.subr.mxu0 %v2223
    %2514 = vmatpush1.msra.mxu0 %v2222
    %2515 = vmatprep.subr.mxu0 %v2227
    %2516 = vmatpush1.msra.mxu0 %v2226
    %2517 = vmatprep.subr.mxu0 %v2231
    %2518 = vmatpush1.msra.mxu0 %v2230
    %2519 = vmatprep.subr.mxu0 %v2235
    %2520 = vmatpush1.msra.mxu0 %v2234
    %2521 = vmatprep.subr.mxu0 %v2239
    %2522 = vmatpush1.msra.mxu0 %v2238
    %2523 = vmatprep.subr.mxu0 %v2243
    %2524 = vmatpush1.msra.mxu0 %v2242
    %2525 = vmatprep.subr.mxu0 0.0
    %2526 = vmatpush1.msra.mxu0 0.0
    %2527 = vmatprep.subr.mxu0 0.0
    %2528 = vmatpush1.msra.mxu0 0.0
    %2529 = vmatprep.subr.mxu0 0.0
    %2530 = vmatpush1.msra.mxu0 0.0
    %2531 = vmatprep.subr.mxu0 0.0
    %2532 = vmatpush1.msra.mxu0 0.0
    %2533 = vmatprep.subr.mxu0 0.0
    %2534 = vmatpush1.msra.mxu0 0.0
    %2535 = vmatprep.subr.mxu0 0.0
    %2536 = vmatpush1.msra.mxu0 0.0
    %2537 = vmatprep.subr.mxu0 0.0
    %2538 = vmatpush1.msra.mxu0 0.0
    %2539 = vmatprep.subr.mxu0 0.0
    %2540 = vmatpush1.msra.mxu0 0.0
    %2541 = vmatprep.subr.mxu0 0.0
    %2542 = vmatpush1.msra.mxu0 0.0
    %2543 = vmatprep.subr.mxu0 0.0
    %2544 = vmatpush1.msra.mxu0 0.0
    %2545 = vmatprep.subr.mxu0 0.0
    %2546 = vmatpush1.msra.mxu0 0.0
    %2547 = vmatprep.subr.mxu0 0.0
    %2548 = vmatpush1.msra.mxu0 0.0
    %2549 = vmatprep.subr.mxu0 0.0
    %2550 = vmatpush1.msra.mxu0 0.0
    %2551 = vmatprep.subr.mxu0 0.0
    %2552 = vmatpush1.msra.mxu0 0.0
    %2553 = vmatprep.subr.mxu0 0.0
    %2554 = vmatpush1.msra.mxu0 0.0
    %2555 = vmatprep.subr.mxu0 0.0
    %2556 = vmatpush1.msra.mxu0 0.0
    %2557 = vmatprep.mubr.f32.mxu0 0.0
    %2558 = vmatmul.mubr.f32.gmra.mrb[0].mxu0 %v2417
    %v2559 = vpop.f32.mrb[0].mxu0
    %v2560 = vadd.f32 0.0, %v2559
    %v2561 = vpop.f32.mrb[0].mxu0
    %v2562 = vadd.f32 0.0, %v2561
    %2563 = vdwg.mxu0
    %v2564 = vadd.f32 %v2418, %v2489
    %v2565 = vadd.f32 %v2419, %v2491
    %v2566 = vadd.f32 %v2420, %v2560
    %v2567 = vadd.f32 %v2421, %v2562
    %v2568 = vxor.u32 %v2564, 2147483648
    %v2569 = vmul.f32 %v2568, 1.442695
    %v2570 = vpow.pop %v2569
    %v2571 = vadd.f32 %v2570, 1.0
    %v2572 = vrcp.pop %v2571
    %v2573 = vmul.f32 1.0, %v2572
    %v2574 = vxor.u32 %v2565, 2147483648
    %v2575 = vmul.f32 %v2574, 1.442695
    %v2576 = vpow.pop %v2575
    %v2577 = vadd.f32 %v2576, 1.0
    %v2578 = vrcp.pop %v2577
    %v2579 = vmul.f32 1.0, %v2578
    %v2580 = vtanh.pop %v2566
    %v2581 = vxor.u32 %v2567, 2147483648
    %v2582 = vmul.f32 %v2581, 1.442695
    %v2583 = vpow.pop %v2582
    %v2584 = vadd.f32 %v2583, 1.0
    %v2585 = vrcp.pop %v2584
    %v2586 = vmul.f32 1.0, %v2585
    %v2587 = vmul.f32 %v2579, %v2415
    %v2588 = vmul.f32 %v2573, %v2580
    %v2589 = vadd.f32 %v2587, %v2588
    %v2590 = vtanh.pop %v2589
    %v2591 = vmul.f32 %v2586, %v2590
    %v2592 = vsel %vm106, %v2033, %v2051
    %v2593 = vsel %vm106, %v2035, %v2053
    %v2594 = vsel %vm106, %v2146, %v2164
    %v2595 = vsel %vm106, %v2148, %v2166
    %2596 = vmatprep.subr.mxu0 %v2181
    %2597 = vmatpush1.msra.mxu0 %v2180
    %2598 = vmatprep.subr.mxu0 %v2185
    %2599 = vmatpush1.msra.mxu0 %v2184
    %2600 = vmatprep.subr.mxu0 %v2189
    %2601 = vmatpush1.msra.mxu0 %v2188
    %2602 = vmatprep.subr.mxu0 %v2193
    %2603 = vmatpush1.msra.mxu0 %v2192
    %2604 = vmatprep.subr.mxu0 %v2197
    %2605 = vmatpush1.msra.mxu0 %v2196
    %2606 = vmatprep.subr.mxu0 %v2201
    %2607 = vmatpush1.msra.mxu0 %v2200
    %2608 = vmatprep.subr.mxu0 %v2205
    %2609 = vmatpush1.msra.mxu0 %v2204
    %2610 = vmatprep.subr.mxu0 %v2209
    %2611 = vmatpush1.msra.mxu0 %v2208
    %2612 = vmatprep.subr.mxu0 %v2213
    %2613 = vmatpush1.msra.mxu0 %v2212
    %2614 = vmatprep.subr.mxu0 %v2217
    %2615 = vmatpush1.msra.mxu0 %v2216
    %2616 = vmatprep.subr.mxu0 %v2221
    %2617 = vmatpush1.msra.mxu0 %v2220
    %2618 = vmatprep.subr.mxu0 %v2225
    %2619 = vmatpush1.msra.mxu0 %v2224
    %2620 = vmatprep.subr.mxu0 %v2229
    %2621 = vmatpush1.msra.mxu0 %v2228
    %2622 = vmatprep.subr.mxu0 %v2233
    %2623 = vmatpush1.msra.mxu0 %v2232
    %2624 = vmatprep.subr.mxu0 %v2237
    %2625 = vmatpush1.msra.mxu0 %v2236
    %2626 = vmatprep.subr.mxu0 %v2241
    %2627 = vmatpush1.msra.mxu0 %v2240
    %2628 = vmatprep.subr.mxu0 0.0
    %2629 = vmatpush1.msra.mxu0 0.0
    %2630 = vmatprep.subr.mxu0 0.0
    %2631 = vmatpush1.msra.mxu0 0.0
    %2632 = vmatprep.subr.mxu0 0.0
    %2633 = vmatpush1.msra.mxu0 0.0
    %2634 = vmatprep.subr.mxu0 0.0
    %2635 = vmatpush1.msra.mxu0 0.0
    %2636 = vmatprep.subr.mxu0 0.0
    %2637 = vmatpush1.msra.mxu0 0.0
    %2638 = vmatprep.subr.mxu0 0.0
    %2639 = vmatpush1.msra.mxu0 0.0
    %2640 = vmatprep.subr.mxu0 0.0
    %2641 = vmatpush1.msra.mxu0 0.0
    %2642 = vmatprep.subr.mxu0 0.0
    %2643 = vmatpush1.msra.mxu0 0.0
    %2644 = vmatprep.subr.mxu0 0.0
    %2645 = vmatpush1.msra.mxu0 0.0
    %2646 = vmatprep.subr.mxu0 0.0
    %2647 = vmatpush1.msra.mxu0 0.0
    %2648 = vmatprep.subr.mxu0 0.0
    %2649 = vmatpush1.msra.mxu0 0.0
    %2650 = vmatprep.subr.mxu0 0.0
    %2651 = vmatpush1.msra.mxu0 0.0
    %2652 = vmatprep.subr.mxu0 0.0
    %2653 = vmatpush1.msra.mxu0 0.0
    %2654 = vmatprep.subr.mxu0 0.0
    %2655 = vmatpush1.msra.mxu0 0.0
    %2656 = vmatprep.subr.mxu0 0.0
    %2657 = vmatpush1.msra.mxu0 0.0
    %2658 = vmatprep.subr.mxu0 0.0
    %2659 = vmatpush1.msra.mxu0 0.0
    %2660 = vmatprep.mubr.f32.mxu0 0.0
    %2661 = vmatmul.mubr.f32.gmra.mrb[0].mxu0 %v2591
    %v2662 = vpop.f32.mrb[0].mxu0
    %v2663 = vadd.f32 0.0, %v2662
    %v2664 = vpop.f32.mrb[0].mxu0
    %v2665 = vadd.f32 0.0, %v2664
    %2666 = vdwg.mxu0
    %2667 = vmatprep.subr.mxu0 %v2183
    %2668 = vmatpush1.msra.mxu0 %v2182
    %2669 = vmatprep.subr.mxu0 %v2187
    %2670 = vmatpush1.msra.mxu0 %v2186
    %2671 = vmatprep.subr.mxu0 %v2191
    %2672 = vmatpush1.msra.mxu0 %v2190
    %2673 = vmatprep.subr.mxu0 %v2195
    %2674 = vmatpush1.msra.mxu0 %v2194
    %2675 = vmatprep.subr.mxu0 %v2199
    %2676 = vmatpush1.msra.mxu0 %v2198
    %2677 = vmatprep.subr.mxu0 %v2203
    %2678 = vmatpush1.msra.mxu0 %v2202
    %2679 = vmatprep.subr.mxu0 %v2207
    %2680 = vmatpush1.msra.mxu0 %v2206
    %2681 = vmatprep.subr.mxu0 %v2211
    %2682 = vmatpush1.msra.mxu0 %v2210
    %2683 = vmatprep.subr.mxu0 %v2215
    %2684 = vmatpush1.msra.mxu0 %v2214
    %2685 = vmatprep.subr.mxu0 %v2219
    %2686 = vmatpush1.msra.mxu0 %v2218
    %2687 = vmatprep.subr.mxu0 %v2223
    %2688 = vmatpush1.msra.mxu0 %v2222
    %2689 = vmatprep.subr.mxu0 %v2227
    %2690 = vmatpush1.msra.mxu0 %v2226
    %2691 = vmatprep.subr.mxu0 %v2231
    %2692 = vmatpush1.msra.mxu0 %v2230
    %2693 = vmatprep.subr.mxu0 %v2235
    %2694 = vmatpush1.msra.mxu0 %v2234
    %2695 = vmatprep.subr.mxu0 %v2239
    %2696 = vmatpush1.msra.mxu0 %v2238
    %2697 = vmatprep.subr.mxu0 %v2243
    %2698 = vmatpush1.msra.mxu0 %v2242
    %2699 = vmatprep.subr.mxu0 0.0
    %2700 = vmatpush1.msra.mxu0 0.0
    %2701 = vmatprep.subr.mxu0 0.0
    %2702 = vmatpush1.msra.mxu0 0.0
    %2703 = vmatprep.subr.mxu0 0.0
    %2704 = vmatpush1.msra.mxu0 0.0
    %2705 = vmatprep.subr.mxu0 0.0
    %2706 = vmatpush1.msra.mxu0 0.0
    %2707 = vmatprep.subr.mxu0 0.0
    %2708 = vmatpush1.msra.mxu0 0.0
    %2709 = vmatprep.subr.mxu0 0.0
    %2710 = vmatpush1.msra.mxu0 0.0
    %2711 = vmatprep.subr.mxu0 0.0
    %2712 = vmatpush1.msra.mxu0 0.0
    %2713 = vmatprep.subr.mxu0 0.0
    %2714 = vmatpush1.msra.mxu0 0.0
    %2715 = vmatprep.subr.mxu0 0.0
    %2716 = vmatpush1.msra.mxu0 0.0
    %2717 = vmatprep.subr.mxu0 0.0
    %2718 = vmatpush1.msra.mxu0 0.0
    %2719 = vmatprep.subr.mxu0 0.0
    %2720 = vmatpush1.msra.mxu0 0.0
    %2721 = vmatprep.subr.mxu0 0.0
    %2722 = vmatpush1.msra.mxu0 0.0
    %2723 = vmatprep.subr.mxu0 0.0
    %2724 = vmatpush1.msra.mxu0 0.0
    %2725 = vmatprep.subr.mxu0 0.0
    %2726 = vmatpush1.msra.mxu0 0.0
    %2727 = vmatprep.subr.mxu0 0.0
    %2728 = vmatpush1.msra.mxu0 0.0
    %2729 = vmatprep.subr.mxu0 0.0
    %2730 = vmatpush1.msra.mxu0 0.0
    %2731 = vmatprep.mubr.f32.mxu0 0.0
    %2732 = vmatmul.mubr.f32.gmra.mrb[0].mxu0 %v2591
    %v2733 = vpop.f32.mrb[0].mxu0
    %v2734 = vadd.f32 0.0, %v2733
    %v2735 = vpop.f32.mrb[0].mxu0
    %v2736 = vadd.f32 0.0, %v2735
    %2737 = vdwg.mxu0
    %v2738 = vadd.f32 %v2592, %v2663
    %v2739 = vadd.f32 %v2593, %v2665
    %v2740 = vadd.f32 %v2594, %v2734
    %v2741 = vadd.f32 %v2595, %v2736
    %v2742 = vxor.u32 %v2738, 2147483648
    %v2743 = vmul.f32 %v2742, 1.442695
    %v2744 = vpow.pop %v2743
    %v2745 = vadd.f32 %v2744, 1.0
    %v2746 = vrcp.pop %v2745
    %v2747 = vmul.f32 1.0, %v2746
    %v2748 = vxor.u32 %v2739, 2147483648
    %v2749 = vmul.f32 %v2748, 1.442695
    %v2750 = vpow.pop %v2749
    %v2751 = vadd.f32 %v2750, 1.0
    %v2752 = vrcp.pop %v2751
    %v2753 = vmul.f32 1.0, %v2752
    %v2754 = vtanh.pop %v2740
    %v2755 = vxor.u32 %v2741, 2147483648
    %v2756 = vmul.f32 %v2755, 1.442695
    %v2757 = vpow.pop %v2756
    %v2758 = vadd.f32 %v2757, 1.0
    %v2759 = vrcp.pop %v2758
    %v2760 = vmul.f32 1.0, %v2759
    %v2761 = vmul.f32 %v2753, %v2589
    %v2762 = vmul.f32 %v2747, %v2754
    %v2763 = vadd.f32 %v2761, %v2762
    %v2764 = vtanh.pop %v2763
    %v2765 = vmul.f32 %v2760, %v2764
    %v2766 = vsel %vm106, %v2039, %v2045
    %v2767 = vsel %vm106, %v2041, %v2047
    %v2768 = vsel %vm106, %v2152, %v2158
    %v2769 = vsel %vm106, %v2154, %v2160
    %2770 = vmatprep.subr.mxu0 %v2181
    %2771 = vmatpush1.msra.mxu0 %v2180
    %2772 = vmatprep.subr.mxu0 %v2185
    %2773 = vmatpush1.msra.mxu0 %v2184
    %2774 = vmatprep.subr.mxu0 %v2189
    %2775 = vmatpush1.msra.mxu0 %v2188
    %2776 = vmatprep.subr.mxu0 %v2193
    %2777 = vmatpush1.msra.mxu0 %v2192
    %2778 = vmatprep.subr.mxu0 %v2197
    %2779 = vmatpush1.msra.mxu0 %v2196
    %2780 = vmatprep.subr.mxu0 %v2201
    %2781 = vmatpush1.msra.mxu0 %v2200
    %2782 = vmatprep.subr.mxu0 %v2205
    %2783 = vmatpush1.msra.mxu0 %v2204
    %2784 = vmatprep.subr.mxu0 %v2209
    %2785 = vmatpush1.msra.mxu0 %v2208
    %2786 = vmatprep.subr.mxu0 %v2213
    %2787 = vmatpush1.msra.mxu0 %v2212
    %2788 = vmatprep.subr.mxu0 %v2217
    %2789 = vmatpush1.msra.mxu0 %v2216
    %2790 = vmatprep.subr.mxu0 %v2221
    %2791 = vmatpush1.msra.mxu0 %v2220
    %2792 = vmatprep.subr.mxu0 %v2225
    %2793 = vmatpush1.msra.mxu0 %v2224
    %2794 = vmatprep.subr.mxu0 %v2229
    %2795 = vmatpush1.msra.mxu0 %v2228
    %2796 = vmatprep.subr.mxu0 %v2233
    %2797 = vmatpush1.msra.mxu0 %v2232
    %2798 = vmatprep.subr.mxu0 %v2237
    %2799 = vmatpush1.msra.mxu0 %v2236
    %2800 = vmatprep.subr.mxu0 %v2241
    %2801 = vmatpush1.msra.mxu0 %v2240
    %2802 = vmatprep.subr.mxu0 0.0
    %2803 = vmatpush1.msra.mxu0 0.0
    %2804 = vmatprep.subr.mxu0 0.0
    %2805 = vmatpush1.msra.mxu0 0.0
    %2806 = vmatprep.subr.mxu0 0.0
    %2807 = vmatpush1.msra.mxu0 0.0
    %2808 = vmatprep.subr.mxu0 0.0
    %2809 = vmatpush1.msra.mxu0 0.0
    %2810 = vmatprep.subr.mxu0 0.0
    %2811 = vmatpush1.msra.mxu0 0.0
    %2812 = vmatprep.subr.mxu0 0.0
    %2813 = vmatpush1.msra.mxu0 0.0
    %2814 = vmatprep.subr.mxu0 0.0
    %2815 = vmatpush1.msra.mxu0 0.0
    %2816 = vmatprep.subr.mxu0 0.0
    %2817 = vmatpush1.msra.mxu0 0.0
    %2818 = vmatprep.subr.mxu0 0.0
    %2819 = vmatpush1.msra.mxu0 0.0
    %2820 = vmatprep.subr.mxu0 0.0
    %2821 = vmatpush1.msra.mxu0 0.0
    %2822 = vmatprep.subr.mxu0 0.0
    %2823 = vmatpush1.msra.mxu0 0.0
    %2824 = vmatprep.subr.mxu0 0.0
    %2825 = vmatpush1.msra.mxu0 0.0
    %2826 = vmatprep.subr.mxu0 0.0
    %2827 = vmatpush1.msra.mxu0 0.0
    %2828 = vmatprep.subr.mxu0 0.0
    %2829 = vmatpush1.msra.mxu0 0.0
    %2830 = vmatprep.subr.mxu0 0.0
    %2831 = vmatpush1.msra.mxu0 0.0
    %2832 = vmatprep.subr.mxu0 0.0
    %2833 = vmatpush1.msra.mxu0 0.0
    %2834 = vmatprep.mubr.f32.mxu0 0.0
    %2835 = vmatmul.mubr.f32.gmra.mrb[0].mxu0 %v2765
    %v2836 = vpop.f32.mrb[0].mxu0
    %v2837 = vadd.f32 0.0, %v2836
    %v2838 = vpop.f32.mrb[0].mxu0
    %v2839 = vadd.f32 0.0, %v2838
    %2840 = vdwg.mxu0
    %2841 = vmatprep.subr.mxu0 %v2183
    %2842 = vmatpush1.msra.mxu0 %v2182
    %2843 = vmatprep.subr.mxu0 %v2187
    %2844 = vmatpush1.msra.mxu0 %v2186
    %2845 = vmatprep.subr.mxu0 %v2191
    %2846 = vmatpush1.msra.mxu0 %v2190
    %2847 = vmatprep.subr.mxu0 %v2195
    %2848 = vmatpush1.msra.mxu0 %v2194
    %2849 = vmatprep.subr.mxu0 %v2199
    %2850 = vmatpush1.msra.mxu0 %v2198
    %2851 = vmatprep.subr.mxu0 %v2203
    %2852 = vmatpush1.msra.mxu0 %v2202
    %2853 = vmatprep.subr.mxu0 %v2207
    %2854 = vmatpush1.msra.mxu0 %v2206
    %2855 = vmatprep.subr.mxu0 %v2211
    %2856 = vmatpush1.msra.mxu0 %v2210
    %2857 = vmatprep.subr.mxu0 %v2215
    %2858 = vmatpush1.msra.mxu0 %v2214
    %2859 = vmatprep.subr.mxu0 %v2219
    %2860 = vmatpush1.msra.mxu0 %v2218
    %2861 = vmatprep.subr.mxu0 %v2223
    %2862 = vmatpush1.msra.mxu0 %v2222
    %2863 = vmatprep.subr.mxu0 %v2227
    %2864 = vmatpush1.msra.mxu0 %v2226
    %2865 = vmatprep.subr.mxu0 %v2231
    %2866 = vmatpush1.msra.mxu0 %v2230
    %2867 = vmatprep.subr.mxu0 %v2235
    %2868 = vmatpush1.msra.mxu0 %v2234
    %2869 = vmatprep.subr.mxu0 %v2239
    %2870 = vmatpush1.msra.mxu0 %v2238
    %2871 = vmatprep.subr.mxu0 %v2243
    %2872 = vmatpush1.msra.mxu0 %v2242
    %2873 = vmatprep.subr.mxu0 0.0
    %2874 = vmatpush1.msra.mxu0 0.0
    %2875 = vmatprep.subr.mxu0 0.0
    %2876 = vmatpush1.msra.mxu0 0.0
    %2877 = vmatprep.subr.mxu0 0.0
    %2878 = vmatpush1.msra.mxu0 0.0
    %2879 = vmatprep.subr.mxu0 0.0
    %2880 = vmatpush1.msra.mxu0 0.0
    %2881 = vmatprep.subr.mxu0 0.0
    %2882 = vmatpush1.msra.mxu0 0.0
    %2883 = vmatprep.subr.mxu0 0.0
    %2884 = vmatpush1.msra.mxu0 0.0
    %2885 = vmatprep.subr.mxu0 0.0
    %2886 = vmatpush1.msra.mxu0 0.0
    %2887 = vmatprep.subr.mxu0 0.0
    %2888 = vmatpush1.msra.mxu0 0.0
    %2889 = vmatprep.subr.mxu0 0.0
    %2890 = vmatpush1.msra.mxu0 0.0
    %2891 = vmatprep.subr.mxu0 0.0
    %2892 = vmatpush1.msra.mxu0 0.0
    %2893 = vmatprep.subr.mxu0 0.0
    %2894 = vmatpush1.msra.mxu0 0.0
    %2895 = vmatprep.subr.mxu0 0.0
    %2896 = vmatpush1.msra.mxu0 0.0
    %2897 = vmatprep.subr.mxu0 0.0
    %2898 = vmatpush1.msra.mxu0 0.0
    %2899 = vmatprep.subr.mxu0 0.0
    %2900 = vmatpush1.msra.mxu0 0.0
    %2901 = vmatprep.subr.mxu0 0.0
    %2902 = vmatpush1.msra.mxu0 0.0
    %2903 = vmatprep.subr.mxu0 0.0
    %2904 = vmatpush1.msra.mxu0 0.0
    %2905 = vmatprep.mubr.f32.mxu0 0.0
    %2906 = vmatmul.mubr.f32.gmra.mrb[0].mxu0 %v2765
    %v2907 = vpop.f32.mrb[0].mxu0
    %v2908 = vadd.f32 0.0, %v2907
    %v2909 = vpop.f32.mrb[0].mxu0
    %v2910 = vadd.f32 0.0, %v2909
    %2911 = vdwg.mxu0
    %v2912 = vadd.f32 %v2766, %v2837
    %v2913 = vadd.f32 %v2767, %v2839
    %v2914 = vadd.f32 %v2768, %v2908
    %v2915 = vadd.f32 %v2769, %v2910
    %v2916 = vxor.u32 %v2912, 2147483648
    %v2917 = vmul.f32 %v2916, 1.442695
    %v2918 = vpow.pop %v2917
    %v2919 = vadd.f32 %v2918, 1.0
    %v2920 = vrcp.pop %v2919
    %v2921 = vmul.f32 1.0, %v2920
    %v2922 = vxor.u32 %v2913, 2147483648
    %v2923 = vmul.f32 %v2922, 1.442695
    %v2924 = vpow.pop %v2923
    %v2925 = vadd.f32 %v2924, 1.0
    %v2926 = vrcp.pop %v2925
    %v2927 = vmul.f32 1.0, %v2926
    %v2928 = vtanh.pop %v2914
    %v2929 = vxor.u32 %v2915, 2147483648
    %v2930 = vmul.f32 %v2929, 1.442695
    %v2931 = vpow.pop %v2930
    %v2932 = vadd.f32 %v2931, 1.0
    %v2933 = vrcp.pop %v2932
    %v2934 = vmul.f32 1.0, %v2933
    %v2935 = vmul.f32 %v2927, %v2763
    %v2936 = vmul.f32 %v2921, %v2928
    %v2937 = vadd.f32 %v2935, %v2936
    %v2938 = vtanh.pop %v2937
    %v2939 = vmul.f32 %v2934, %v2938
    %v2940 = vsel %vm106, %v2045, %v2039
    %v2941 = vsel %vm106, %v2047, %v2041
    %v2942 = vsel %vm106, %v2158, %v2152
    %v2943 = vsel %vm106, %v2160, %v2154
    %2944 = vmatprep.subr.mxu0 %v2181
    %2945 = vmatpush1.msra.mxu0 %v2180
    %2946 = vmatprep.subr.mxu0 %v2185
    %2947 = vmatpush1.msra.mxu0 %v2184
    %2948 = vmatprep.subr.mxu0 %v2189
    %2949 = vmatpush1.msra.mxu0 %v2188
    %2950 = vmatprep.subr.mxu0 %v2193
    %2951 = vmatpush1.msra.mxu0 %v2192
    %2952 = vmatprep.subr.mxu0 %v2197
    %2953 = vmatpush1.msra.mxu0 %v2196
    %2954 = vmatprep.subr.mxu0 %v2201
    %2955 = vmatpush1.msra.mxu0 %v2200
    %2956 = vmatprep.subr.mxu0 %v2205
    %2957 = vmatpush1.msra.mxu0 %v2204
    %2958 = vmatprep.subr.mxu0 %v2209
    %2959 = vmatpush1.msra.mxu0 %v2208
    %2960 = vmatprep.subr.mxu0 %v2213
    %2961 = vmatpush1.msra.mxu0 %v2212
    %2962 = vmatprep.subr.mxu0 %v2217
    %2963 = vmatpush1.msra.mxu0 %v2216
    %2964 = vmatprep.subr.mxu0 %v2221
    %2965 = vmatpush1.msra.mxu0 %v2220
    %2966 = vmatprep.subr.mxu0 %v2225
    %2967 = vmatpush1.msra.mxu0 %v2224
    %2968 = vmatprep.subr.mxu0 %v2229
    %2969 = vmatpush1.msra.mxu0 %v2228
    %2970 = vmatprep.subr.mxu0 %v2233
    %2971 = vmatpush1.msra.mxu0 %v2232
    %2972 = vmatprep.subr.mxu0 %v2237
    %2973 = vmatpush1.msra.mxu0 %v2236
    %2974 = vmatprep.subr.mxu0 %v2241
    %2975 = vmatpush1.msra.mxu0 %v2240
    %2976 = vmatprep.subr.mxu0 0.0
    %2977 = vmatpush1.msra.mxu0 0.0
    %2978 = vmatprep.subr.mxu0 0.0
    %2979 = vmatpush1.msra.mxu0 0.0
    %2980 = vmatprep.subr.mxu0 0.0
    %2981 = vmatpush1.msra.mxu0 0.0
    %2982 = vmatprep.subr.mxu0 0.0
    %2983 = vmatpush1.msra.mxu0 0.0
    %2984 = vmatprep.subr.mxu0 0.0
    %2985 = vmatpush1.msra.mxu0 0.0
    %2986 = vmatprep.subr.mxu0 0.0
    %2987 = vmatpush1.msra.mxu0 0.0
    %2988 = vmatprep.subr.mxu0 0.0
    %2989 = vmatpush1.msra.mxu0 0.0
    %2990 = vmatprep.subr.mxu0 0.0
    %2991 = vmatpush1.msra.mxu0 0.0
    %2992 = vmatprep.subr.mxu0 0.0
    %2993 = vmatpush1.msra.mxu0 0.0
    %2994 = vmatprep.subr.mxu0 0.0
    %2995 = vmatpush1.msra.mxu0 0.0
    %2996 = vmatprep.subr.mxu0 0.0
    %2997 = vmatpush1.msra.mxu0 0.0
    %2998 = vmatprep.subr.mxu0 0.0
    %2999 = vmatpush1.msra.mxu0 0.0
    %3000 = vmatprep.subr.mxu0 0.0
    %3001 = vmatpush1.msra.mxu0 0.0
    %3002 = vmatprep.subr.mxu0 0.0
    %3003 = vmatpush1.msra.mxu0 0.0
    %3004 = vmatprep.subr.mxu0 0.0
    %3005 = vmatpush1.msra.mxu0 0.0
    %3006 = vmatprep.subr.mxu0 0.0
    %3007 = vmatpush1.msra.mxu0 0.0
    %3008 = vmatprep.mubr.f32.mxu0 0.0
    %3009 = vmatmul.mubr.f32.gmra.mrb[0].mxu0 %v2939
    %v3010 = vpop.f32.mrb[0].mxu0
    %v3011 = vadd.f32 0.0, %v3010
    %v3012 = vpop.f32.mrb[0].mxu0
    %v3013 = vadd.f32 0.0, %v3012
    %3014 = vdwg.mxu0
    %3015 = vmatprep.subr.mxu0 %v2183
    %3016 = vmatpush1.msra.mxu0 %v2182
    %3017 = vmatprep.subr.mxu0 %v2187
    %3018 = vmatpush1.msra.mxu0 %v2186
    %3019 = vmatprep.subr.mxu0 %v2191
    %3020 = vmatpush1.msra.mxu0 %v2190
    %3021 = vmatprep.subr.mxu0 %v2195
    %3022 = vmatpush1.msra.mxu0 %v2194
    %3023 = vmatprep.subr.mxu0 %v2199
    %3024 = vmatpush1.msra.mxu0 %v2198
    %3025 = vmatprep.subr.mxu0 %v2203
    %3026 = vmatpush1.msra.mxu0 %v2202
    %3027 = vmatprep.subr.mxu0 %v2207
    %3028 = vmatpush1.msra.mxu0 %v2206
    %3029 = vmatprep.subr.mxu0 %v2211
    %3030 = vmatpush1.msra.mxu0 %v2210
    %3031 = vmatprep.subr.mxu0 %v2215
    %3032 = vmatpush1.msra.mxu0 %v2214
    %3033 = vmatprep.subr.mxu0 %v2219
    %3034 = vmatpush1.msra.mxu0 %v2218
    %3035 = vmatprep.subr.mxu0 %v2223
    %3036 = vmatpush1.msra.mxu0 %v2222
    %3037 = vmatprep.subr.mxu0 %v2227
    %3038 = vmatpush1.msra.mxu0 %v2226
    %3039 = vmatprep.subr.mxu0 %v2231
    %3040 = vmatpush1.msra.mxu0 %v2230
    %3041 = vmatprep.subr.mxu0 %v2235
    %3042 = vmatpush1.msra.mxu0 %v2234
    %3043 = vmatprep.subr.mxu0 %v2239
    %3044 = vmatpush1.msra.mxu0 %v2238
    %3045 = vmatprep.subr.mxu0 %v2243
    %3046 = vmatpush1.msra.mxu0 %v2242
    %3047 = vmatprep.subr.mxu0 0.0
    %3048 = vmatpush1.msra.mxu0 0.0
    %3049 = vmatprep.subr.mxu0 0.0
    %3050 = vmatpush1.msra.mxu0 0.0
    %3051 = vmatprep.subr.mxu0 0.0
    %3052 = vmatpush1.msra.mxu0 0.0
    %3053 = vmatprep.subr.mxu0 0.0
    %3054 = vmatpush1.msra.mxu0 0.0
    %3055 = vmatprep.subr.mxu0 0.0
    %3056 = vmatpush1.msra.mxu0 0.0
    %3057 = vmatprep.subr.mxu0 0.0
    %3058 = vmatpush1.msra.mxu0 0.0
    %3059 = vmatprep.subr.mxu0 0.0
    %3060 = vmatpush1.msra.mxu0 0.0
    %3061 = vmatprep.subr.mxu0 0.0
    %3062 = vmatpush1.msra.mxu0 0.0
    %3063 = vmatprep.subr.mxu0 0.0
    %3064 = vmatpush1.msra.mxu0 0.0
    %3065 = vmatprep.subr.mxu0 0.0
    %3066 = vmatpush1.msra.mxu0 0.0
    %3067 = vmatprep.subr.mxu0 0.0
    %3068 = vmatpush1.msra.mxu0 0.0
    %3069 = vmatprep.subr.mxu0 0.0
    %3070 = vmatpush1.msra.mxu0 0.0
    %3071 = vmatprep.subr.mxu0 0.0
    %3072 = vmatpush1.msra.mxu0 0.0
    %3073 = vmatprep.subr.mxu0 0.0
    %3074 = vmatpush1.msra.mxu0 0.0
    %3075 = vmatprep.subr.mxu0 0.0
    %3076 = vmatpush1.msra.mxu0 0.0
    %3077 = vmatprep.subr.mxu0 0.0
    %3078 = vmatpush1.msra.mxu0 0.0
    %3079 = vmatprep.mubr.f32.mxu0 0.0
    %3080 = vmatmul.mubr.f32.gmra.mrb[0].mxu0 %v2939
    %v3081 = vpop.f32.mrb[0].mxu0
    %v3082 = vadd.f32 0.0, %v3081
    %v3083 = vpop.f32.mrb[0].mxu0
    %v3084 = vadd.f32 0.0, %v3083
    %3085 = vdwg.mxu0
    %v3086 = vadd.f32 %v2940, %v3011
    %v3087 = vadd.f32 %v2941, %v3013
    %v3088 = vadd.f32 %v2942, %v3082
    %v3089 = vadd.f32 %v2943, %v3084
    %v3090 = vxor.u32 %v3086, 2147483648
    %v3091 = vmul.f32 %v3090, 1.442695
    %v3092 = vpow.pop %v3091
    %v3093 = vadd.f32 %v3092, 1.0
    %v3094 = vrcp.pop %v3093
    %v3095 = vmul.f32 1.0, %v3094
    %v3096 = vxor.u32 %v3087, 2147483648
    %v3097 = vmul.f32 %v3096, 1.442695
    %v3098 = vpow.pop %v3097
    %v3099 = vadd.f32 %v3098, 1.0
    %v3100 = vrcp.pop %v3099
    %v3101 = vmul.f32 1.0, %v3100
    %v3102 = vtanh.pop %v3088
    %v3103 = vxor.u32 %v3089, 2147483648
    %v3104 = vmul.f32 %v3103, 1.442695
    %v3105 = vpow.pop %v3104
    %v3106 = vadd.f32 %v3105, 1.0
    %v3107 = vrcp.pop %v3106
    %v3108 = vmul.f32 1.0, %v3107
    %v3109 = vmul.f32 %v3101, %v2937
    %v3110 = vmul.f32 %v3095, %v3102
    %v3111 = vadd.f32 %v3109, %v3110
    %v3112 = vtanh.pop %v3111
    %v3113 = vmul.f32 %v3108, %v3112
    %v3114 = vsel %vm106, %v2051, %v2033
    %v3115 = vsel %vm106, %v2053, %v2035
    %v3116 = vsel %vm106, %v2164, %v2146
    %v3117 = vsel %vm106, %v2166, %v2148
    %3118 = vmatprep.subr.mxu0 %v2181
    %3119 = vmatpush1.msra.mxu0 %v2180
    %3120 = vmatprep.subr.mxu0 %v2185
    %3121 = vmatpush1.msra.mxu0 %v2184
    %3122 = vmatprep.subr.mxu0 %v2189
    %3123 = vmatpush1.msra.mxu0 %v2188
    %3124 = vmatprep.subr.mxu0 %v2193
    %3125 = vmatpush1.msra.mxu0 %v2192
    %3126 = vmatprep.subr.mxu0 %v2197
    %3127 = vmatpush1.msra.mxu0 %v2196
    %3128 = vmatprep.subr.mxu0 %v2201
    %3129 = vmatpush1.msra.mxu0 %v2200
    %3130 = vmatprep.subr.mxu0 %v2205
    %3131 = vmatpush1.msra.mxu0 %v2204
    %3132 = vmatprep.subr.mxu0 %v2209
    %3133 = vmatpush1.msra.mxu0 %v2208
    %3134 = vmatprep.subr.mxu0 %v2213
    %3135 = vmatpush1.msra.mxu0 %v2212
    %3136 = vmatprep.subr.mxu0 %v2217
    %3137 = vmatpush1.msra.mxu0 %v2216
    %3138 = vmatprep.subr.mxu0 %v2221
    %3139 = vmatpush1.msra.mxu0 %v2220
    %3140 = vmatprep.subr.mxu0 %v2225
    %3141 = vmatpush1.msra.mxu0 %v2224
    %3142 = vmatprep.subr.mxu0 %v2229
    %3143 = vmatpush1.msra.mxu0 %v2228
    %3144 = vmatprep.subr.mxu0 %v2233
    %3145 = vmatpush1.msra.mxu0 %v2232
    %3146 = vmatprep.subr.mxu0 %v2237
    %3147 = vmatpush1.msra.mxu0 %v2236
    %3148 = vmatprep.subr.mxu0 %v2241
    %3149 = vmatpush1.msra.mxu0 %v2240
    %3150 = vmatprep.subr.mxu0 0.0
    %3151 = vmatpush1.msra.mxu0 0.0
    %3152 = vmatprep.subr.mxu0 0.0
    %3153 = vmatpush1.msra.mxu0 0.0
    %3154 = vmatprep.subr.mxu0 0.0
    %3155 = vmatpush1.msra.mxu0 0.0
    %3156 = vmatprep.subr.mxu0 0.0
    %3157 = vmatpush1.msra.mxu0 0.0
    %3158 = vmatprep.subr.mxu0 0.0
    %3159 = vmatpush1.msra.mxu0 0.0
    %3160 = vmatprep.subr.mxu0 0.0
    %3161 = vmatpush1.msra.mxu0 0.0
    %3162 = vmatprep.subr.mxu0 0.0
    %3163 = vmatpush1.msra.mxu0 0.0
    %3164 = vmatprep.subr.mxu0 0.0
    %3165 = vmatpush1.msra.mxu0 0.0
    %3166 = vmatprep.subr.mxu0 0.0
    %3167 = vmatpush1.msra.mxu0 0.0
    %3168 = vmatprep.subr.mxu0 0.0
    %3169 = vmatpush1.msra.mxu0 0.0
    %3170 = vmatprep.subr.mxu0 0.0
    %3171 = vmatpush1.msra.mxu0 0.0
    %3172 = vmatprep.subr.mxu0 0.0
    %3173 = vmatpush1.msra.mxu0 0.0
    %3174 = vmatprep.subr.mxu0 0.0
    %3175 = vmatpush1.msra.mxu0 0.0
    %3176 = vmatprep.subr.mxu0 0.0
    %3177 = vmatpush1.msra.mxu0 0.0
    %3178 = vmatprep.subr.mxu0 0.0
    %3179 = vmatpush1.msra.mxu0 0.0
    %3180 = vmatprep.subr.mxu0 0.0
    %3181 = vmatpush1.msra.mxu0 0.0
    %3182 = vmatprep.mubr.f32.mxu0 0.0
    %3183 = vmatmul.mubr.f32.gmra.mrb[0].mxu0 %v3113
    %v3184 = vpop.f32.mrb[0].mxu0
    %v3185 = vadd.f32 0.0, %v3184
    %v3186 = vpop.f32.mrb[0].mxu0
    %v3187 = vadd.f32 0.0, %v3186
    %3188 = vdwg.mxu0
    %3189 = vmatprep.subr.mxu0 %v2183
    %3190 = vmatpush1.msra.mxu0 %v2182
    %3191 = vmatprep.subr.mxu0 %v2187
    %3192 = vmatpush1.msra.mxu0 %v2186
    %3193 = vmatprep.subr.mxu0 %v2191
    %3194 = vmatpush1.msra.mxu0 %v2190
    %3195 = vmatprep.subr.mxu0 %v2195
    %3196 = vmatpush1.msra.mxu0 %v2194
    %3197 = vmatprep.subr.mxu0 %v2199
    %3198 = vmatpush1.msra.mxu0 %v2198
    %3199 = vmatprep.subr.mxu0 %v2203
    %3200 = vmatpush1.msra.mxu0 %v2202
    %3201 = vmatprep.subr.mxu0 %v2207
    %3202 = vmatpush1.msra.mxu0 %v2206
    %3203 = vmatprep.subr.mxu0 %v2211
    %3204 = vmatpush1.msra.mxu0 %v2210
    %3205 = vmatprep.subr.mxu0 %v2215
    %3206 = vmatpush1.msra.mxu0 %v2214
    %3207 = vmatprep.subr.mxu0 %v2219
    %3208 = vmatpush1.msra.mxu0 %v2218
    %3209 = vmatprep.subr.mxu0 %v2223
    %3210 = vmatpush1.msra.mxu0 %v2222
    %3211 = vmatprep.subr.mxu0 %v2227
    %3212 = vmatpush1.msra.mxu0 %v2226
    %3213 = vmatprep.subr.mxu0 %v2231
    %3214 = vmatpush1.msra.mxu0 %v2230
    %3215 = vmatprep.subr.mxu0 %v2235
    %3216 = vmatpush1.msra.mxu0 %v2234
    %3217 = vmatprep.subr.mxu0 %v2239
    %3218 = vmatpush1.msra.mxu0 %v2238
    %3219 = vmatprep.subr.mxu0 %v2243
    %3220 = vmatpush1.msra.mxu0 %v2242
    %3221 = vmatprep.subr.mxu0 0.0
    %3222 = vmatpush1.msra.mxu0 0.0
    %3223 = vmatprep.subr.mxu0 0.0
    %3224 = vmatpush1.msra.mxu0 0.0
    %3225 = vmatprep.subr.mxu0 0.0
    %3226 = vmatpush1.msra.mxu0 0.0
    %3227 = vmatprep.subr.mxu0 0.0
    %3228 = vmatpush1.msra.mxu0 0.0
    %3229 = vmatprep.subr.mxu0 0.0
    %3230 = vmatpush1.msra.mxu0 0.0
    %3231 = vmatprep.subr.mxu0 0.0
    %3232 = vmatpush1.msra.mxu0 0.0
    %3233 = vmatprep.subr.mxu0 0.0
    %3234 = vmatpush1.msra.mxu0 0.0
    %3235 = vmatprep.subr.mxu0 0.0
    %3236 = vmatpush1.msra.mxu0 0.0
    %3237 = vmatprep.subr.mxu0 0.0
    %3238 = vmatpush1.msra.mxu0 0.0
    %3239 = vmatprep.subr.mxu0 0.0
    %3240 = vmatpush1.msra.mxu0 0.0
    %3241 = vmatprep.subr.mxu0 0.0
    %3242 = vmatpush1.msra.mxu0 0.0
    %3243 = vmatprep.subr.mxu0 0.0
    %3244 = vmatpush1.msra.mxu0 0.0
    %3245 = vmatprep.subr.mxu0 0.0
    %3246 = vmatpush1.msra.mxu0 0.0
    %3247 = vmatprep.subr.mxu0 0.0
    %3248 = vmatpush1.msra.mxu0 0.0
    %3249 = vmatprep.subr.mxu0 0.0
    %3250 = vmatpush1.msra.mxu0 0.0
    %3251 = vmatprep.subr.mxu0 0.0
    %3252 = vmatpush1.msra.mxu0 0.0
    %3253 = vmatprep.mubr.f32.mxu0 0.0
    %3254 = vmatmul.mubr.f32.gmra.mrb[0].mxu0 %v3113
    %v3255 = vpop.f32.mrb[0].mxu0
    %v3256 = vadd.f32 0.0, %v3255
    %v3257 = vpop.f32.mrb[0].mxu0
    %v3258 = vadd.f32 0.0, %v3257
    %3259 = vdwg.mxu0
    %v3260 = vadd.f32 %v3114, %v3185
    %v3261 = vadd.f32 %v3115, %v3187
    %v3262 = vadd.f32 %v3116, %v3256
    %v3263 = vadd.f32 %v3117, %v3258
    %v3264 = vxor.u32 %v3260, 2147483648
    %v3265 = vmul.f32 %v3264, 1.442695
    %v3266 = vpow.pop %v3265
    %v3267 = vadd.f32 %v3266, 1.0
    %v3268 = vrcp.pop %v3267
    %v3269 = vmul.f32 1.0, %v3268
    %v3270 = vxor.u32 %v3261, 2147483648
    %v3271 = vmul.f32 %v3270, 1.442695
    %v3272 = vpow.pop %v3271
    %v3273 = vadd.f32 %v3272, 1.0
    %v3274 = vrcp.pop %v3273
    %v3275 = vmul.f32 1.0, %v3274
    %v3276 = vtanh.pop %v3262
    %v3277 = vxor.u32 %v3263, 2147483648
    %v3278 = vmul.f32 %v3277, 1.442695
    %v3279 = vpow.pop %v3278
    %v3280 = vadd.f32 %v3279, 1.0
    %v3281 = vrcp.pop %v3280
    %v3282 = vmul.f32 1.0, %v3281
    %v3283 = vmul.f32 %v3275, %v3111
    %v3284 = vmul.f32 %v3269, %v3276
    %v3285 = vadd.f32 %v3283, %v3284
    %v3286 = vtanh.pop %v3285
    %v3287 = vmul.f32 %v3282, %v3286
    %v3288 = vsel %vm106, %v2057, %v2027
    %v3289 = vsel %vm106, %v2059, %v2029
    %v3290 = vsel %vm106, %v2170, %v2140
    %v3291 = vsel %vm106, %v2172, %v2142
    %3292 = vmatprep.subr.mxu0 %v2181
    %3293 = vmatpush1.msra.mxu0 %v2180
    %3294 = vmatprep.subr.mxu0 %v2185
    %3295 = vmatpush1.msra.mxu0 %v2184
    %3296 = vmatprep.subr.mxu0 %v2189
    %3297 = vmatpush1.msra.mxu0 %v2188
    %3298 = vmatprep.subr.mxu0 %v2193
    %3299 = vmatpush1.msra.mxu0 %v2192
    %3300 = vmatprep.subr.mxu0 %v2197
    %3301 = vmatpush1.msra.mxu0 %v2196
    %3302 = vmatprep.subr.mxu0 %v2201
    %3303 = vmatpush1.msra.mxu0 %v2200
    %3304 = vmatprep.subr.mxu0 %v2205
    %3305 = vmatpush1.msra.mxu0 %v2204
    %3306 = vmatprep.subr.mxu0 %v2209
    %3307 = vmatpush1.msra.mxu0 %v2208
    %3308 = vmatprep.subr.mxu0 %v2213
    %3309 = vmatpush1.msra.mxu0 %v2212
    %3310 = vmatprep.subr.mxu0 %v2217
    %3311 = vmatpush1.msra.mxu0 %v2216
    %3312 = vmatprep.subr.mxu0 %v2221
    %3313 = vmatpush1.msra.mxu0 %v2220
    %3314 = vmatprep.subr.mxu0 %v2225
    %3315 = vmatpush1.msra.mxu0 %v2224
    %3316 = vmatprep.subr.mxu0 %v2229
    %3317 = vmatpush1.msra.mxu0 %v2228
    %3318 = vmatprep.subr.mxu0 %v2233
    %3319 = vmatpush1.msra.mxu0 %v2232
    %3320 = vmatprep.subr.mxu0 %v2237
    %3321 = vmatpush1.msra.mxu0 %v2236
    %3322 = vmatprep.subr.mxu0 %v2241
    %3323 = vmatpush1.msra.mxu0 %v2240
    %3324 = vmatprep.subr.mxu0 0.0
    %3325 = vmatpush1.msra.mxu0 0.0
    %3326 = vmatprep.subr.mxu0 0.0
    %3327 = vmatpush1.msra.mxu0 0.0
    %3328 = vmatprep.subr.mxu0 0.0
    %3329 = vmatpush1.msra.mxu0 0.0
    %3330 = vmatprep.subr.mxu0 0.0
    %3331 = vmatpush1.msra.mxu0 0.0
    %3332 = vmatprep.subr.mxu0 0.0
    %3333 = vmatpush1.msra.mxu0 0.0
    %3334 = vmatprep.subr.mxu0 0.0
    %3335 = vmatpush1.msra.mxu0 0.0
    %3336 = vmatprep.subr.mxu0 0.0
    %3337 = vmatpush1.msra.mxu0 0.0
    %3338 = vmatprep.subr.mxu0 0.0
    %3339 = vmatpush1.msra.mxu0 0.0
    %3340 = vmatprep.subr.mxu0 0.0
    %3341 = vmatpush1.msra.mxu0 0.0
    %3342 = vmatprep.subr.mxu0 0.0
    %3343 = vmatpush1.msra.mxu0 0.0
    %3344 = vmatprep.subr.mxu0 0.0
    %3345 = vmatpush1.msra.mxu0 0.0
    %3346 = vmatprep.subr.mxu0 0.0
    %3347 = vmatpush1.msra.mxu0 0.0
    %3348 = vmatprep.subr.mxu0 0.0
    %3349 = vmatpush1.msra.mxu0 0.0
    %3350 = vmatprep.subr.mxu0 0.0
    %3351 = vmatpush1.msra.mxu0 0.0
    %3352 = vmatprep.subr.mxu0 0.0
    %3353 = vmatpush1.msra.mxu0 0.0
    %3354 = vmatprep.subr.mxu0 0.0
    %3355 = vmatpush1.msra.mxu0 0.0
    %3356 = vmatprep.mubr.f32.mxu0 0.0
    %3357 = vmatmul.mubr.f32.gmra.mrb[0].mxu0 %v3287
    %v3358 = vpop.f32.mrb[0].mxu0
    %v3359 = vadd.f32 0.0, %v3358
    %v3360 = vpop.f32.mrb[0].mxu0
    %v3361 = vadd.f32 0.0, %v3360
    %3362 = vdwg.mxu0
    %3363 = vmatprep.subr.mxu0 %v2183
    %3364 = vmatpush1.msra.mxu0 %v2182
    %3365 = vmatprep.subr.mxu0 %v2187
    %3366 = vmatpush1.msra.mxu0 %v2186
    %3367 = vmatprep.subr.mxu0 %v2191
    %3368 = vmatpush1.msra.mxu0 %v2190
    %3369 = vmatprep.subr.mxu0 %v2195
    %3370 = vmatpush1.msra.mxu0 %v2194
    %3371 = vmatprep.subr.mxu0 %v2199
    %3372 = vmatpush1.msra.mxu0 %v2198
    %3373 = vmatprep.subr.mxu0 %v2203
    %3374 = vmatpush1.msra.mxu0 %v2202
    %3375 = vmatprep.subr.mxu0 %v2207
    %3376 = vmatpush1.msra.mxu0 %v2206
    %3377 = vmatprep.subr.mxu0 %v2211
    %3378 = vmatpush1.msra.mxu0 %v2210
    %3379 = vmatprep.subr.mxu0 %v2215
    %3380 = vmatpush1.msra.mxu0 %v2214
    %3381 = vmatprep.subr.mxu0 %v2219
    %3382 = vmatpush1.msra.mxu0 %v2218
    %3383 = vmatprep.subr.mxu0 %v2223
    %3384 = vmatpush1.msra.mxu0 %v2222
    %3385 = vmatprep.subr.mxu0 %v2227
    %3386 = vmatpush1.msra.mxu0 %v2226
    %3387 = vmatprep.subr.mxu0 %v2231
    %3388 = vmatpush1.msra.mxu0 %v2230
    %3389 = vmatprep.subr.mxu0 %v2235
    %3390 = vmatpush1.msra.mxu0 %v2234
    %3391 = vmatprep.subr.mxu0 %v2239
    %3392 = vmatpush1.msra.mxu0 %v2238
    %3393 = vmatprep.subr.mxu0 %v2243
    %3394 = vmatpush1.msra.mxu0 %v2242
    %3395 = vmatprep.subr.mxu0 0.0
    %3396 = vmatpush1.msra.mxu0 0.0
    %3397 = vmatprep.subr.mxu0 0.0
    %3398 = vmatpush1.msra.mxu0 0.0
    %3399 = vmatprep.subr.mxu0 0.0
    %3400 = vmatpush1.msra.mxu0 0.0
    %3401 = vmatprep.subr.mxu0 0.0
    %3402 = vmatpush1.msra.mxu0 0.0
    %3403 = vmatprep.subr.mxu0 0.0
    %3404 = vmatpush1.msra.mxu0 0.0
    %3405 = vmatprep.subr.mxu0 0.0
    %3406 = vmatpush1.msra.mxu0 0.0
    %3407 = vmatprep.subr.mxu0 0.0
    %3408 = vmatpush1.msra.mxu0 0.0
    %3409 = vmatprep.subr.mxu0 0.0
    %3410 = vmatpush1.msra.mxu0 0.0
    %3411 = vmatprep.subr.mxu0 0.0
    %3412 = vmatpush1.msra.mxu0 0.0
    %3413 = vmatprep.subr.mxu0 0.0
    %3414 = vmatpush1.msra.mxu0 0.0
    %3415 = vmatprep.subr.mxu0 0.0
    %3416 = vmatpush1.msra.mxu0 0.0
    %3417 = vmatprep.subr.mxu0 0.0
    %3418 = vmatpush1.msra.mxu0 0.0
    %3419 = vmatprep.subr.mxu0 0.0
    %3420 = vmatpush1.msra.mxu0 0.0
    %3421 = vmatprep.subr.mxu0 0.0
    %3422 = vmatpush1.msra.mxu0 0.0
    %3423 = vmatprep.subr.mxu0 0.0
    %3424 = vmatpush1.msra.mxu0 0.0
    %3425 = vmatprep.subr.mxu0 0.0
    %3426 = vmatpush1.msra.mxu0 0.0
    %3427 = vmatprep.mubr.f32.mxu0 0.0
    %3428 = vmatmul.mubr.f32.gmra.mrb[0].mxu0 %v3287
    %v3429 = vpop.f32.mrb[0].mxu0
    %v3430 = vadd.f32 0.0, %v3429
    %v3431 = vpop.f32.mrb[0].mxu0
    %v3432 = vadd.f32 0.0, %v3431
    %3433 = vdwg.mxu0
    %v3434 = vadd.f32 %v3288, %v3359
    %v3435 = vadd.f32 %v3289, %v3361
    %v3436 = vadd.f32 %v3290, %v3430
    %v3437 = vadd.f32 %v3291, %v3432
    %v3438 = vxor.u32 %v3434, 2147483648
    %v3439 = vmul.f32 %v3438, 1.442695
    %v3440 = vpow.pop %v3439
    %v3441 = vadd.f32 %v3440, 1.0
    %v3442 = vrcp.pop %v3441
    %v3443 = vmul.f32 1.0, %v3442
    %v3444 = vxor.u32 %v3435, 2147483648
    %v3445 = vmul.f32 %v3444, 1.442695
    %v3446 = vpow.pop %v3445
    %v3447 = vadd.f32 %v3446, 1.0
    %v3448 = vrcp.pop %v3447
    %v3449 = vmul.f32 1.0, %v3448
    %v3450 = vtanh.pop %v3436
    %v3451 = vxor.u32 %v3437, 2147483648
    %v3452 = vmul.f32 %v3451, 1.442695
    %v3453 = vpow.pop %v3452
    %v3454 = vadd.f32 %v3453, 1.0
    %v3455 = vrcp.pop %v3454
    %v3456 = vmul.f32 1.0, %v3455
    %v3457 = vmul.f32 %v3449, %v3285
    %v3458 = vmul.f32 %v3443, %v3450
    %v3459 = vadd.f32 %v3457, %v3458
    %v3460 = vtanh.pop %v3459
    %v3461 = vmul.f32 %v3456, %v3460
    %v3462 = vsel %vm106, %v2063, %v2021
    %v3463 = vsel %vm106, %v2065, %v2023
    %v3464 = vsel %vm106, %v2176, %v2134
    %v3465 = vsel %vm106, %v2178, %v2136
    %3466 = vmatprep.subr.mxu0 %v2181
    %3467 = vmatpush1.msra.mxu0 %v2180
    %3468 = vmatprep.subr.mxu0 %v2185
    %3469 = vmatpush1.msra.mxu0 %v2184
    %3470 = vmatprep.subr.mxu0 %v2189
    %3471 = vmatpush1.msra.mxu0 %v2188
    %3472 = vmatprep.subr.mxu0 %v2193
    %3473 = vmatpush1.msra.mxu0 %v2192
    %3474 = vmatprep.subr.mxu0 %v2197
    %3475 = vmatpush1.msra.mxu0 %v2196
    %3476 = vmatprep.subr.mxu0 %v2201
    %3477 = vmatpush1.msra.mxu0 %v2200
    %3478 = vmatprep.subr.mxu0 %v2205
    %3479 = vmatpush1.msra.mxu0 %v2204
    %3480 = vmatprep.subr.mxu0 %v2209
    %3481 = vmatpush1.msra.mxu0 %v2208
    %3482 = vmatprep.subr.mxu0 %v2213
    %3483 = vmatpush1.msra.mxu0 %v2212
    %3484 = vmatprep.subr.mxu0 %v2217
    %3485 = vmatpush1.msra.mxu0 %v2216
    %3486 = vmatprep.subr.mxu0 %v2221
    %3487 = vmatpush1.msra.mxu0 %v2220
    %3488 = vmatprep.subr.mxu0 %v2225
    %3489 = vmatpush1.msra.mxu0 %v2224
    %3490 = vmatprep.subr.mxu0 %v2229
    %3491 = vmatpush1.msra.mxu0 %v2228
    %3492 = vmatprep.subr.mxu0 %v2233
    %3493 = vmatpush1.msra.mxu0 %v2232
    %3494 = vmatprep.subr.mxu0 %v2237
    %3495 = vmatpush1.msra.mxu0 %v2236
    %3496 = vmatprep.subr.mxu0 %v2241
    %3497 = vmatpush1.msra.mxu0 %v2240
    %3498 = vmatprep.subr.mxu0 0.0
    %3499 = vmatpush1.msra.mxu0 0.0
    %3500 = vmatprep.subr.mxu0 0.0
    %3501 = vmatpush1.msra.mxu0 0.0
    %3502 = vmatprep.subr.mxu0 0.0
    %3503 = vmatpush1.msra.mxu0 0.0
    %3504 = vmatprep.subr.mxu0 0.0
    %3505 = vmatpush1.msra.mxu0 0.0
    %3506 = vmatprep.subr.mxu0 0.0
    %3507 = vmatpush1.msra.mxu0 0.0
    %3508 = vmatprep.subr.mxu0 0.0
    %3509 = vmatpush1.msra.mxu0 0.0
    %3510 = vmatprep.subr.mxu0 0.0
    %3511 = vmatpush1.msra.mxu0 0.0
    %3512 = vmatprep.subr.mxu0 0.0
    %3513 = vmatpush1.msra.mxu0 0.0
    %3514 = vmatprep.subr.mxu0 0.0
    %3515 = vmatpush1.msra.mxu0 0.0
    %3516 = vmatprep.subr.mxu0 0.0
    %3517 = vmatpush1.msra.mxu0 0.0
    %3518 = vmatprep.subr.mxu0 0.0
    %3519 = vmatpush1.msra.mxu0 0.0
    %3520 = vmatprep.subr.mxu0 0.0
    %3521 = vmatpush1.msra.mxu0 0.0
    %3522 = vmatprep.subr.mxu0 0.0
    %3523 = vmatpush1.msra.mxu0 0.0
    %3524 = vmatprep.subr.mxu0 0.0
    %3525 = vmatpush1.msra.mxu0 0.0
    %3526 = vmatprep.subr.mxu0 0.0
    %3527 = vmatpush1.msra.mxu0 0.0
    %3528 = vmatprep.subr.mxu0 0.0
    %3529 = vmatpush1.msra.mxu0 0.0
    %3530 = vmatprep.mubr.f32.mxu0 0.0
    %3531 = vmatmul.mubr.f32.gmra.mrb[0].mxu0 %v3461
    %v3532 = vpop.f32.mrb[0].mxu0
    %v3533 = vadd.f32 0.0, %v3532
    %v3534 = vpop.f32.mrb[0].mxu0
    %v3535 = vadd.f32 0.0, %v3534
    %3536 = vdwg.mxu0
    %3537 = vmatprep.subr.mxu0 %v2183
    %3538 = vmatpush1.msra.mxu0 %v2182
    %3539 = vmatprep.subr.mxu0 %v2187
    %3540 = vmatpush1.msra.mxu0 %v2186
    %3541 = vmatprep.subr.mxu0 %v2191
    %3542 = vmatpush1.msra.mxu0 %v2190
    %3543 = vmatprep.subr.mxu0 %v2195
    %3544 = vmatpush1.msra.mxu0 %v2194
    %3545 = vmatprep.subr.mxu0 %v2199
    %3546 = vmatpush1.msra.mxu0 %v2198
    %3547 = vmatprep.subr.mxu0 %v2203
    %3548 = vmatpush1.msra.mxu0 %v2202
    %3549 = vmatprep.subr.mxu0 %v2207
    %3550 = vmatpush1.msra.mxu0 %v2206
    %3551 = vmatprep.subr.mxu0 %v2211
    %3552 = vmatpush1.msra.mxu0 %v2210
    %3553 = vmatprep.subr.mxu0 %v2215
    %3554 = vmatpush1.msra.mxu0 %v2214
    %3555 = vmatprep.subr.mxu0 %v2219
    %3556 = vmatpush1.msra.mxu0 %v2218
    %3557 = vmatprep.subr.mxu0 %v2223
    %3558 = vmatpush1.msra.mxu0 %v2222
    %3559 = vmatprep.subr.mxu0 %v2227
    %3560 = vmatpush1.msra.mxu0 %v2226
    %3561 = vmatprep.subr.mxu0 %v2231
    %3562 = vmatpush1.msra.mxu0 %v2230
    %3563 = vmatprep.subr.mxu0 %v2235
    %3564 = vmatpush1.msra.mxu0 %v2234
    %3565 = vmatprep.subr.mxu0 %v2239
    %3566 = vmatpush1.msra.mxu0 %v2238
    %3567 = vmatprep.subr.mxu0 %v2243
    %3568 = vmatpush1.msra.mxu0 %v2242
    %3569 = vmatprep.subr.mxu0 0.0
    %3570 = vmatpush1.msra.mxu0 0.0
    %3571 = vmatprep.subr.mxu0 0.0
    %3572 = vmatpush1.msra.mxu0 0.0
    %3573 = vmatprep.subr.mxu0 0.0
    %3574 = vmatpush1.msra.mxu0 0.0
    %3575 = vmatprep.subr.mxu0 0.0
    %3576 = vmatpush1.msra.mxu0 0.0
    %3577 = vmatprep.subr.mxu0 0.0
    %3578 = vmatpush1.msra.mxu0 0.0
    %3579 = vmatprep.subr.mxu0 0.0
    %3580 = vmatpush1.msra.mxu0 0.0
    %3581 = vmatprep.subr.mxu0 0.0
    %3582 = vmatpush1.msra.mxu0 0.0
    %3583 = vmatprep.subr.mxu0 0.0
    %3584 = vmatpush1.msra.mxu0 0.0
    %3585 = vmatprep.subr.mxu0 0.0
    %3586 = vmatpush1.msra.mxu0 0.0
    %3587 = vmatprep.subr.mxu0 0.0
    %3588 = vmatpush1.msra.mxu0 0.0
    %3589 = vmatprep.subr.mxu0 0.0
    %3590 = vmatpush1.msra.mxu0 0.0
    %3591 = vmatprep.subr.mxu0 0.0
    %3592 = vmatpush1.msra.mxu0 0.0
    %3593 = vmatprep.subr.mxu0 0.0
    %3594 = vmatpush1.msra.mxu0 0.0
    %3595 = vmatprep.subr.mxu0 0.0
    %3596 = vmatpush1.msra.mxu0 0.0
    %3597 = vmatprep.subr.mxu0 0.0
    %3598 = vmatpush1.msra.mxu0 0.0
    %3599 = vmatprep.subr.mxu0 0.0
    %3600 = vmatpush1.msra.mxu0 0.0
    %3601 = vmatprep.mubr.f32.mxu0 0.0
    %3602 = vmatmul.mubr.f32.gmra.mrb[0].mxu0 %v3461
    %v3603 = vpop.f32.mrb[0].mxu0
    %v3604 = vadd.f32 0.0, %v3603
    %v3605 = vpop.f32.mrb[0].mxu0
    %v3606 = vadd.f32 0.0, %v3605
    %3607 = vdwg.mxu0
    %v3608 = vadd.f32 %v3462, %v3533
    %v3609 = vadd.f32 %v3463, %v3535
    %v3610 = vadd.f32 %v3464, %v3604
    %v3611 = vadd.f32 %v3465, %v3606
    %v3612 = vxor.u32 %v3608, 2147483648
    %v3613 = vmul.f32 %v3612, 1.442695
    %v3614 = vpow.pop %v3613
    %v3615 = vadd.f32 %v3614, 1.0
    %v3616 = vrcp.pop %v3615
    %v3617 = vmul.f32 1.0, %v3616
    %v3618 = vxor.u32 %v3609, 2147483648
    %v3619 = vmul.f32 %v3618, 1.442695
    %v3620 = vpow.pop %v3619
    %v3621 = vadd.f32 %v3620, 1.0
    %v3622 = vrcp.pop %v3621
    %v3623 = vmul.f32 1.0, %v3622
    %v3624 = vtanh.pop %v3610
    %v3625 = vxor.u32 %v3611, 2147483648
    %v3626 = vmul.f32 %v3625, 1.442695
    %v3627 = vpow.pop %v3626
    %v3628 = vadd.f32 %v3627, 1.0
    %v3629 = vrcp.pop %v3628
    %v3630 = vmul.f32 1.0, %v3629
    %v3631 = vmul.f32 %v3623, %v3459
    %v3632 = vmul.f32 %v3617, %v3624
    %v3633 = vadd.f32 %v3631, %v3632
    %v3634 = vtanh.pop %v3633
    %v3635 = vmul.f32 %v3630, %v3634
    %v3636 = vld [vmem:[%s7] sm:$0xff]
    %v3637 = vld [vmem:[%s7 + $0x8] sm:$0xff]
    %v3638 = vld [vmem:[%s7 + $0x10] sm:$0xff]
    %v3639 = vld [vmem:[%s7 + $0x18] sm:$0xff]
    %v3640 = vld [vmem:[%s7 + $0x20] sm:$0xff]
    %v3641 = vld [vmem:[%s7 + $0x28] sm:$0xff]
    %v3642 = vld [vmem:[%s7 + $0x30] sm:$0xff]
    %v3643 = vld [vmem:[%s7 + $0x38] sm:$0xff]
    %v3644 = vld [vmem:[%s7 + $0x40] sm:$0xff]
    %v3645 = vld [vmem:[%s7 + $0x48] sm:$0xff]
    %v3646 = vld [vmem:[%s7 + $0x50] sm:$0xff]
    %v3647 = vld [vmem:[%s7 + $0x58] sm:$0xff]
    %v3648 = vld [vmem:[%s7 + $0x60] sm:$0xff]
    %v3649 = vld [vmem:[%s7 + $0x68] sm:$0xff]
    %v3650 = vld [vmem:[%s7 + $0x70] sm:$0xff]
    %v3651 = vld [vmem:[%s7 + $0x78] sm:$0xff]
    %v3652 = vld [vmem:[%s8] sm:$0x1]
    %v3654 = vlaneseq
    %v3655 = vshrl.u32 %v3654, 7
    %v3656 = vsub.s32 0, %v3655
    %v3657 = vrot.slane %v3652, %v3656
    %3659 = vmatprep.subr.mxu0 0.0
    %3660 = vmatpush1.msra.mxu0 %v3636
    %3661 = vmatprep.subr.mxu0 0.0
    %3662 = vmatpush1.msra.mxu0 %v3637
    %3663 = vmatprep.subr.mxu0 0.0
    %3664 = vmatpush1.msra.mxu0 %v3638
    %3665 = vmatprep.subr.mxu0 0.0
    %3666 = vmatpush1.msra.mxu0 %v3639
    %3667 = vmatprep.subr.mxu0 0.0
    %3668 = vmatpush1.msra.mxu0 %v3640
    %3669 = vmatprep.subr.mxu0 0.0
    %3670 = vmatpush1.msra.mxu0 %v3641
    %3671 = vmatprep.subr.mxu0 0.0
    %3672 = vmatpush1.msra.mxu0 %v3642
    %3673 = vmatprep.subr.mxu0 0.0
    %3674 = vmatpush1.msra.mxu0 %v3643
    %3675 = vmatprep.subr.mxu0 0.0
    %3676 = vmatpush1.msra.mxu0 %v3644
    %3677 = vmatprep.subr.mxu0 0.0
    %3678 = vmatpush1.msra.mxu0 %v3645
    %3679 = vmatprep.subr.mxu0 0.0
    %3680 = vmatpush1.msra.mxu0 %v3646
    %3681 = vmatprep.subr.mxu0 0.0
    %3682 = vmatpush1.msra.mxu0 %v3647
    %3683 = vmatprep.subr.mxu0 0.0
    %3684 = vmatpush1.msra.mxu0 %v3648
    %3685 = vmatprep.subr.mxu0 0.0
    %3686 = vmatpush1.msra.mxu0 %v3649
    %3687 = vmatprep.subr.mxu0 0.0
    %3688 = vmatpush1.msra.mxu0 %v3650
    %3689 = vmatprep.subr.mxu0 0.0
    %3690 = vmatpush1.msra.mxu0 %v3651
    %3691 = vmatprep.subr.mxu0 0.0
    %3692 = vmatpush1.msra.mxu0 0.0
    %3693 = vmatprep.subr.mxu0 0.0
    %3694 = vmatpush1.msra.mxu0 0.0
    %3695 = vmatprep.subr.mxu0 0.0
    %3696 = vmatpush1.msra.mxu0 0.0
    %3697 = vmatprep.subr.mxu0 0.0
    %3698 = vmatpush1.msra.mxu0 0.0
    %3699 = vmatprep.subr.mxu0 0.0
    %3700 = vmatpush1.msra.mxu0 0.0
    %3701 = vmatprep.subr.mxu0 0.0
    %3702 = vmatpush1.msra.mxu0 0.0
    %3703 = vmatprep.subr.mxu0 0.0
    %3704 = vmatpush1.msra.mxu0 0.0
    %3705 = vmatprep.subr.mxu0 0.0
    %3706 = vmatpush1.msra.mxu0 0.0
    %3707 = vmatprep.subr.mxu0 0.0
    %3708 = vmatpush1.msra.mxu0 0.0
    %3709 = vmatprep.subr.mxu0 0.0
    %3710 = vmatpush1.msra.mxu0 0.0
    %3711 = vmatprep.subr.mxu0 0.0
    %3712 = vmatpush1.msra.mxu0 0.0
    %3713 = vmatprep.subr.mxu0 0.0
    %3714 = vmatpush1.msra.mxu0 0.0
    %3715 = vmatprep.subr.mxu0 0.0
    %3716 = vmatpush1.msra.mxu0 0.0
    %3717 = vmatprep.subr.mxu0 0.0
    %3718 = vmatpush1.msra.mxu0 0.0
    %3719 = vmatprep.subr.mxu0 0.0
    %3720 = vmatpush1.msra.mxu0 0.0
    %3721 = vmatprep.subr.mxu0 0.0
    %3722 = vmatpush1.msra.mxu0 0.0
    %3723 = vmatprep.mubr.f32.mxu0 0.0
    %3724 = vmatmul.mubr.f32.gmra.mrb[0].mxu0 %v3635
    %v3725 = vpop.f32.mrb[0].mxu0
    %v3726 = vadd.f32 %v3657, %v3725
    %v3727 = vpop.f32.mrb[0].mxu0
    %3728 = vdwg.mxu0
    %v3729 = vmax.f32 %v3726, 0.0
    %v3730 = vld [vmem:[#allocation8] sm:$0xff]
    %v3731 = vld [vmem:[#allocation8 + $0x8] sm:$0xff]
    %v3732 = vld [vmem:[#allocation8 + $0x10] sm:$0xff]
    %v3733 = vld [vmem:[#allocation8 + $0x18] sm:$0xff]
    %v3734 = vld [vmem:[#allocation8 + $0x20] sm:$0xff]
    %v3735 = vld [vmem:[#allocation8 + $0x28] sm:$0xff]
    %v3736 = vld [vmem:[#allocation8 + $0x30] sm:$0xff]
    %v3737 = vld [vmem:[#allocation8 + $0x38] sm:$0xff]
    %v3738 = vld [vmem:[#allocation8 + $0x40] sm:$0xff]
    %v3739 = vld [vmem:[#allocation8 + $0x48] sm:$0xff]
    %v3740 = vld [vmem:[#allocation8 + $0x50] sm:$0xff]
    %v3741 = vld [vmem:[#allocation8 + $0x58] sm:$0xff]
    %v3742 = vld [vmem:[#allocation8 + $0x60] sm:$0xff]
    %v3743 = vld [vmem:[#allocation8 + $0x68] sm:$0xff]
    %v3744 = vld [vmem:[#allocation8 + $0x70] sm:$0xff]
    %v3745 = vld [vmem:[#allocation8 + $0x78] sm:$0xff]
    %v3746 = vld [vmem:[%s10] sm:$0x1]
    %v3748 = vlaneseq
    %v3749 = vshrl.u32 %v3748, 7
    %v3750 = vsub.s32 0, %v3749
    %v3751 = vrot.slane %v3746, %v3750
    %3753 = vmatprep.subr.mxu0 0.0
    %3754 = vmatpush1.msra.mxu0 %v3730
    %3755 = vmatprep.subr.mxu0 0.0
    %3756 = vmatpush1.msra.mxu0 %v3731
    %3757 = vmatprep.subr.mxu0 0.0
    %3758 = vmatpush1.msra.mxu0 %v3732
    %3759 = vmatprep.subr.mxu0 0.0
    %3760 = vmatpush1.msra.mxu0 %v3733
    %3761 = vmatprep.subr.mxu0 0.0
    %3762 = vmatpush1.msra.mxu0 %v3734
    %3763 = vmatprep.subr.mxu0 0.0
    %3764 = vmatpush1.msra.mxu0 %v3735
    %3765 = vmatprep.subr.mxu0 0.0
    %3766 = vmatpush1.msra.mxu0 %v3736
    %3767 = vmatprep.subr.mxu0 0.0
    %3768 = vmatpush1.msra.mxu0 %v3737
    %3769 = vmatprep.subr.mxu0 0.0
    %3770 = vmatpush1.msra.mxu0 %v3738
    %3771 = vmatprep.subr.mxu0 0.0
    %3772 = vmatpush1.msra.mxu0 %v3739
    %3773 = vmatprep.subr.mxu0 0.0
    %3774 = vmatpush1.msra.mxu0 %v3740
    %3775 = vmatprep.subr.mxu0 0.0
    %3776 = vmatpush1.msra.mxu0 %v3741
    %3777 = vmatprep.subr.mxu0 0.0
    %3778 = vmatpush1.msra.mxu0 %v3742
    %3779 = vmatprep.subr.mxu0 0.0
    %3780 = vmatpush1.msra.mxu0 %v3743
    %3781 = vmatprep.subr.mxu0 0.0
    %3782 = vmatpush1.msra.mxu0 %v3744
    %3783 = vmatprep.subr.mxu0 0.0
    %3784 = vmatpush1.msra.mxu0 %v3745
    %3785 = vmatprep.subr.mxu0 0.0
    %3786 = vmatpush1.msra.mxu0 0.0
    %3787 = vmatprep.subr.mxu0 0.0
    %3788 = vmatpush1.msra.mxu0 0.0
    %3789 = vmatprep.subr.mxu0 0.0
    %3790 = vmatpush1.msra.mxu0 0.0
    %3791 = vmatprep.subr.mxu0 0.0
    %3792 = vmatpush1.msra.mxu0 0.0
    %3793 = vmatprep.subr.mxu0 0.0
    %3794 = vmatpush1.msra.mxu0 0.0
    %3795 = vmatprep.subr.mxu0 0.0
    %3796 = vmatpush1.msra.mxu0 0.0
    %3797 = vmatprep.subr.mxu0 0.0
    %3798 = vmatpush1.msra.mxu0 0.0
    %3799 = vmatprep.subr.mxu0 0.0
    %3800 = vmatpush1.msra.mxu0 0.0
    %3801 = vmatprep.subr.mxu0 0.0
    %3802 = vmatpush1.msra.mxu0 0.0
    %3803 = vmatprep.subr.mxu0 0.0
    %3804 = vmatpush1.msra.mxu0 0.0
    %3805 = vmatprep.subr.mxu0 0.0
    %3806 = vmatpush1.msra.mxu0 0.0
    %3807 = vmatprep.subr.mxu0 0.0
    %3808 = vmatpush1.msra.mxu0 0.0
    %3809 = vmatprep.subr.mxu0 0.0
    %3810 = vmatpush1.msra.mxu0 0.0
    %3811 = vmatprep.subr.mxu0 0.0
    %3812 = vmatpush1.msra.mxu0 0.0
    %3813 = vmatprep.subr.mxu0 0.0
    %3814 = vmatpush1.msra.mxu0 0.0
    %3815 = vmatprep.subr.mxu0 0.0
    %3816 = vmatpush1.msra.mxu0 0.0
    %3817 = vmatprep.mubr.f32.mxu0 0.0
    %3818 = vmatmul.mubr.f32.gmra.mrb[0].mxu0 %v3729
    %v3819 = vpop.f32.mrb[0].mxu0
    %v3820 = vadd.f32 %v3751, %v3819
    %v3821 = vpop.f32.mrb[0].mxu0
    %3822 = vdwg.mxu0
    %v3823 = vmax.f32 %v3820, 0.0
    %v3824 = vld [vmem:[%s11] sm:$0xff]
    %v3825 = vld [vmem:[%s11 + $0x8] sm:$0xff]
    %v3826 = vld [vmem:[%s11 + $0x10] sm:$0xff]
    %v3827 = vld [vmem:[%s11 + $0x18] sm:$0xff]
    %v3828 = vld [vmem:[%s11 + $0x20] sm:$0xff]
    %v3829 = vld [vmem:[%s11 + $0x28] sm:$0xff]
    %v3830 = vld [vmem:[%s11 + $0x30] sm:$0xff]
    %v3831 = vld [vmem:[%s11 + $0x38] sm:$0xff]
    %v3832 = vld [vmem:[%s11 + $0x40] sm:$0xff]
    %v3833 = vld [vmem:[%s11 + $0x48] sm:$0xff]
    %v3834 = vld [vmem:[%s11 + $0x50] sm:$0xff]
    %v3835 = vld [vmem:[%s11 + $0x58] sm:$0xff]
    %v3836 = vld [vmem:[%s11 + $0x60] sm:$0xff]
    %v3837 = vld [vmem:[%s11 + $0x68] sm:$0xff]
    %v3838 = vld [vmem:[%s11 + $0x70] sm:$0xff]
    %v3839 = vld [vmem:[%s11 + $0x78] sm:$0xff]
    %v3840 = vld [vmem:[%s12] sm:$0x1]
    %v3842 = vlaneseq
    %v3843 = vshrl.u32 %v3842, 7
    %v3844 = vsub.s32 0, %v3843
    %v3845 = vrot.slane %v3840, %v3844
    %3847 = vmatprep.subr.mxu0 0.0
    %3848 = vmatpush1.msra.mxu0 %v3824
    %3849 = vmatprep.subr.mxu0 0.0
    %3850 = vmatpush1.msra.mxu0 %v3825
    %3851 = vmatprep.subr.mxu0 0.0
    %3852 = vmatpush1.msra.mxu0 %v3826
    %3853 = vmatprep.subr.mxu0 0.0
    %3854 = vmatpush1.msra.mxu0 %v3827
    %3855 = vmatprep.subr.mxu0 0.0
    %3856 = vmatpush1.msra.mxu0 %v3828
    %3857 = vmatprep.subr.mxu0 0.0
    %3858 = vmatpush1.msra.mxu0 %v3829
    %3859 = vmatprep.subr.mxu0 0.0
    %3860 = vmatpush1.msra.mxu0 %v3830
    %3861 = vmatprep.subr.mxu0 0.0
    %3862 = vmatpush1.msra.mxu0 %v3831
    %3863 = vmatprep.subr.mxu0 0.0
    %3864 = vmatpush1.msra.mxu0 %v3832
    %3865 = vmatprep.subr.mxu0 0.0
    %3866 = vmatpush1.msra.mxu0 %v3833
    %3867 = vmatprep.subr.mxu0 0.0
    %3868 = vmatpush1.msra.mxu0 %v3834
    %3869 = vmatprep.subr.mxu0 0.0
    %3870 = vmatpush1.msra.mxu0 %v3835
    %3871 = vmatprep.subr.mxu0 0.0
    %3872 = vmatpush1.msra.mxu0 %v3836
    %3873 = vmatprep.subr.mxu0 0.0
    %3874 = vmatpush1.msra.mxu0 %v3837
    %3875 = vmatprep.subr.mxu0 0.0
    %3876 = vmatpush1.msra.mxu0 %v3838
    %3877 = vmatprep.subr.mxu0 0.0
    %3878 = vmatpush1.msra.mxu0 %v3839
    %3879 = vmatprep.subr.mxu0 0.0
    %3880 = vmatpush1.msra.mxu0 0.0
    %3881 = vmatprep.subr.mxu0 0.0
    %3882 = vmatpush1.msra.mxu0 0.0
    %3883 = vmatprep.subr.mxu0 0.0
    %3884 = vmatpush1.msra.mxu0 0.0
    %3885 = vmatprep.subr.mxu0 0.0
    %3886 = vmatpush1.msra.mxu0 0.0
    %3887 = vmatprep.subr.mxu0 0.0
    %3888 = vmatpush1.msra.mxu0 0.0
    %3889 = vmatprep.subr.mxu0 0.0
    %3890 = vmatpush1.msra.mxu0 0.0
    %3891 = vmatprep.subr.mxu0 0.0
    %3892 = vmatpush1.msra.mxu0 0.0
    %3893 = vmatprep.subr.mxu0 0.0
    %3894 = vmatpush1.msra.mxu0 0.0
    %3895 = vmatprep.subr.mxu0 0.0
    %3896 = vmatpush1.msra.mxu0 0.0
    %3897 = vmatprep.subr.mxu0 0.0
    %3898 = vmatpush1.msra.mxu0 0.0
    %3899 = vmatprep.subr.mxu0 0.0
    %3900 = vmatpush1.msra.mxu0 0.0
    %3901 = vmatprep.subr.mxu0 0.0
    %3902 = vmatpush1.msra.mxu0 0.0
    %3903 = vmatprep.subr.mxu0 0.0
    %3904 = vmatpush1.msra.mxu0 0.0
    %3905 = vmatprep.subr.mxu0 0.0
    %3906 = vmatpush1.msra.mxu0 0.0
    %3907 = vmatprep.subr.mxu0 0.0
    %3908 = vmatpush1.msra.mxu0 0.0
    %3909 = vmatprep.subr.mxu0 0.0
    %3910 = vmatpush1.msra.mxu0 0.0
    %3911 = vmatprep.mubr.f32.mxu0 0.0
    %3912 = vmatmul.mubr.f32.gmra.mrb[0].mxu0 %v3823
    %v3913 = vpop.f32.mrb[0].mxu0
    %v3914 = vadd.f32 %v3845, %v3913
    %v3915 = vpop.f32.mrb[0].mxu0
    %3916 = vdwg.mxu0
    %vm3917 = vcmask 25600
    %3918 = vst.msk [vmem:[#allocation10] sm:$0x3] %vm3917, %v3914
    // Predicated region
    $region70: #{twin_rnn_classifier.1} parent=1 // pred_check
      _
    $region71: #{twin_rnn_classifier.1} parent=1 // pred_check_branch
      %3920 = sbr.rel (0) target = $region73
    $region72: #{twin_rnn_classifier.1} parent=1 // pred_region
      %s3922 = ssub.s32 32, 32
      %3923 = vsyncadd [#allocation4], %s3922
      %s3925 = sshll.u32 [#allocation10], 4
      %s3926 = int_to_ptr.vmem [resolvable:$true] %s3925
      %3928 = dma.vmem_to_hbm [thread:$0]  %s3926, 32, %s13, [#allocation4]
    $region73: #{twin_rnn_classifier.1} parent=1 // pred_fallthru
      _
    // Predicated region
    $region74: #{twin_rnn_classifier.1} parent=1 // pred_check
      _
    $region75: #{twin_rnn_classifier.1} parent=1 // pred_check_branch
      %3930 = sbr.rel (0) target = $region77
    $region76: #{twin_rnn_classifier.1} parent=1 // pred_region
      %3931 = dma.done [#allocation4], 32
    $region77: #{twin_rnn_classifier.1} parent=1 // pred_fallthru
      _
    %3932 = vsyncpa [#allocation3], 1
    %3933 = vsyncpa [#allocation6], 1
    %3934 = vsyncpa [#allocation9], 1
    %3935 = vsyncpa [#allocation4], 1

</llo_original>
